<compile_context>
chip_gen: v6e
topology: v6e:2x2x1
jax: 0.10.0
libtpu: 0.0.40
codegen_flags: <defaults>
</compile_context>

<pallas_src>
import math

import jax
import jax.numpy as jnp
from jax.experimental import pallas as pl
from jax.experimental.pallas import tpu as pltpu

_F32 = jnp.float32
_BF16 = jnp.bfloat16
_VMEM = pl.BlockSpec(memory_space=pltpu.MemorySpace.VMEM)


# ----------------------------------------------------------------------------------
# Fused Pallas kernel: embeddings + all 2*n_layers bipartite convolutions
# ----------------------------------------------------------------------------------
def _gnn_kernel(
    # graph data
    cons_x_ref, var_x_ref, ef_ref,
    cons_col_ref, var_col_ref, cons_row_ref, var_row_ref,
    # constraint embedding MLP
    ce_shift_ref, ce_scale_ref, ce_w1_ref, ce_b1_ref, ce_w2_ref, ce_b2_ref,
    # variable embedding MLP
    ve_shift_ref, ve_scale_ref, ve_w1_ref, ve_b1_ref, ve_w2_ref, ve_b2_ref,
    # stacked conv weights, layer order: [v_to_c_0, c_to_v_0, v_to_c_1, c_to_v_1, ...]
    wl_ref, bl_ref, we_ref, wr_ref, wf_ref, bf_ref,
    wo1a_ref, wo1b_ref, bo1_ref, wo2_ref, bo2_ref,
    # outputs
    cons_out_ref, var_out_ref,
):
    nc = cons_x_ref.shape[0]
    nv = var_x_ref.shape[0]
    ne = ef_ref.shape[0]
    ef = ef_ref[...]                      # [NE, 1] f32

    # --- Hoisted 0/1 gather/scatter masks (bf16 is exact for 0/1); built ONCE and ----
    # --- reused by every conv layer (previously rebuilt 3x per conv per layer).   ----
    cons_col = cons_col_ref[...]          # [NE, 1] int32  (constraint id per edge)
    var_col = var_col_ref[...]            # [NE, 1] int32  (variable id per edge)
    cons_row = cons_row_ref[...]          # [1, NE] int32
    var_row = var_row_ref[...]            # [1, NE] int32
    g_cons = (jax.lax.broadcasted_iota(jnp.int32, (ne, nc), 1) == cons_col).astype(_BF16)
    g_var = (jax.lax.broadcasted_iota(jnp.int32, (ne, nv), 1) == var_col).astype(_BF16)
    s_cons = (jax.lax.broadcasted_iota(jnp.int32, (nc, ne), 0) == cons_row).astype(_BF16)
    s_var = (jax.lax.broadcasted_iota(jnp.int32, (nv, ne), 0) == var_row).astype(_BF16)

    def _dot(a, b):
        # every MXU operand in bf16, accumulation in f32
        return jnp.dot(a.astype(_BF16), b.astype(_BF16), preferred_element_type=_F32)

    def _embed(x, shift_ref, scale_ref, w1_ref, b1_ref, w2_ref, b2_ref):
        # PreNormLayer (shift, scale) -> Linear -> ReLU -> Linear -> ReLU
        xn = (x + shift_ref[...]) * scale_ref[...]
        h = jnp.maximum(_dot(xn, w1_ref[...]) + b1_ref[...], 0.0)
        return jnp.maximum(_dot(h, w2_ref[...]) + b2_ref[...], 0.0)

    def _conv(left, right, g_src, g_tgt, s_tgt, l):
        """One BipartiteGraphConvolution (layer l of the stacked weights).

        Edge PreNorm is folded into we/bl, feature_module_final's positive scale into wf
        and the post_conv scale into wo1a at prepare_params() time."""
        left_b = left.astype(_BF16)
        right_b = right.astype(_BF16)
        # node-level linear transforms first (cheaper than per-edge), then gather per edge
        right_l = _dot(right_b, wl_ref[l])            # feature_module_left(x_i)   [NR, E]
        left_r = _dot(left_b, wr_ref[l])              # feature_module_right(x_j)  [NL, E]
        pre = (_dot(g_tgt, right_l)                   # gather x_i per edge        [NE, E]
               + _dot(g_src, left_r)                  # gather x_j per edge        [NE, E]
               + ef * we_ref[l]                       # edge Linear(1,E), prenorm folded in
               + bl_ref[l])
        msg = _dot(jnp.maximum(pre, 0.0), wf_ref[l]) + bf_ref[l]                 # [NE, E]
        # 'add' aggregation at target nodes: one-hot (scatter orientation) @ msg on MXU
        agg = _dot(s_tgt, msg)                                                   # [NR, E]
        # output_module(cat([agg, right])) with the [2E,E] weight split into its halves
        h = _dot(agg, wo1a_ref[l]) + _dot(right_b, wo1b_ref[l]) + bo1_ref[l]
        return _dot(jnp.maximum(h, 0.0), wo2_ref[l]) + bo2_ref[l]

    cons = _embed(cons_x_ref[...], ce_shift_ref, ce_scale_ref,
                  ce_w1_ref, ce_b1_ref, ce_w2_ref, ce_b2_ref)
    var = _embed(var_x_ref[...], ve_shift_ref, ve_scale_ref,
                 ve_w1_ref, ve_b1_ref, ve_w2_ref, ve_b2_ref)

    n_layers = wl_ref.shape[0] // 2
    # TODO(synk): for n_layers > 2 switch this unrolled loop to lax.fori_loop over the
    #             stacked weight refs (dynamic first-axis indexing) to bound live ranges.
    for i in range(n_layers):              # unrolled; all layer weights stay resident in VMEM
        # NOTE: mirrors the PyTorch loop exactly as written, including assigning the
        # conv_v_to_c output (indexed by constraints) to the variable features.
        var = _conv(var, cons, g_var, g_cons, s_cons, 2 * i)
        cons = _conv(cons, var, g_cons, g_var, s_var, 2 * i + 1)

    cons_out_ref[...] = cons
    var_out_ref[...] = var


# ----------------------------------------------------------------------------------
# Host-side parameter preparation + forward wrapper
# ----------------------------------------------------------------------------------
def prepare_params(params):
    """One-time weight prep: fold the edge PreNormLayer into each conv's edge linear /
    left bias, fold s_final into wf and s_post into the agg half of wo1, split the
    [2E, E] output weight, cast all matmul weights to bf16, and stack per-layer weights
    along a leading axis (layer order vc0, cv0, vc1, cv1, ...)."""
    e_shift = jnp.asarray(params["edge_emb"]["shift"], _F32).reshape(())  # edge_nfeats == 1
    e_scale = jnp.asarray(params["edge_emb"]["scale"], _F32).reshape(())
    layers = []
    for p_vc, p_cv in zip(params["v_to_c"], params["c_to_v"]):
        layers.append(p_vc)
        layers.append(p_cv)
    emb = layers[0]["wl"].shape[0]
    for p in layers:
        # PreNorm scales are 1/std; the ReLU fold of s_final is only exact for s > 0.
        assert float(p["s_final"]) > 0.0 and float(p["s_post"]) > 0.0

    def stk(fn, dtype):
        return jnp.stack([fn(p) for p in layers]).astype(dtype)

    def _prep_emb(p):
        return dict(shift=p["shift"].astype(_F32), scale=p["scale"].astype(_F32),
                    w1=p["w1"].astype(_BF16), b1=p["b1"].astype(_F32),
                    w2=p["w2"].astype(_BF16), b2=p["b2"].astype(_F32))

    return dict(
        cons_emb=_prep_emb(params["cons_emb"]),
        var_emb=_prep_emb(params["var_emb"]),
        wl=stk(lambda p: p["wl"], _BF16),
        bl=stk(lambda p: p["bl"] + e_shift * e_scale * p["we"], _F32),  # fold edge-prenorm shift
        we=stk(lambda p: e_scale * p["we"], _BF16),                     # fold edge-prenorm scale
        wr=stk(lambda p: p["wr"], _BF16),
        wf=stk(lambda p: p["s_final"] * p["wf"], _BF16),                # fold feature_module_final scale
        bf=stk(lambda p: p["bf"], _F32),
        wo1a=stk(lambda p: p["s_post"] * p["wo1"][:emb], _BF16),        # fold post_conv scale
        wo1b=stk(lambda p: p["wo1"][emb:], _BF16),
        bo1=stk(lambda p: p["bo1"], _F32),
        wo2=stk(lambda p: p["wo2"], _BF16),
        bo2=stk(lambda p: p["bo2"], _F32),
    )


def _gnn_forward(prepped, constraint_features, edge_indices, edge_features,
                 variable_features):
    nc, nv = constraint_features.shape[0], variable_features.shape[0]
    ne = edge_features.shape[0]
    emb = prepped["wl"].shape[-1]
    n_stacked = prepped["wl"].shape[0]
    # The as-written PyTorch module assigns the constraint-indexed conv_v_to_c output to
    # variable_features; that is only well-formed when n_vars == n_cons.
    assert nc == nv, "as-written GNNEncoder semantics require n_cons == n_vars"
    assert edge_features.shape[1] == 1, "BipartiteGraphConvolution uses Linear(1, emb)"

    cons_ids = edge_indices[0].astype(jnp.int32)
    var_ids = edge_indices[1].astype(jnp.int32)
    ce, ve = prepped["cons_emb"], prepped["var_emb"]

    # Resident VMEM estimate (hoisted bf16 masks + per-edge intermediates + weights) with
    # headroom; clamped so the request never exceeds v7x's 64 MiB physical VMEM.
    mask_bytes = 2 * (nc + nv) * ne * 2
    edge_bytes = 10 * ne * emb * 4
    node_bytes = 8 * max(nc, nv) * emb * 4
    col_bytes = 3 * ne * 128 * 4                      # lane-padded [NE,1] id / edge columns
    weight_bytes = n_stacked * (6 * emb * emb * 2 + 5 * emb * 4)
    est = 2 * (mask_bytes + edge_bytes + node_bytes + col_bytes + weight_bytes) + (2 << 20)
    vmem_limit = int(min(64 << 20, max(16 << 20, est)))

    return pl.pallas_call(
        _gnn_kernel,
        out_shape=(jax.ShapeDtypeStruct((nc, emb), _F32),
                   jax.ShapeDtypeStruct((nv, emb), _F32)),
        in_specs=[_VMEM] * 30,
        out_specs=(_VMEM, _VMEM),
        compiler_params=pltpu.CompilerParams(vmem_limit_bytes=vmem_limit),
    )(
        constraint_features, variable_features, edge_features,
        cons_ids.reshape(ne, 1), var_ids.reshape(ne, 1),
        cons_ids.reshape(1, ne), var_ids.reshape(1, ne),
        ce["shift"], ce["scale"], ce["w1"], ce["b1"], ce["w2"], ce["b2"],
        ve["shift"], ve["scale"], ve["w1"], ve["b1"], ve["w2"], ve["b2"],
        prepped["wl"], prepped["bl"], prepped["we"], prepped["wr"],
        prepped["wf"], prepped["bf"],
        prepped["wo1a"], prepped["wo1b"], prepped["bo1"], prepped["wo2"], prepped["bo2"],
    )


gnn_forward = jax.jit(_gnn_forward)


# ----------------------------------------------------------------------------------
# Deterministic parameter initialization (matches the module's shapes)
# ----------------------------------------------------------------------------------
def _init_linear(key, fan_in, fan_out, bias=True):
    kw, kb = jax.random.split(key)
    bound = 1.0 / math.sqrt(fan_in)
    w = jax.random.uniform(kw, (fan_in, fan_out), _F32, -bound, bound)
    b = (jax.random.uniform(kb, (fan_out,), _F32, -bound, bound)
         if bias else jnp.zeros((fan_out,), _F32))
    return w, b


def init_embedding(key, nfeats, emb):
    k1, k2, k3, k4 = jax.random.split(key, 4)
    w1, b1 = _init_linear(k1, nfeats, emb)
    w2, b2 = _init_linear(k2, emb, emb)
    # non-trivial prenorm params so the numeric check exercises them
    shift = 0.1 * jax.random.normal(k3, (1, nfeats), _F32)
    scale = jax.random.uniform(k4, (1, nfeats), _F32, 0.9, 1.1)
    return dict(shift=shift, scale=scale, w1=w1, b1=b1.reshape(1, -1),
                w2=w2, b2=b2.reshape(1, -1))


def init_conv(key, emb):
    k = jax.random.split(key, 8)
    wl, bl = _init_linear(k[0], emb, emb)
    we, _ = _init_linear(k[1], 1, emb, bias=False)
    wr, _ = _init_linear(k[2], emb, emb, bias=False)
    wf, bf = _init_linear(k[3], emb, emb)
    wo1, bo1 = _init_linear(k[4], 2 * emb, emb)
    wo2, bo2 = _init_linear(k[5], emb, emb)
    return dict(wl=wl, bl=bl.reshape(1, -1),
                we=we.reshape(1, -1), wr=wr,
                s_final=jax.random.uniform(k[6], (), _F32, 0.8, 1.2),
                wf=wf, bf=bf.reshape(1, -1),
                s_post=jax.random.uniform(k[7], (), _F32, 0.8, 1.2),
                wo1=wo1, bo1=bo1.reshape(1, -1),
                wo2=wo2, bo2=bo2.reshape(1, -1))


def init_gnn_params(key, cons_nfeats, edge_nfeats, var_nfeats, emb, n_layers):
    kc, kv, ke1, ke2, *kl = jax.random.split(key, 4 + 2 * n_layers)
    return dict(
        cons_emb=init_embedding(kc, cons_nfeats, emb),
        var_emb=init_embedding(kv, var_nfeats, emb),
        edge_emb=dict(shift=0.1 * jax.random.normal(ke1, (1, edge_nfeats), _F32),
                      scale=jax.random.uniform(ke2, (1, edge_nfeats), _F32, 0.9, 1.1)),
        v_to_c=[init_conv(kl[i], emb) for i in range(n_layers)],
        c_to_v=[init_conv(kl[n_layers + i], emb) for i in range(n_layers)],
    )


# ----------------------------------------------------------------------------------
# Pure-JAX f32 reference (uses the raw, un-folded parameters)
# ----------------------------------------------------------------------------------
def _embed_ref(x, p):
    x = (x + p["shift"]) * p["scale"]
    h = jnp.maximum(x @ p["w1"] + p["b1"], 0.0)
    return jnp.maximum(h @ p["w2"] + p["b2"], 0.0)


def _conv_ref(left, right, ef, src, tgt, p):
    xi, xj = right[tgt], left[src]
    pre = (xi @ p["wl"] + p["bl"] + ef * p["we"] + xj @ p["wr"]) * p["s_final"]
    msg = jnp.maximum(pre, 0.0) @ p["wf"] + p["bf"]
    agg = jax.ops.segment_sum(msg, tgt, num_segments=right.shape[0]) * p["s_post"]
    h = jnp.concatenate([agg, right], axis=-1) @ p["wo1"] + p["bo1"]
    return jnp.maximum(h, 0.0) @ p["wo2"] + p["bo2"]


def gnn_forward_ref(params, cons_feats, ei, ef, var_feats):
    cons = _embed_ref(cons_feats, params["cons_emb"])
    var = _embed_ref(var_feats, params["var_emb"])
    e = (ef + params["edge_emb"]["shift"]) * params["edge_emb"]["scale"]
    for p_vc, p_cv in zip(params["v_to_c"], params["c_to_v"]):
        var = _conv_ref(var, cons, e, ei[1], ei[0], p_vc)
        cons = _conv_ref(cons, var, e, ei[0], ei[1], p_cv)
    return cons, var


# ----------------------------------------------------------------------------------
if __name__ == "__main__":
    cons_nfeats, edge_nfeats, var_nfeats = 4, 1, 6
    emb_size, n_layers = 32, 2
    # n_cons == n_vars keeps the module's (as-written) feature reassignment well-defined.
    n_cons = n_vars = 16
    n_edges = 48

    key = jax.random.PRNGKey(0)
    k_params, k_cons, k_var, k_edge, k_src, k_tgt = jax.random.split(key, 6)
    params = init_gnn_params(k_params, cons_nfeats, edge_nfeats, var_nfeats,
                             emb_size, n_layers)
    prepped = prepare_params(params)

    constraint_features = jax.random.normal(k_cons, (n_cons, cons_nfeats), _F32)
    variable_features = jax.random.normal(k_var, (n_vars, var_nfeats), _F32)
    edge_features = jax.random.normal(k_edge, (n_edges, edge_nfeats), _F32)
    edge_indices = jnp.stack([
        jax.random.randint(k_src, (n_edges,), 0, n_cons),
        jax.random.randint(k_tgt, (n_edges,), 0, n_vars),
    ]).astype(jnp.int32)

    cons_out, var_out = gnn_forward(prepped, constraint_features, edge_indices,
                                    edge_features, variable_features)
    jax.block_until_ready((cons_out, var_out))

    cons_ref, var_ref = gnn_forward_ref(params, constraint_features, edge_indices,
                                        edge_features, variable_features)
    assert cons_out.shape == (n_cons, emb_size) and var_out.shape == (n_vars, emb_size)
    # Kernel runs all matmuls with bf16 operands (f32 accumulation); compare against the
    # pure-f32 reference with a bf16-appropriate tolerance.
    assert jnp.allclose(cons_out, cons_ref, atol=5e-2, rtol=5e-2)
    assert jnp.allclose(var_out, var_ref, atol=5e-2, rtol=5e-2)

    print("KERNEL_OK")
</pallas_src>

<mosaic_0001>
module attributes {stable_mosaic.version = 11 : i64} {
  func.func @_gnn_kernel(%arg0: memref<16x4xf32, #tpu.memory_space<vmem>>, %arg1: memref<16x6xf32, #tpu.memory_space<vmem>>, %arg2: memref<48x1xf32, #tpu.memory_space<vmem>>, %arg3: memref<48x1xi32, #tpu.memory_space<vmem>>, %arg4: memref<48x1xi32, #tpu.memory_space<vmem>>, %arg5: memref<1x48xi32, #tpu.memory_space<vmem>>, %arg6: memref<1x48xi32, #tpu.memory_space<vmem>>, %arg7: memref<1x4xf32, #tpu.memory_space<vmem>>, %arg8: memref<1x4xf32, #tpu.memory_space<vmem>>, %arg9: memref<4x32xbf16, #tpu.memory_space<vmem>>, %arg10: memref<1x32xf32, #tpu.memory_space<vmem>>, %arg11: memref<32x32xbf16, #tpu.memory_space<vmem>>, %arg12: memref<1x32xf32, #tpu.memory_space<vmem>>, %arg13: memref<1x6xf32, #tpu.memory_space<vmem>>, %arg14: memref<1x6xf32, #tpu.memory_space<vmem>>, %arg15: memref<6x32xbf16, #tpu.memory_space<vmem>>, %arg16: memref<1x32xf32, #tpu.memory_space<vmem>>, %arg17: memref<32x32xbf16, #tpu.memory_space<vmem>>, %arg18: memref<1x32xf32, #tpu.memory_space<vmem>>, %arg19: memref<4x32x32xbf16, #tpu.memory_space<vmem>>, %arg20: memref<4x1x32xf32, #tpu.memory_space<vmem>>, %arg21: memref<4x1x32xbf16, #tpu.memory_space<vmem>>, %arg22: memref<4x32x32xbf16, #tpu.memory_space<vmem>>, %arg23: memref<4x32x32xbf16, #tpu.memory_space<vmem>>, %arg24: memref<4x1x32xf32, #tpu.memory_space<vmem>>, %arg25: memref<4x32x32xbf16, #tpu.memory_space<vmem>>, %arg26: memref<4x32x32xbf16, #tpu.memory_space<vmem>>, %arg27: memref<4x1x32xf32, #tpu.memory_space<vmem>>, %arg28: memref<4x32x32xbf16, #tpu.memory_space<vmem>>, %arg29: memref<4x1x32xf32, #tpu.memory_space<vmem>>, %arg30: memref<16x32xf32, #tpu.memory_space<vmem>>, %arg31: memref<16x32xf32, #tpu.memory_space<vmem>>) attributes {dimension_semantics = [], scalar_prefetch = 0 : i64, scratch_operands = 0 : i64, tpu.core_type = #tpu.core_type<tc>} {
    %c0 = arith.constant 0 : index
    %c0_0 = arith.constant 0 : index
    %0 = vector.load %arg2[%c0, %c0_0] : memref<48x1xf32, #tpu.memory_space<vmem>>, vector<48x1xf32>
    %c0_1 = arith.constant 0 : index
    %c0_2 = arith.constant 0 : index
    %1 = vector.load %arg3[%c0_1, %c0_2] : memref<48x1xi32, #tpu.memory_space<vmem>>, vector<48x1xi32>
    %c0_3 = arith.constant 0 : index
    %c0_4 = arith.constant 0 : index
    %2 = vector.load %arg4[%c0_3, %c0_4] : memref<48x1xi32, #tpu.memory_space<vmem>>, vector<48x1xi32>
    %c0_5 = arith.constant 0 : index
    %c0_6 = arith.constant 0 : index
    %3 = vector.load %arg5[%c0_5, %c0_6] : memref<1x48xi32, #tpu.memory_space<vmem>>, vector<1x48xi32>
    %c0_7 = arith.constant 0 : index
    %c0_8 = arith.constant 0 : index
    %4 = vector.load %arg6[%c0_7, %c0_8] : memref<1x48xi32, #tpu.memory_space<vmem>>, vector<1x48xi32>
    %5 = tpu.iota {dimensions = array<i32: 1>} : vector<48x16xi32>
    %6 = vector.broadcast %1 : vector<48x1xi32> to vector<48x16xi32>
    %7 = arith.cmpi eq, %5, %6 : vector<48x16xi32>
    %8 = arith.extui %7 : vector<48x16xi1> to vector<48x16xi32>
    %9 = arith.sitofp %8 : vector<48x16xi32> to vector<48x16xf32>
    %10 = arith.truncf %9 : vector<48x16xf32> to vector<48x16xbf16>
    %11 = tpu.iota {dimensions = array<i32: 1>} : vector<48x16xi32>
    %12 = vector.broadcast %2 : vector<48x1xi32> to vector<48x16xi32>
    %13 = arith.cmpi eq, %11, %12 : vector<48x16xi32>
    %14 = arith.extui %13 : vector<48x16xi1> to vector<48x16xi32>
    %15 = arith.sitofp %14 : vector<48x16xi32> to vector<48x16xf32>
    %16 = arith.truncf %15 : vector<48x16xf32> to vector<48x16xbf16>
    %17 = tpu.iota {dimensions = array<i32: 0>} : vector<16x48xi32>
    %18 = vector.broadcast %3 : vector<1x48xi32> to vector<16x48xi32>
    %19 = arith.cmpi eq, %17, %18 : vector<16x48xi32>
    %20 = arith.extui %19 : vector<16x48xi1> to vector<16x48xi32>
    %21 = arith.sitofp %20 : vector<16x48xi32> to vector<16x48xf32>
    %22 = arith.truncf %21 : vector<16x48xf32> to vector<16x48xbf16>
    %23 = tpu.iota {dimensions = array<i32: 0>} : vector<16x48xi32>
    %24 = vector.broadcast %4 : vector<1x48xi32> to vector<16x48xi32>
    %25 = arith.cmpi eq, %23, %24 : vector<16x48xi32>
    %26 = arith.extui %25 : vector<16x48xi1> to vector<16x48xi32>
    %27 = arith.sitofp %26 : vector<16x48xi32> to vector<16x48xf32>
    %28 = arith.truncf %27 : vector<16x48xf32> to vector<16x48xbf16>
    %c0_9 = arith.constant 0 : index
    %c0_10 = arith.constant 0 : index
    %29 = vector.load %arg0[%c0_9, %c0_10] : memref<16x4xf32, #tpu.memory_space<vmem>>, vector<16x4xf32>
    %c0_11 = arith.constant 0 : index
    %c0_12 = arith.constant 0 : index
    %30 = vector.load %arg7[%c0_11, %c0_12] : memref<1x4xf32, #tpu.memory_space<vmem>>, vector<1x4xf32>
    %31 = vector.broadcast %30 : vector<1x4xf32> to vector<16x4xf32>
    %32 = arith.addf %29, %31 : vector<16x4xf32>
    %c0_13 = arith.constant 0 : index
    %c0_14 = arith.constant 0 : index
    %33 = vector.load %arg8[%c0_13, %c0_14] : memref<1x4xf32, #tpu.memory_space<vmem>>, vector<1x4xf32>
    %34 = vector.broadcast %33 : vector<1x4xf32> to vector<16x4xf32>
    %35 = arith.mulf %32, %34 : vector<16x4xf32>
    %c0_15 = arith.constant 0 : index
    %c0_16 = arith.constant 0 : index
    %36 = vector.load %arg9[%c0_15, %c0_16] : memref<4x32xbf16, #tpu.memory_space<vmem>>, vector<4x32xbf16>
    %37 = arith.truncf %35 : vector<16x4xf32> to vector<16x4xbf16>
    %cst = arith.constant dense<0.000000e+00> : vector<16x32xf32>
    %38 = tpu.matmul %37, %36, %cst {dimension_numbers = #tpu.dot_dimension_numbers<[1], [0], [0], [1], [0, 0, 1, 1], [], []>} : vector<16x4xbf16>, vector<4x32xbf16>, vector<16x32xf32> -> vector<16x32xf32>
    %c0_17 = arith.constant 0 : index
    %c0_18 = arith.constant 0 : index
    %39 = vector.load %arg10[%c0_17, %c0_18] : memref<1x32xf32, #tpu.memory_space<vmem>>, vector<1x32xf32>
    %40 = vector.broadcast %39 : vector<1x32xf32> to vector<16x32xf32>
    %41 = arith.addf %38, %40 : vector<16x32xf32>
    %cst_19 = arith.constant 0.000000e+00 : f32
    %42 = vector.broadcast %cst_19 : f32 to vector<16x32xf32>
    %43 = arith.maximumf %41, %42 : vector<16x32xf32>
    %c0_20 = arith.constant 0 : index
    %c0_21 = arith.constant 0 : index
    %44 = vector.load %arg11[%c0_20, %c0_21] : memref<32x32xbf16, #tpu.memory_space<vmem>>, vector<32x32xbf16>
    %45 = arith.truncf %43 : vector<16x32xf32> to vector<16x32xbf16>
    %cst_22 = arith.constant dense<0.000000e+00> : vector<16x32xf32>
    %46 = tpu.matmul %45, %44, %cst_22 {dimension_numbers = #tpu.dot_dimension_numbers<[1], [0], [0], [1], [0, 0, 1, 1], [], []>} : vector<16x32xbf16>, vector<32x32xbf16>, vector<16x32xf32> -> vector<16x32xf32>
    %c0_23 = arith.constant 0 : index
    %c0_24 = arith.constant 0 : index
    %47 = vector.load %arg12[%c0_23, %c0_24] : memref<1x32xf32, #tpu.memory_space<vmem>>, vector<1x32xf32>
    %48 = vector.broadcast %47 : vector<1x32xf32> to vector<16x32xf32>
    %49 = arith.addf %46, %48 : vector<16x32xf32>
    %cst_25 = arith.constant 0.000000e+00 : f32
    %50 = vector.broadcast %cst_25 : f32 to vector<16x32xf32>
    %51 = arith.maximumf %49, %50 : vector<16x32xf32>
    %c0_26 = arith.constant 0 : index
    %c0_27 = arith.constant 0 : index
    %52 = vector.load %arg1[%c0_26, %c0_27] : memref<16x6xf32, #tpu.memory_space<vmem>>, vector<16x6xf32>
    %c0_28 = arith.constant 0 : index
    %c0_29 = arith.constant 0 : index
    %53 = vector.load %arg13[%c0_28, %c0_29] : memref<1x6xf32, #tpu.memory_space<vmem>>, vector<1x6xf32>
    %54 = vector.broadcast %53 : vector<1x6xf32> to vector<16x6xf32>
    %55 = arith.addf %52, %54 : vector<16x6xf32>
    %c0_30 = arith.constant 0 : index
    %c0_31 = arith.constant 0 : index
    %56 = vector.load %arg14[%c0_30, %c0_31] : memref<1x6xf32, #tpu.memory_space<vmem>>, vector<1x6xf32>
    %57 = vector.broadcast %56 : vector<1x6xf32> to vector<16x6xf32>
    %58 = arith.mulf %55, %57 : vector<16x6xf32>
    %c0_32 = arith.constant 0 : index
    %c0_33 = arith.constant 0 : index
    %59 = vector.load %arg15[%c0_32, %c0_33] : memref<6x32xbf16, #tpu.memory_space<vmem>>, vector<6x32xbf16>
    %60 = arith.truncf %58 : vector<16x6xf32> to vector<16x6xbf16>
    %cst_34 = arith.constant dense<0.000000e+00> : vector<16x32xf32>
    %61 = tpu.matmul %60, %59, %cst_34 {dimension_numbers = #tpu.dot_dimension_numbers<[1], [0], [0], [1], [0, 0, 1, 1], [], []>} : vector<16x6xbf16>, vector<6x32xbf16>, vector<16x32xf32> -> vector<16x32xf32>
    %c0_35 = arith.constant 0 : index
    %c0_36 = arith.constant 0 : index
    %62 = vector.load %arg16[%c0_35, %c0_36] : memref<1x32xf32, #tpu.memory_space<vmem>>, vector<1x32xf32>
    %63 = vector.broadcast %62 : vector<1x32xf32> to vector<16x32xf32>
    %64 = arith.addf %61, %63 : vector<16x32xf32>
    %cst_37 = arith.constant 0.000000e+00 : f32
    %65 = vector.broadcast %cst_37 : f32 to vector<16x32xf32>
    %66 = arith.maximumf %64, %65 : vector<16x32xf32>
    %c0_38 = arith.constant 0 : index
    %c0_39 = arith.constant 0 : index
    %67 = vector.load %arg17[%c0_38, %c0_39] : memref<32x32xbf16, #tpu.memory_space<vmem>>, vector<32x32xbf16>
    %68 = arith.truncf %66 : vector<16x32xf32> to vector<16x32xbf16>
    %cst_40 = arith.constant dense<0.000000e+00> : vector<16x32xf32>
    %69 = tpu.matmul %68, %67, %cst_40 {dimension_numbers = #tpu.dot_dimension_numbers<[1], [0], [0], [1], [0, 0, 1, 1], [], []>} : vector<16x32xbf16>, vector<32x32xbf16>, vector<16x32xf32> -> vector<16x32xf32>
    %c0_41 = arith.constant 0 : index
    %c0_42 = arith.constant 0 : index
    %70 = vector.load %arg18[%c0_41, %c0_42] : memref<1x32xf32, #tpu.memory_space<vmem>>, vector<1x32xf32>
    %71 = vector.broadcast %70 : vector<1x32xf32> to vector<16x32xf32>
    %72 = arith.addf %69, %71 : vector<16x32xf32>
    %cst_43 = arith.constant 0.000000e+00 : f32
    %73 = vector.broadcast %cst_43 : f32 to vector<16x32xf32>
    %74 = arith.maximumf %72, %73 : vector<16x32xf32>
    %75 = arith.truncf %74 : vector<16x32xf32> to vector<16x32xbf16>
    %76 = arith.truncf %51 : vector<16x32xf32> to vector<16x32xbf16>
    %c0_44 = arith.constant 0 : index
    %c0_45 = arith.constant 0 : index
    %c0_46 = arith.constant 0 : index
    %77 = vector.load %arg19[%c0_44, %c0_45, %c0_46] : memref<4x32x32xbf16, #tpu.memory_space<vmem>>, vector<1x32x32xbf16>
    %78 = vector.shape_cast %77 : vector<1x32x32xbf16> to vector<32x32xbf16>
    %cst_47 = arith.constant dense<0.000000e+00> : vector<16x32xf32>
    %79 = tpu.matmul %76, %78, %cst_47 {dimension_numbers = #tpu.dot_dimension_numbers<[1], [0], [0], [1], [0, 0, 1, 1], [], []>} : vector<16x32xbf16>, vector<32x32xbf16>, vector<16x32xf32> -> vector<16x32xf32>
    %c0_48 = arith.constant 0 : index
    %c0_49 = arith.constant 0 : index
    %c0_50 = arith.constant 0 : index
    %80 = vector.load %arg22[%c0_48, %c0_49, %c0_50] : memref<4x32x32xbf16, #tpu.memory_space<vmem>>, vector<1x32x32xbf16>
    %81 = vector.shape_cast %80 : vector<1x32x32xbf16> to vector<32x32xbf16>
    %cst_51 = arith.constant dense<0.000000e+00> : vector<16x32xf32>
    %82 = tpu.matmul %75, %81, %cst_51 {dimension_numbers = #tpu.dot_dimension_numbers<[1], [0], [0], [1], [0, 0, 1, 1], [], []>} : vector<16x32xbf16>, vector<32x32xbf16>, vector<16x32xf32> -> vector<16x32xf32>
    %83 = arith.truncf %79 : vector<16x32xf32> to vector<16x32xbf16>
    %cst_52 = arith.constant dense<0.000000e+00> : vector<48x32xf32>
    %84 = tpu.matmul %10, %83, %cst_52 {dimension_numbers = #tpu.dot_dimension_numbers<[1], [0], [0], [1], [0, 0, 1, 1], [], []>} : vector<48x16xbf16>, vector<16x32xbf16>, vector<48x32xf32> -> vector<48x32xf32>
    %85 = arith.truncf %82 : vector<16x32xf32> to vector<16x32xbf16>
    %cst_53 = arith.constant dense<0.000000e+00> : vector<48x32xf32>
    %86 = tpu.matmul %16, %85, %cst_53 {dimension_numbers = #tpu.dot_dimension_numbers<[1], [0], [0], [1], [0, 0, 1, 1], [], []>} : vector<48x16xbf16>, vector<16x32xbf16>, vector<48x32xf32> -> vector<48x32xf32>
    %87 = arith.addf %84, %86 : vector<48x32xf32>
    %c0_54 = arith.constant 0 : index
    %c0_55 = arith.constant 0 : index
    %c0_56 = arith.constant 0 : index
    %88 = vector.load %arg21[%c0_54, %c0_55, %c0_56] : memref<4x1x32xbf16, #tpu.memory_space<vmem>>, vector<1x1x32xbf16>
    %89 = vector.shape_cast %88 : vector<1x1x32xbf16> to vector<1x32xbf16>
    %90 = arith.extf %89 : vector<1x32xbf16> to vector<1x32xf32>
    %91 = vector.broadcast %0 : vector<48x1xf32> to vector<48x32xf32>
    %92 = vector.broadcast %90 : vector<1x32xf32> to vector<48x32xf32>
    %93 = arith.mulf %91, %92 : vector<48x32xf32>
    %94 = arith.addf %87, %93 : vector<48x32xf32>
    %c0_57 = arith.constant 0 : index
    %c0_58 = arith.constant 0 : index
    %c0_59 = arith.constant 0 : index
    %95 = vector.load %arg20[%c0_57, %c0_58, %c0_59] : memref<4x1x32xf32, #tpu.memory_space<vmem>>, vector<1x1x32xf32>
    %96 = vector.shape_cast %95 : vector<1x1x32xf32> to vector<1x32xf32>
    %97 = vector.broadcast %96 : vector<1x32xf32> to vector<48x32xf32>
    %98 = arith.addf %94, %97 : vector<48x32xf32>
    %cst_60 = arith.constant 0.000000e+00 : f32
    %99 = vector.broadcast %cst_60 : f32 to vector<48x32xf32>
    %100 = arith.maximumf %98, %99 : vector<48x32xf32>
    %c0_61 = arith.constant 0 : index
    %c0_62 = arith.constant 0 : index
    %c0_63 = arith.constant 0 : index
    %101 = vector.load %arg23[%c0_61, %c0_62, %c0_63] : memref<4x32x32xbf16, #tpu.memory_space<vmem>>, vector<1x32x32xbf16>
    %102 = vector.shape_cast %101 : vector<1x32x32xbf16> to vector<32x32xbf16>
    %103 = arith.truncf %100 : vector<48x32xf32> to vector<48x32xbf16>
    %cst_64 = arith.constant dense<0.000000e+00> : vector<48x32xf32>
    %104 = tpu.matmul %103, %102, %cst_64 {dimension_numbers = #tpu.dot_dimension_numbers<[1], [0], [0], [1], [0, 0, 1, 1], [], []>} : vector<48x32xbf16>, vector<32x32xbf16>, vector<48x32xf32> -> vector<48x32xf32>
    %c0_65 = arith.constant 0 : index
    %c0_66 = arith.constant 0 : index
    %c0_67 = arith.constant 0 : index
    %105 = vector.load %arg24[%c0_65, %c0_66, %c0_67] : memref<4x1x32xf32, #tpu.memory_space<vmem>>, vector<1x1x32xf32>
    %106 = vector.shape_cast %105 : vector<1x1x32xf32> to vector<1x32xf32>
    %107 = vector.broadcast %106 : vector<1x32xf32> to vector<48x32xf32>
    %108 = arith.addf %104, %107 : vector<48x32xf32>
    %109 = arith.truncf %108 : vector<48x32xf32> to vector<48x32xbf16>
    %cst_68 = arith.constant dense<0.000000e+00> : vector<16x32xf32>
    %110 = tpu.matmul %22, %109, %cst_68 {dimension_numbers = #tpu.dot_dimension_numbers<[1], [0], [0], [1], [0, 0, 1, 1], [], []>} : vector<16x48xbf16>, vector<48x32xbf16>, vector<16x32xf32> -> vector<16x32xf32>
    %c0_69 = arith.constant 0 : index
    %c0_70 = arith.constant 0 : index
    %c0_71 = arith.constant 0 : index
    %111 = vector.load %arg25[%c0_69, %c0_70, %c0_71] : memref<4x32x32xbf16, #tpu.memory_space<vmem>>, vector<1x32x32xbf16>
    %112 = vector.shape_cast %111 : vector<1x32x32xbf16> to vector<32x32xbf16>
    %113 = arith.truncf %110 : vector<16x32xf32> to vector<16x32xbf16>
    %cst_72 = arith.constant dense<0.000000e+00> : vector<16x32xf32>
    %114 = tpu.matmul %113, %112, %cst_72 {dimension_numbers = #tpu.dot_dimension_numbers<[1], [0], [0], [1], [0, 0, 1, 1], [], []>} : vector<16x32xbf16>, vector<32x32xbf16>, vector<16x32xf32> -> vector<16x32xf32>
    %c0_73 = arith.constant 0 : index
    %c0_74 = arith.constant 0 : index
    %c0_75 = arith.constant 0 : index
    %115 = vector.load %arg26[%c0_73, %c0_74, %c0_75] : memref<4x32x32xbf16, #tpu.memory_space<vmem>>, vector<1x32x32xbf16>
    %116 = vector.shape_cast %115 : vector<1x32x32xbf16> to vector<32x32xbf16>
    %cst_76 = arith.constant dense<0.000000e+00> : vector<16x32xf32>
    %117 = tpu.matmul %76, %116, %cst_76 {dimension_numbers = #tpu.dot_dimension_numbers<[1], [0], [0], [1], [0, 0, 1, 1], [], []>} : vector<16x32xbf16>, vector<32x32xbf16>, vector<16x32xf32> -> vector<16x32xf32>
    %118 = arith.addf %114, %117 : vector<16x32xf32>
    %c0_77 = arith.constant 0 : index
    %c0_78 = arith.constant 0 : index
    %c0_79 = arith.constant 0 : index
    %119 = vector.load %arg27[%c0_77, %c0_78, %c0_79] : memref<4x1x32xf32, #tpu.memory_space<vmem>>, vector<1x1x32xf32>
    %120 = vector.shape_cast %119 : vector<1x1x32xf32> to vector<1x32xf32>
    %121 = vector.broadcast %120 : vector<1x32xf32> to vector<16x32xf32>
    %122 = arith.addf %118, %121 : vector<16x32xf32>
    %cst_80 = arith.constant 0.000000e+00 : f32
    %123 = vector.broadcast %cst_80 : f32 to vector<16x32xf32>
    %124 = arith.maximumf %122, %123 : vector<16x32xf32>
    %c0_81 = arith.constant 0 : index
    %c0_82 = arith.constant 0 : index
    %c0_83 = arith.constant 0 : index
    %125 = vector.load %arg28[%c0_81, %c0_82, %c0_83] : memref<4x32x32xbf16, #tpu.memory_space<vmem>>, vector<1x32x32xbf16>
    %126 = vector.shape_cast %125 : vector<1x32x32xbf16> to vector<32x32xbf16>
    %127 = arith.truncf %124 : vector<16x32xf32> to vector<16x32xbf16>
    %cst_84 = arith.constant dense<0.000000e+00> : vector<16x32xf32>
    %128 = tpu.matmul %127, %126, %cst_84 {dimension_numbers = #tpu.dot_dimension_numbers<[1], [0], [0], [1], [0, 0, 1, 1], [], []>} : vector<16x32xbf16>, vector<32x32xbf16>, vector<16x32xf32> -> vector<16x32xf32>
    %c0_85 = arith.constant 0 : index
    %c0_86 = arith.constant 0 : index
    %c0_87 = arith.constant 0 : index
    %129 = vector.load %arg29[%c0_85, %c0_86, %c0_87] : memref<4x1x32xf32, #tpu.memory_space<vmem>>, vector<1x1x32xf32>
    %130 = vector.shape_cast %129 : vector<1x1x32xf32> to vector<1x32xf32>
    %131 = vector.broadcast %130 : vector<1x32xf32> to vector<16x32xf32>
    %132 = arith.addf %128, %131 : vector<16x32xf32>
    %133 = arith.truncf %51 : vector<16x32xf32> to vector<16x32xbf16>
    %134 = arith.truncf %132 : vector<16x32xf32> to vector<16x32xbf16>
    %c1 = arith.constant 1 : index
    %c0_88 = arith.constant 0 : index
    %c0_89 = arith.constant 0 : index
    %135 = vector.load %arg19[%c1, %c0_88, %c0_89] : memref<4x32x32xbf16, #tpu.memory_space<vmem>>, vector<1x32x32xbf16>
    %136 = vector.shape_cast %135 : vector<1x32x32xbf16> to vector<32x32xbf16>
    %cst_90 = arith.constant dense<0.000000e+00> : vector<16x32xf32>
    %137 = tpu.matmul %134, %136, %cst_90 {dimension_numbers = #tpu.dot_dimension_numbers<[1], [0], [0], [1], [0, 0, 1, 1], [], []>} : vector<16x32xbf16>, vector<32x32xbf16>, vector<16x32xf32> -> vector<16x32xf32>
    %c1_91 = arith.constant 1 : index
    %c0_92 = arith.constant 0 : index
    %c0_93 = arith.constant 0 : index
    %138 = vector.load %arg22[%c1_91, %c0_92, %c0_93] : memref<4x32x32xbf16, #tpu.memory_space<vmem>>, vector<1x32x32xbf16>
    %139 = vector.shape_cast %138 : vector<1x32x32xbf16> to vector<32x32xbf16>
    %cst_94 = arith.constant dense<0.000000e+00> : vector<16x32xf32>
    %140 = tpu.matmul %133, %139, %cst_94 {dimension_numbers = #tpu.dot_dimension_numbers<[1], [0], [0], [1], [0, 0, 1, 1], [], []>} : vector<16x32xbf16>, vector<32x32xbf16>, vector<16x32xf32> -> vector<16x32xf32>
    %141 = arith.truncf %137 : vector<16x32xf32> to vector<16x32xbf16>
    %cst_95 = arith.constant dense<0.000000e+00> : vector<48x32xf32>
    %142 = tpu.matmul %16, %141, %cst_95 {dimension_numbers = #tpu.dot_dimension_numbers<[1], [0], [0], [1], [0, 0, 1, 1], [], []>} : vector<48x16xbf16>, vector<16x32xbf16>, vector<48x32xf32> -> vector<48x32xf32>
    %143 = arith.truncf %140 : vector<16x32xf32> to vector<16x32xbf16>
    %cst_96 = arith.constant dense<0.000000e+00> : vector<48x32xf32>
    %144 = tpu.matmul %10, %143, %cst_96 {dimension_numbers = #tpu.dot_dimension_numbers<[1], [0], [0], [1], [0, 0, 1, 1], [], []>} : vector<48x16xbf16>, vector<16x32xbf16>, vector<48x32xf32> -> vector<48x32xf32>
    %145 = arith.addf %142, %144 : vector<48x32xf32>
    %c1_97 = arith.constant 1 : index
    %c0_98 = arith.constant 0 : index
    %c0_99 = arith.constant 0 : index
    %146 = vector.load %arg21[%c1_97, %c0_98, %c0_99] : memref<4x1x32xbf16, #tpu.memory_space<vmem>>, vector<1x1x32xbf16>
    %147 = vector.shape_cast %146 : vector<1x1x32xbf16> to vector<1x32xbf16>
    %148 = arith.extf %147 : vector<1x32xbf16> to vector<1x32xf32>
    %149 = vector.broadcast %0 : vector<48x1xf32> to vector<48x32xf32>
    %150 = vector.broadcast %148 : vector<1x32xf32> to vector<48x32xf32>
    %151 = arith.mulf %149, %150 : vector<48x32xf32>
    %152 = arith.addf %145, %151 : vector<48x32xf32>
    %c1_100 = arith.constant 1 : index
    %c0_101 = arith.constant 0 : index
    %c0_102 = arith.constant 0 : index
    %153 = vector.load %arg20[%c1_100, %c0_101, %c0_102] : memref<4x1x32xf32, #tpu.memory_space<vmem>>, vector<1x1x32xf32>
    %154 = vector.shape_cast %153 : vector<1x1x32xf32> to vector<1x32xf32>
    %155 = vector.broadcast %154 : vector<1x32xf32> to vector<48x32xf32>
    %156 = arith.addf %152, %155 : vector<48x32xf32>
    %cst_103 = arith.constant 0.000000e+00 : f32
    %157 = vector.broadcast %cst_103 : f32 to vector<48x32xf32>
    %158 = arith.maximumf %156, %157 : vector<48x32xf32>
    %c1_104 = arith.constant 1 : index
    %c0_105 = arith.constant 0 : index
    %c0_106 = arith.constant 0 : index
    %159 = vector.load %arg23[%c1_104, %c0_105, %c0_106] : memref<4x32x32xbf16, #tpu.memory_space<vmem>>, vector<1x32x32xbf16>
    %160 = vector.shape_cast %159 : vector<1x32x32xbf16> to vector<32x32xbf16>
    %161 = arith.truncf %158 : vector<48x32xf32> to vector<48x32xbf16>
    %cst_107 = arith.constant dense<0.000000e+00> : vector<48x32xf32>
    %162 = tpu.matmul %161, %160, %cst_107 {dimension_numbers = #tpu.dot_dimension_numbers<[1], [0], [0], [1], [0, 0, 1, 1], [], []>} : vector<48x32xbf16>, vector<32x32xbf16>, vector<48x32xf32> -> vector<48x32xf32>
    %c1_108 = arith.constant 1 : index
    %c0_109 = arith.constant 0 : index
    %c0_110 = arith.constant 0 : index
    %163 = vector.load %arg24[%c1_108, %c0_109, %c0_110] : memref<4x1x32xf32, #tpu.memory_space<vmem>>, vector<1x1x32xf32>
    %164 = vector.shape_cast %163 : vector<1x1x32xf32> to vector<1x32xf32>
    %165 = vector.broadcast %164 : vector<1x32xf32> to vector<48x32xf32>
    %166 = arith.addf %162, %165 : vector<48x32xf32>
    %167 = arith.truncf %166 : vector<48x32xf32> to vector<48x32xbf16>
    %cst_111 = arith.constant dense<0.000000e+00> : vector<16x32xf32>
    %168 = tpu.matmul %28, %167, %cst_111 {dimension_numbers = #tpu.dot_dimension_numbers<[1], [0], [0], [1], [0, 0, 1, 1], [], []>} : vector<16x48xbf16>, vector<48x32xbf16>, vector<16x32xf32> -> vector<16x32xf32>
    %c1_112 = arith.constant 1 : index
    %c0_113 = arith.constant 0 : index
    %c0_114 = arith.constant 0 : index
    %169 = vector.load %arg25[%c1_112, %c0_113, %c0_114] : memref<4x32x32xbf16, #tpu.memory_space<vmem>>, vector<1x32x32xbf16>
    %170 = vector.shape_cast %169 : vector<1x32x32xbf16> to vector<32x32xbf16>
    %171 = arith.truncf %168 : vector<16x32xf32> to vector<16x32xbf16>
    %cst_115 = arith.constant dense<0.000000e+00> : vector<16x32xf32>
    %172 = tpu.matmul %171, %170, %cst_115 {dimension_numbers = #tpu.dot_dimension_numbers<[1], [0], [0], [1], [0, 0, 1, 1], [], []>} : vector<16x32xbf16>, vector<32x32xbf16>, vector<16x32xf32> -> vector<16x32xf32>
    %c1_116 = arith.constant 1 : index
    %c0_117 = arith.constant 0 : index
    %c0_118 = arith.constant 0 : index
    %173 = vector.load %arg26[%c1_116, %c0_117, %c0_118] : memref<4x32x32xbf16, #tpu.memory_space<vmem>>, vector<1x32x32xbf16>
    %174 = vector.shape_cast %173 : vector<1x32x32xbf16> to vector<32x32xbf16>
    %cst_119 = arith.constant dense<0.000000e+00> : vector<16x32xf32>
    %175 = tpu.matmul %134, %174, %cst_119 {dimension_numbers = #tpu.dot_dimension_numbers<[1], [0], [0], [1], [0, 0, 1, 1], [], []>} : vector<16x32xbf16>, vector<32x32xbf16>, vector<16x32xf32> -> vector<16x32xf32>
    %176 = arith.addf %172, %175 : vector<16x32xf32>
    %c1_120 = arith.constant 1 : index
    %c0_121 = arith.constant 0 : index
    %c0_122 = arith.constant 0 : index
    %177 = vector.load %arg27[%c1_120, %c0_121, %c0_122] : memref<4x1x32xf32, #tpu.memory_space<vmem>>, vector<1x1x32xf32>
    %178 = vector.shape_cast %177 : vector<1x1x32xf32> to vector<1x32xf32>
    %179 = vector.broadcast %178 : vector<1x32xf32> to vector<16x32xf32>
    %180 = arith.addf %176, %179 : vector<16x32xf32>
    %cst_123 = arith.constant 0.000000e+00 : f32
    %181 = vector.broadcast %cst_123 : f32 to vector<16x32xf32>
    %182 = arith.maximumf %180, %181 : vector<16x32xf32>
    %c1_124 = arith.constant 1 : index
    %c0_125 = arith.constant 0 : index
    %c0_126 = arith.constant 0 : index
    %183 = vector.load %arg28[%c1_124, %c0_125, %c0_126] : memref<4x32x32xbf16, #tpu.memory_space<vmem>>, vector<1x32x32xbf16>
    %184 = vector.shape_cast %183 : vector<1x32x32xbf16> to vector<32x32xbf16>
    %185 = arith.truncf %182 : vector<16x32xf32> to vector<16x32xbf16>
    %cst_127 = arith.constant dense<0.000000e+00> : vector<16x32xf32>
    %186 = tpu.matmul %185, %184, %cst_127 {dimension_numbers = #tpu.dot_dimension_numbers<[1], [0], [0], [1], [0, 0, 1, 1], [], []>} : vector<16x32xbf16>, vector<32x32xbf16>, vector<16x32xf32> -> vector<16x32xf32>
    %c1_128 = arith.constant 1 : index
    %c0_129 = arith.constant 0 : index
    %c0_130 = arith.constant 0 : index
    %187 = vector.load %arg29[%c1_128, %c0_129, %c0_130] : memref<4x1x32xf32, #tpu.memory_space<vmem>>, vector<1x1x32xf32>
    %188 = vector.shape_cast %187 : vector<1x1x32xf32> to vector<1x32xf32>
    %189 = vector.broadcast %188 : vector<1x32xf32> to vector<16x32xf32>
    %190 = arith.addf %186, %189 : vector<16x32xf32>
    %191 = arith.truncf %132 : vector<16x32xf32> to vector<16x32xbf16>
    %192 = arith.truncf %190 : vector<16x32xf32> to vector<16x32xbf16>
    %c2 = arith.constant 2 : index
    %c0_131 = arith.constant 0 : index
    %c0_132 = arith.constant 0 : index
    %193 = vector.load %arg19[%c2, %c0_131, %c0_132] : memref<4x32x32xbf16, #tpu.memory_space<vmem>>, vector<1x32x32xbf16>
    %194 = vector.shape_cast %193 : vector<1x32x32xbf16> to vector<32x32xbf16>
    %cst_133 = arith.constant dense<0.000000e+00> : vector<16x32xf32>
    %195 = tpu.matmul %192, %194, %cst_133 {dimension_numbers = #tpu.dot_dimension_numbers<[1], [0], [0], [1], [0, 0, 1, 1], [], []>} : vector<16x32xbf16>, vector<32x32xbf16>, vector<16x32xf32> -> vector<16x32xf32>
    %c2_134 = arith.constant 2 : index
    %c0_135 = arith.constant 0 : index
    %c0_136 = arith.constant 0 : index
    %196 = vector.load %arg22[%c2_134, %c0_135, %c0_136] : memref<4x32x32xbf16, #tpu.memory_space<vmem>>, vector<1x32x32xbf16>
    %197 = vector.shape_cast %196 : vector<1x32x32xbf16> to vector<32x32xbf16>
    %cst_137 = arith.constant dense<0.000000e+00> : vector<16x32xf32>
    %198 = tpu.matmul %191, %197, %cst_137 {dimension_numbers = #tpu.dot_dimension_numbers<[1], [0], [0], [1], [0, 0, 1, 1], [], []>} : vector<16x32xbf16>, vector<32x32xbf16>, vector<16x32xf32> -> vector<16x32xf32>
    %199 = arith.truncf %195 : vector<16x32xf32> to vector<16x32xbf16>
    %cst_138 = arith.constant dense<0.000000e+00> : vector<48x32xf32>
    %200 = tpu.matmul %10, %199, %cst_138 {dimension_numbers = #tpu.dot_dimension_numbers<[1], [0], [0], [1], [0, 0, 1, 1], [], []>} : vector<48x16xbf16>, vector<16x32xbf16>, vector<48x32xf32> -> vector<48x32xf32>
    %201 = arith.truncf %198 : vector<16x32xf32> to vector<16x32xbf16>
    %cst_139 = arith.constant dense<0.000000e+00> : vector<48x32xf32>
    %202 = tpu.matmul %16, %201, %cst_139 {dimension_numbers = #tpu.dot_dimension_numbers<[1], [0], [0], [1], [0, 0, 1, 1], [], []>} : vector<48x16xbf16>, vector<16x32xbf16>, vector<48x32xf32> -> vector<48x32xf32>
    %203 = arith.addf %200, %202 : vector<48x32xf32>
    %c2_140 = arith.constant 2 : index
    %c0_141 = arith.constant 0 : index
    %c0_142 = arith.constant 0 : index
    %204 = vector.load %arg21[%c2_140, %c0_141, %c0_142] : memref<4x1x32xbf16, #tpu.memory_space<vmem>>, vector<1x1x32xbf16>
    %205 = vector.shape_cast %204 : vector<1x1x32xbf16> to vector<1x32xbf16>
    %206 = arith.extf %205 : vector<1x32xbf16> to vector<1x32xf32>
    %207 = vector.broadcast %0 : vector<48x1xf32> to vector<48x32xf32>
    %208 = vector.broadcast %206 : vector<1x32xf32> to vector<48x32xf32>
    %209 = arith.mulf %207, %208 : vector<48x32xf32>
    %210 = arith.addf %203, %209 : vector<48x32xf32>
    %c2_143 = arith.constant 2 : index
    %c0_144 = arith.constant 0 : index
    %c0_145 = arith.constant 0 : index
    %211 = vector.load %arg20[%c2_143, %c0_144, %c0_145] : memref<4x1x32xf32, #tpu.memory_space<vmem>>, vector<1x1x32xf32>
    %212 = vector.shape_cast %211 : vector<1x1x32xf32> to vector<1x32xf32>
    %213 = vector.broadcast %212 : vector<1x32xf32> to vector<48x32xf32>
    %214 = arith.addf %210, %213 : vector<48x32xf32>
    %cst_146 = arith.constant 0.000000e+00 : f32
    %215 = vector.broadcast %cst_146 : f32 to vector<48x32xf32>
    %216 = arith.maximumf %214, %215 : vector<48x32xf32>
    %c2_147 = arith.constant 2 : index
    %c0_148 = arith.constant 0 : index
    %c0_149 = arith.constant 0 : index
    %217 = vector.load %arg23[%c2_147, %c0_148, %c0_149] : memref<4x32x32xbf16, #tpu.memory_space<vmem>>, vector<1x32x32xbf16>
    %218 = vector.shape_cast %217 : vector<1x32x32xbf16> to vector<32x32xbf16>
    %219 = arith.truncf %216 : vector<48x32xf32> to vector<48x32xbf16>
    %cst_150 = arith.constant dense<0.000000e+00> : vector<48x32xf32>
    %220 = tpu.matmul %219, %218, %cst_150 {dimension_numbers = #tpu.dot_dimension_numbers<[1], [0], [0], [1], [0, 0, 1, 1], [], []>} : vector<48x32xbf16>, vector<32x32xbf16>, vector<48x32xf32> -> vector<48x32xf32>
    %c2_151 = arith.constant 2 : index
    %c0_152 = arith.constant 0 : index
    %c0_153 = arith.constant 0 : index
    %221 = vector.load %arg24[%c2_151, %c0_152, %c0_153] : memref<4x1x32xf32, #tpu.memory_space<vmem>>, vector<1x1x32xf32>
    %222 = vector.shape_cast %221 : vector<1x1x32xf32> to vector<1x32xf32>
    %223 = vector.broadcast %222 : vector<1x32xf32> to vector<48x32xf32>
    %224 = arith.addf %220, %223 : vector<48x32xf32>
    %225 = arith.truncf %224 : vector<48x32xf32> to vector<48x32xbf16>
    %cst_154 = arith.constant dense<0.000000e+00> : vector<16x32xf32>
    %226 = tpu.matmul %22, %225, %cst_154 {dimension_numbers = #tpu.dot_dimension_numbers<[1], [0], [0], [1], [0, 0, 1, 1], [], []>} : vector<16x48xbf16>, vector<48x32xbf16>, vector<16x32xf32> -> vector<16x32xf32>
    %c2_155 = arith.constant 2 : index
    %c0_156 = arith.constant 0 : index
    %c0_157 = arith.constant 0 : index
    %227 = vector.load %arg25[%c2_155, %c0_156, %c0_157] : memref<4x32x32xbf16, #tpu.memory_space<vmem>>, vector<1x32x32xbf16>
    %228 = vector.shape_cast %227 : vector<1x32x32xbf16> to vector<32x32xbf16>
    %229 = arith.truncf %226 : vector<16x32xf32> to vector<16x32xbf16>
    %cst_158 = arith.constant dense<0.000000e+00> : vector<16x32xf32>
    %230 = tpu.matmul %229, %228, %cst_158 {dimension_numbers = #tpu.dot_dimension_numbers<[1], [0], [0], [1], [0, 0, 1, 1], [], []>} : vector<16x32xbf16>, vector<32x32xbf16>, vector<16x32xf32> -> vector<16x32xf32>
    %c2_159 = arith.constant 2 : index
    %c0_160 = arith.constant 0 : index
    %c0_161 = arith.constant 0 : index
    %231 = vector.load %arg26[%c2_159, %c0_160, %c0_161] : memref<4x32x32xbf16, #tpu.memory_space<vmem>>, vector<1x32x32xbf16>
    %232 = vector.shape_cast %231 : vector<1x32x32xbf16> to vector<32x32xbf16>
    %cst_162 = arith.constant dense<0.000000e+00> : vector<16x32xf32>
    %233 = tpu.matmul %192, %232, %cst_162 {dimension_numbers = #tpu.dot_dimension_numbers<[1], [0], [0], [1], [0, 0, 1, 1], [], []>} : vector<16x32xbf16>, vector<32x32xbf16>, vector<16x32xf32> -> vector<16x32xf32>
    %234 = arith.addf %230, %233 : vector<16x32xf32>
    %c2_163 = arith.constant 2 : index
    %c0_164 = arith.constant 0 : index
    %c0_165 = arith.constant 0 : index
    %235 = vector.load %arg27[%c2_163, %c0_164, %c0_165] : memref<4x1x32xf32, #tpu.memory_space<vmem>>, vector<1x1x32xf32>
    %236 = vector.shape_cast %235 : vector<1x1x32xf32> to vector<1x32xf32>
    %237 = vector.broadcast %236 : vector<1x32xf32> to vector<16x32xf32>
    %238 = arith.addf %234, %237 : vector<16x32xf32>
    %cst_166 = arith.constant 0.000000e+00 : f32
    %239 = vector.broadcast %cst_166 : f32 to vector<16x32xf32>
    %240 = arith.maximumf %238, %239 : vector<16x32xf32>
    %c2_167 = arith.constant 2 : index
    %c0_168 = arith.constant 0 : index
    %c0_169 = arith.constant 0 : index
    %241 = vector.load %arg28[%c2_167, %c0_168, %c0_169] : memref<4x32x32xbf16, #tpu.memory_space<vmem>>, vector<1x32x32xbf16>
    %242 = vector.shape_cast %241 : vector<1x32x32xbf16> to vector<32x32xbf16>
    %243 = arith.truncf %240 : vector<16x32xf32> to vector<16x32xbf16>
    %cst_170 = arith.constant dense<0.000000e+00> : vector<16x32xf32>
    %244 = tpu.matmul %243, %242, %cst_170 {dimension_numbers = #tpu.dot_dimension_numbers<[1], [0], [0], [1], [0, 0, 1, 1], [], []>} : vector<16x32xbf16>, vector<32x32xbf16>, vector<16x32xf32> -> vector<16x32xf32>
    %c2_171 = arith.constant 2 : index
    %c0_172 = arith.constant 0 : index
    %c0_173 = arith.constant 0 : index
    %245 = vector.load %arg29[%c2_171, %c0_172, %c0_173] : memref<4x1x32xf32, #tpu.memory_space<vmem>>, vector<1x1x32xf32>
    %246 = vector.shape_cast %245 : vector<1x1x32xf32> to vector<1x32xf32>
    %247 = vector.broadcast %246 : vector<1x32xf32> to vector<16x32xf32>
    %248 = arith.addf %244, %247 : vector<16x32xf32>
    %249 = arith.truncf %190 : vector<16x32xf32> to vector<16x32xbf16>
    %250 = arith.truncf %248 : vector<16x32xf32> to vector<16x32xbf16>
    %c3 = arith.constant 3 : index
    %c0_174 = arith.constant 0 : index
    %c0_175 = arith.constant 0 : index
    %251 = vector.load %arg19[%c3, %c0_174, %c0_175] : memref<4x32x32xbf16, #tpu.memory_space<vmem>>, vector<1x32x32xbf16>
    %252 = vector.shape_cast %251 : vector<1x32x32xbf16> to vector<32x32xbf16>
    %cst_176 = arith.constant dense<0.000000e+00> : vector<16x32xf32>
    %253 = tpu.matmul %250, %252, %cst_176 {dimension_numbers = #tpu.dot_dimension_numbers<[1], [0], [0], [1], [0, 0, 1, 1], [], []>} : vector<16x32xbf16>, vector<32x32xbf16>, vector<16x32xf32> -> vector<16x32xf32>
    %c3_177 = arith.constant 3 : index
    %c0_178 = arith.constant 0 : index
    %c0_179 = arith.constant 0 : index
    %254 = vector.load %arg22[%c3_177, %c0_178, %c0_179] : memref<4x32x32xbf16, #tpu.memory_space<vmem>>, vector<1x32x32xbf16>
    %255 = vector.shape_cast %254 : vector<1x32x32xbf16> to vector<32x32xbf16>
    %cst_180 = arith.constant dense<0.000000e+00> : vector<16x32xf32>
    %256 = tpu.matmul %249, %255, %cst_180 {dimension_numbers = #tpu.dot_dimension_numbers<[1], [0], [0], [1], [0, 0, 1, 1], [], []>} : vector<16x32xbf16>, vector<32x32xbf16>, vector<16x32xf32> -> vector<16x32xf32>
    %257 = arith.truncf %253 : vector<16x32xf32> to vector<16x32xbf16>
    %cst_181 = arith.constant dense<0.000000e+00> : vector<48x32xf32>
    %258 = tpu.matmul %16, %257, %cst_181 {dimension_numbers = #tpu.dot_dimension_numbers<[1], [0], [0], [1], [0, 0, 1, 1], [], []>} : vector<48x16xbf16>, vector<16x32xbf16>, vector<48x32xf32> -> vector<48x32xf32>
    %259 = arith.truncf %256 : vector<16x32xf32> to vector<16x32xbf16>
    %cst_182 = arith.constant dense<0.000000e+00> : vector<48x32xf32>
    %260 = tpu.matmul %10, %259, %cst_182 {dimension_numbers = #tpu.dot_dimension_numbers<[1], [0], [0], [1], [0, 0, 1, 1], [], []>} : vector<48x16xbf16>, vector<16x32xbf16>, vector<48x32xf32> -> vector<48x32xf32>
    %261 = arith.addf %258, %260 : vector<48x32xf32>
    %c3_183 = arith.constant 3 : index
    %c0_184 = arith.constant 0 : index
    %c0_185 = arith.constant 0 : index
    %262 = vector.load %arg21[%c3_183, %c0_184, %c0_185] : memref<4x1x32xbf16, #tpu.memory_space<vmem>>, vector<1x1x32xbf16>
    %263 = vector.shape_cast %262 : vector<1x1x32xbf16> to vector<1x32xbf16>
    %264 = arith.extf %263 : vector<1x32xbf16> to vector<1x32xf32>
    %265 = vector.broadcast %0 : vector<48x1xf32> to vector<48x32xf32>
    %266 = vector.broadcast %264 : vector<1x32xf32> to vector<48x32xf32>
    %267 = arith.mulf %265, %266 : vector<48x32xf32>
    %268 = arith.addf %261, %267 : vector<48x32xf32>
    %c3_186 = arith.constant 3 : index
    %c0_187 = arith.constant 0 : index
    %c0_188 = arith.constant 0 : index
    %269 = vector.load %arg20[%c3_186, %c0_187, %c0_188] : memref<4x1x32xf32, #tpu.memory_space<vmem>>, vector<1x1x32xf32>
    %270 = vector.shape_cast %269 : vector<1x1x32xf32> to vector<1x32xf32>
    %271 = vector.broadcast %270 : vector<1x32xf32> to vector<48x32xf32>
    %272 = arith.addf %268, %271 : vector<48x32xf32>
    %cst_189 = arith.constant 0.000000e+00 : f32
    %273 = vector.broadcast %cst_189 : f32 to vector<48x32xf32>
    %274 = arith.maximumf %272, %273 : vector<48x32xf32>
    %c3_190 = arith.constant 3 : index
    %c0_191 = arith.constant 0 : index
    %c0_192 = arith.constant 0 : index
    %275 = vector.load %arg23[%c3_190, %c0_191, %c0_192] : memref<4x32x32xbf16, #tpu.memory_space<vmem>>, vector<1x32x32xbf16>
    %276 = vector.shape_cast %275 : vector<1x32x32xbf16> to vector<32x32xbf16>
    %277 = arith.truncf %274 : vector<48x32xf32> to vector<48x32xbf16>
    %cst_193 = arith.constant dense<0.000000e+00> : vector<48x32xf32>
    %278 = tpu.matmul %277, %276, %cst_193 {dimension_numbers = #tpu.dot_dimension_numbers<[1], [0], [0], [1], [0, 0, 1, 1], [], []>} : vector<48x32xbf16>, vector<32x32xbf16>, vector<48x32xf32> -> vector<48x32xf32>
    %c3_194 = arith.constant 3 : index
    %c0_195 = arith.constant 0 : index
    %c0_196 = arith.constant 0 : index
    %279 = vector.load %arg24[%c3_194, %c0_195, %c0_196] : memref<4x1x32xf32, #tpu.memory_space<vmem>>, vector<1x1x32xf32>
    %280 = vector.shape_cast %279 : vector<1x1x32xf32> to vector<1x32xf32>
    %281 = vector.broadcast %280 : vector<1x32xf32> to vector<48x32xf32>
    %282 = arith.addf %278, %281 : vector<48x32xf32>
    %283 = arith.truncf %282 : vector<48x32xf32> to vector<48x32xbf16>
    %cst_197 = arith.constant dense<0.000000e+00> : vector<16x32xf32>
    %284 = tpu.matmul %28, %283, %cst_197 {dimension_numbers = #tpu.dot_dimension_numbers<[1], [0], [0], [1], [0, 0, 1, 1], [], []>} : vector<16x48xbf16>, vector<48x32xbf16>, vector<16x32xf32> -> vector<16x32xf32>
    %c3_198 = arith.constant 3 : index
    %c0_199 = arith.constant 0 : index
    %c0_200 = arith.constant 0 : index
    %285 = vector.load %arg25[%c3_198, %c0_199, %c0_200] : memref<4x32x32xbf16, #tpu.memory_space<vmem>>, vector<1x32x32xbf16>
    %286 = vector.shape_cast %285 : vector<1x32x32xbf16> to vector<32x32xbf16>
    %287 = arith.truncf %284 : vector<16x32xf32> to vector<16x32xbf16>
    %cst_201 = arith.constant dense<0.000000e+00> : vector<16x32xf32>
    %288 = tpu.matmul %287, %286, %cst_201 {dimension_numbers = #tpu.dot_dimension_numbers<[1], [0], [0], [1], [0, 0, 1, 1], [], []>} : vector<16x32xbf16>, vector<32x32xbf16>, vector<16x32xf32> -> vector<16x32xf32>
    %c3_202 = arith.constant 3 : index
    %c0_203 = arith.constant 0 : index
    %c0_204 = arith.constant 0 : index
    %289 = vector.load %arg26[%c3_202, %c0_203, %c0_204] : memref<4x32x32xbf16, #tpu.memory_space<vmem>>, vector<1x32x32xbf16>
    %290 = vector.shape_cast %289 : vector<1x32x32xbf16> to vector<32x32xbf16>
    %cst_205 = arith.constant dense<0.000000e+00> : vector<16x32xf32>
    %291 = tpu.matmul %250, %290, %cst_205 {dimension_numbers = #tpu.dot_dimension_numbers<[1], [0], [0], [1], [0, 0, 1, 1], [], []>} : vector<16x32xbf16>, vector<32x32xbf16>, vector<16x32xf32> -> vector<16x32xf32>
    %292 = arith.addf %288, %291 : vector<16x32xf32>
    %c3_206 = arith.constant 3 : index
    %c0_207 = arith.constant 0 : index
    %c0_208 = arith.constant 0 : index
    %293 = vector.load %arg27[%c3_206, %c0_207, %c0_208] : memref<4x1x32xf32, #tpu.memory_space<vmem>>, vector<1x1x32xf32>
    %294 = vector.shape_cast %293 : vector<1x1x32xf32> to vector<1x32xf32>
    %295 = vector.broadcast %294 : vector<1x32xf32> to vector<16x32xf32>
    %296 = arith.addf %292, %295 : vector<16x32xf32>
    %cst_209 = arith.constant 0.000000e+00 : f32
    %297 = vector.broadcast %cst_209 : f32 to vector<16x32xf32>
    %298 = arith.maximumf %296, %297 : vector<16x32xf32>
    %c3_210 = arith.constant 3 : index
    %c0_211 = arith.constant 0 : index
    %c0_212 = arith.constant 0 : index
    %299 = vector.load %arg28[%c3_210, %c0_211, %c0_212] : memref<4x32x32xbf16, #tpu.memory_space<vmem>>, vector<1x32x32xbf16>
    %300 = vector.shape_cast %299 : vector<1x32x32xbf16> to vector<32x32xbf16>
    %301 = arith.truncf %298 : vector<16x32xf32> to vector<16x32xbf16>
    %cst_213 = arith.constant dense<0.000000e+00> : vector<16x32xf32>
    %302 = tpu.matmul %301, %300, %cst_213 {dimension_numbers = #tpu.dot_dimension_numbers<[1], [0], [0], [1], [0, 0, 1, 1], [], []>} : vector<16x32xbf16>, vector<32x32xbf16>, vector<16x32xf32> -> vector<16x32xf32>
    %c3_214 = arith.constant 3 : index
    %c0_215 = arith.constant 0 : index
    %c0_216 = arith.constant 0 : index
    %303 = vector.load %arg29[%c3_214, %c0_215, %c0_216] : memref<4x1x32xf32, #tpu.memory_space<vmem>>, vector<1x1x32xf32>
    %304 = vector.shape_cast %303 : vector<1x1x32xf32> to vector<1x32xf32>
    %305 = vector.broadcast %304 : vector<1x32xf32> to vector<16x32xf32>
    %306 = arith.addf %302, %305 : vector<16x32xf32>
    %c0_217 = arith.constant 0 : index
    %c0_218 = arith.constant 0 : index
    %307 = vector.load %arg30[%c0_217, %c0_218] : memref<16x32xf32, #tpu.memory_space<vmem>>, vector<16x32xf32>
    tpu.vector_store %arg30[%c0_217, %c0_218], %306 {strides = array<i32>} : memref<16x32xf32, #tpu.memory_space<vmem>>, vector<16x32xf32>,
    %c0_219 = arith.constant 0 : index
    %c0_220 = arith.constant 0 : index
    %308 = vector.load %arg31[%c0_219, %c0_220] : memref<16x32xf32, #tpu.memory_space<vmem>>, vector<16x32xf32>
    tpu.vector_store %arg31[%c0_219, %c0_220], %248 {strides = array<i32>} : memref<16x32xf32, #tpu.memory_space<vmem>>, vector<16x32xf32>,
    return
  }
}

</mosaic_0001>

<llo_original>
// kernel: _gnn_forward.1
$region0: #{_gnn_forward.1}
  #allocation0 [shape = 'u32[]', space=smem, size = 0x4, offset = 0x4, fixed_abs, tag = 'smem constant byte address 0x4 - core index']
  #allocation1 [shape = 'u32[144,128]{1,0:T(1,128)}', space=vmem, size = 0x12000, scoped, tag = 'internal scratch']
  %s0 = inlined_call_operand.smem [shape: u32[32], index: -1, kind: input, shape index: {}]
  %s1 = sld [smem:[%s0]]
  %s2 = scalar_lea.smem %s0, 1
  %s3 = sld [smem:[%s2]]
  %s4 = scalar_lea.smem %s0, 2
  %s5 = sld [smem:[%s4]]
  %s6 = scalar_lea.smem %s0, 3
  %s7 = sld [smem:[%s6]]
  %s8 = scalar_lea.smem %s0, 4
  %s9 = sld [smem:[%s8]]
  %s10 = scalar_lea.smem %s0, 5
  %s11 = sld [smem:[%s10]]
  %s12 = scalar_lea.smem %s0, 6
  %s13 = sld [smem:[%s12]]
  %s14 = scalar_lea.smem %s0, 7
  %s15 = sld [smem:[%s14]]
  %s16 = scalar_lea.smem %s0, 8
  %s17 = sld [smem:[%s16]]
  %s18 = scalar_lea.smem %s0, 9
  %s19 = sld [smem:[%s18]]
  %s20 = scalar_lea.smem %s0, 10
  %s21 = sld [smem:[%s20]]
  %s22 = scalar_lea.smem %s0, 11
  %s23 = sld [smem:[%s22]]
  %s24 = scalar_lea.smem %s0, 12
  %s25 = sld [smem:[%s24]]
  %s26 = scalar_lea.smem %s0, 13
  %s27 = sld [smem:[%s26]]
  %s28 = scalar_lea.smem %s0, 14
  %s29 = sld [smem:[%s28]]
  %s30 = scalar_lea.smem %s0, 15
  %s31 = sld [smem:[%s30]]
  %s32 = scalar_lea.smem %s0, 16
  %s33 = sld [smem:[%s32]]
  %s34 = scalar_lea.smem %s0, 17
  %s35 = sld [smem:[%s34]]
  %s36 = scalar_lea.smem %s0, 18
  %s37 = sld [smem:[%s36]]
  %s38 = scalar_lea.smem %s0, 19
  %s39 = sld [smem:[%s38]]
  %s40 = scalar_lea.smem %s0, 20
  %s41 = sld [smem:[%s40]]
  %s42 = scalar_lea.smem %s0, 21
  %s43 = sld [smem:[%s42]]
  %s44 = scalar_lea.smem %s0, 22
  %s45 = sld [smem:[%s44]]
  %s46 = scalar_lea.smem %s0, 23
  %s47 = sld [smem:[%s46]]
  %s48 = scalar_lea.smem %s0, 24
  %s49 = sld [smem:[%s48]]
  %s50 = scalar_lea.smem %s0, 25
  %s51 = sld [smem:[%s50]]
  %s52 = scalar_lea.smem %s0, 26
  %s53 = sld [smem:[%s52]]
  %s54 = scalar_lea.smem %s0, 27
  %s55 = sld [smem:[%s54]]
  %s56 = scalar_lea.smem %s0, 28
  %s57 = sld [smem:[%s56]]
  %s58 = scalar_lea.smem %s0, 29
  %s59 = sld [smem:[%s58]]
  %s60 = scalar_lea.smem %s0, 30
  %s61 = sld [smem:[%s60]]
  %s62 = scalar_lea.smem %s0, 31
  %s63 = sld [smem:[%s62]]
  %64 = xla_tuple %s61, %s63
  %s65 = sld [smem:[#allocation0]]
  $region206: #{_gnn_forward.1} parent=0
    _
  %s67 = ssub.s32 1, %s65
  %s68 = scalar_select 0, %s67, %s65
  $region1: #{_gnn_forward.1} parent=0
    #allocation2 [shape = 'u8[512]{0}', space=vmem, size = 0x400, scoped, tag = 'input window, operand 7, single buffered']
    #allocation3 [shape = 's32[1]{0}', space=sflag, size = 0x4, scoped, tag = 'scoped memory for _gnn_forward.1']
    #allocation4 [shape = 's32[1]{0}', space=sflag, size = 0x4, scoped, tag = 'scoped memory for _gnn_forward.1']
    #allocation5 [shape = 'u8[512]{0}', space=vmem, size = 0x400, scoped, tag = 'input window, operand 8, single buffered']
    #allocation6 [shape = 's32[1]{0}', space=sflag, size = 0x4, scoped, tag = 'scoped memory for _gnn_forward.1']
    #allocation7 [shape = 'u8[1024]{0}', space=vmem, size = 0x400, scoped, tag = 'input window, operand 9, single buffered']
    #allocation8 [shape = 'u8[512]{0}', space=vmem, size = 0x400, scoped, tag = 'input window, operand 10, single buffered']
    #allocation9 [shape = 's32[1]{0}', space=sflag, size = 0x4, scoped, tag = 'scoped memory for _gnn_forward.1']
    #allocation10 [shape = 'u8[512]{0}', space=vmem, size = 0x400, scoped, tag = 'input window, operand 12, single buffered']
    #allocation11 [shape = 'u8[512]{0}', space=vmem, size = 0x400, scoped, tag = 'input window, operand 13, single buffered']
    #allocation12 [shape = 's32[1]{0}', space=sflag, size = 0x4, scoped, tag = 'scoped memory for _gnn_forward.1']
    #allocation13 [shape = 'u8[512]{0}', space=vmem, size = 0x400, scoped, tag = 'input window, operand 14, single buffered']
    #allocation14 [shape = 'u8[2048]{0}', space=vmem, size = 0x800, scoped, tag = 'input window, operand 15, single buffered']
    #allocation15 [shape = 's32[1]{0}', space=sflag, size = 0x4, scoped, tag = 'scoped memory for _gnn_forward.1']
    #allocation16 [shape = 'u8[512]{0}', space=vmem, size = 0x400, scoped, tag = 'input window, operand 16, single buffered']
    #allocation17 [shape = 'u8[512]{0}', space=vmem, size = 0x400, scoped, tag = 'input window, operand 18, single buffered']
    #allocation18 [shape = 's32[1]{0}', space=sflag, size = 0x4, scoped, tag = 'scoped memory for _gnn_forward.1']
    #allocation19 [shape = 'u8[2048]{0}', space=vmem, size = 0x800, scoped, tag = 'input window, operand 20, single buffered']
    #allocation20 [shape = 'u8[2048]{0}', space=vmem, size = 0x800, scoped, tag = 'input window, operand 24, single buffered']
    #allocation21 [shape = 's32[1]{0}', space=sflag, size = 0x4, scoped, tag = 'scoped memory for _gnn_forward.1']
    #allocation22 [shape = 'u8[32768]{0}', space=vmem, size = 0x8000, scoped, tag = 'input window, operand 25, single buffered']
    #allocation23 [shape = 'u8[32768]{0}', space=vmem, size = 0x8000, scoped, tag = 'input window, operand 26, single buffered']
    #allocation24 [shape = 's32[1]{0}', space=sflag, size = 0x4, scoped, tag = 'scoped memory for _gnn_forward.1']
    #allocation25 [shape = 'u8[2048]{0}', space=vmem, size = 0x800, scoped, tag = 'input window, operand 27, single buffered']
    #allocation26 [shape = 'u8[32768]{0}', space=vmem, size = 0x8000, scoped, tag = 'input window, operand 28, single buffered']
    #allocation27 [shape = 's32[1]{0}', space=sflag, size = 0x4, scoped, tag = 'scoped memory for _gnn_forward.1']
    #allocation28 [shape = 'u8[2048]{0}', space=vmem, size = 0x800, scoped, tag = 'input window, operand 29, single buffered']
    #allocation29 [shape = 'u8[8192]{0}', space=vmem, size = 0x2000, scoped, tag = 'output window, operand 0, single buffered']
    #allocation30 [shape = 'u8[8192]{0}', space=vmem, size = 0x2000, scoped, tag = 'output window, operand 1, single buffered']
    #allocation31 [shape = 's32[1]{0}', space=sflag, size = 0x4, scoped, tag = 'scoped memory for _gnn_forward.1']
    %69 = vsyncpa [#allocation3], 0
    %70 = vsyncpa [#allocation6], 0
    %71 = vsyncpa [#allocation9], 0
    %72 = vsyncpa [#allocation12], 0
    %73 = vsyncpa [#allocation15], 0
    %74 = vsyncpa [#allocation18], 0
    %75 = vsyncpa [#allocation21], 0
    %76 = vsyncpa [#allocation24], 0
    %77 = vsyncpa [#allocation27], 0
    %78 = vsyncpa [#allocation4], 0
    %79 = vsyncpa [#allocation31], 0
    // Predicated region
    $region2: #{_gnn_forward.1} parent=1 // pred_check
      _
    $region3: #{_gnn_forward.1} parent=1 // pred_check_branch
      %81 = sbr.rel (0) target = $region5
    $region4: #{_gnn_forward.1} parent=1 // pred_region
      _
    $region5: #{_gnn_forward.1} parent=1 // pred_fallthru
      _
    // Predicated region
    $region6: #{_gnn_forward.1} parent=1 // pred_check
      _
    $region7: #{_gnn_forward.1} parent=1 // pred_check_branch
      %83 = sbr.rel (0) target = $region9
    $region8: #{_gnn_forward.1} parent=1 // pred_region
      _
    $region9: #{_gnn_forward.1} parent=1 // pred_fallthru
      _
    // Predicated region
    $region10: #{_gnn_forward.1} parent=1 // pred_check
      _
    $region11: #{_gnn_forward.1} parent=1 // pred_check_branch
      %85 = sbr.rel (0) target = $region13
    $region12: #{_gnn_forward.1} parent=1 // pred_region
      _
    $region13: #{_gnn_forward.1} parent=1 // pred_fallthru
      _
    // Predicated region
    $region14: #{_gnn_forward.1} parent=1 // pred_check
      _
    $region15: #{_gnn_forward.1} parent=1 // pred_check_branch
      %87 = sbr.rel (0) target = $region17
    $region16: #{_gnn_forward.1} parent=1 // pred_region
      _
    $region17: #{_gnn_forward.1} parent=1 // pred_fallthru
      _
    // Predicated region
    $region18: #{_gnn_forward.1} parent=1 // pred_check
      _
    $region19: #{_gnn_forward.1} parent=1 // pred_check_branch
      %89 = sbr.rel (0) target = $region21
    $region20: #{_gnn_forward.1} parent=1 // pred_region
      _
    $region21: #{_gnn_forward.1} parent=1 // pred_fallthru
      _
    // Predicated region
    $region22: #{_gnn_forward.1} parent=1 // pred_check
      _
    $region23: #{_gnn_forward.1} parent=1 // pred_check_branch
      %91 = sbr.rel (0) target = $region25
    $region24: #{_gnn_forward.1} parent=1 // pred_region
      _
    $region25: #{_gnn_forward.1} parent=1 // pred_fallthru
      _
    // Predicated region
    $region26: #{_gnn_forward.1} parent=1 // pred_check
      _
    $region27: #{_gnn_forward.1} parent=1 // pred_check_branch
      %93 = sbr.rel (0) target = $region29
    $region28: #{_gnn_forward.1} parent=1 // pred_region
      _
    $region29: #{_gnn_forward.1} parent=1 // pred_fallthru
      _
    // Predicated region
    $region30: #{_gnn_forward.1} parent=1 // pred_check
      _
    $region31: #{_gnn_forward.1} parent=1 // pred_check_branch
      %95 = sbr.rel (0) target = $region33
    $region32: #{_gnn_forward.1} parent=1 // pred_region
      %s97 = ssub.s32 16, 16
      %98 = vsyncadd [#allocation3], %s97
      %s100 = sshll.u32 [#allocation2], 4
      %s101 = int_to_ptr.vmem [resolvable:$true] %s100
      %103 = dma.hbm_to_vmem [thread:$0]  %s15, 16, %s101, [#allocation3]
    $region33: #{_gnn_forward.1} parent=1 // pred_fallthru
      _
    // Predicated region
    $region34: #{_gnn_forward.1} parent=1 // pred_check
      _
    $region35: #{_gnn_forward.1} parent=1 // pred_check_branch
      %105 = sbr.rel (0) target = $region37
    $region36: #{_gnn_forward.1} parent=1 // pred_region
      %s107 = ssub.s32 16, 16
      %108 = vsyncadd [#allocation6], %s107
      %s110 = sshll.u32 [#allocation5], 4
      %s111 = int_to_ptr.vmem [resolvable:$true] %s110
      %113 = dma.hbm_to_vmem [thread:$0]  %s17, 16, %s111, [#allocation6]
    $region37: #{_gnn_forward.1} parent=1 // pred_fallthru
      _
    // Predicated region
    $region38: #{_gnn_forward.1} parent=1 // pred_check
      _
    $region39: #{_gnn_forward.1} parent=1 // pred_check_branch
      %115 = sbr.rel (0) target = $region41
    $region40: #{_gnn_forward.1} parent=1 // pred_region
      %s117 = ssub.s32 32, 32
      %118 = vsyncadd [#allocation6], %s117
      %s120 = sshll.u32 [#allocation7], 4
      %s121 = int_to_ptr.vmem [resolvable:$true] %s120
      %123 = dma.hbm_to_vmem [thread:$0]  %s19, 32, %s121, [#allocation6]
    $region41: #{_gnn_forward.1} parent=1 // pred_fallthru
      _
    // Predicated region
    $region42: #{_gnn_forward.1} parent=1 // pred_check
      _
    $region43: #{_gnn_forward.1} parent=1 // pred_check_branch
      %125 = sbr.rel (0) target = $region45
    $region44: #{_gnn_forward.1} parent=1 // pred_region
      %s127 = ssub.s32 16, 16
      %128 = vsyncadd [#allocation9], %s127
      %s130 = sshll.u32 [#allocation8], 4
      %s131 = int_to_ptr.vmem [resolvable:$true] %s130
      %133 = dma.hbm_to_vmem [thread:$0]  %s21, 16, %s131, [#allocation9]
    $region45: #{_gnn_forward.1} parent=1 // pred_fallthru
      _
    // Predicated region
    $region46: #{_gnn_forward.1} parent=1 // pred_check
      _
    $region47: #{_gnn_forward.1} parent=1 // pred_check_branch
      %135 = sbr.rel (0) target = $region49
    $region48: #{_gnn_forward.1} parent=1 // pred_region
      _
    $region49: #{_gnn_forward.1} parent=1 // pred_fallthru
      _
    // Predicated region
    $region50: #{_gnn_forward.1} parent=1 // pred_check
      _
    $region51: #{_gnn_forward.1} parent=1 // pred_check_branch
      %137 = sbr.rel (0) target = $region53
    $region52: #{_gnn_forward.1} parent=1 // pred_region
      %s139 = ssub.s32 16, 16
      %140 = vsyncadd [#allocation9], %s139
      %s142 = sshll.u32 [#allocation10], 4
      %s143 = int_to_ptr.vmem [resolvable:$true] %s142
      %145 = dma.hbm_to_vmem [thread:$0]  %s25, 16, %s143, [#allocation9]
    $region53: #{_gnn_forward.1} parent=1 // pred_fallthru
      _
    // Predicated region
    $region54: #{_gnn_forward.1} parent=1 // pred_check
      _
    $region55: #{_gnn_forward.1} parent=1 // pred_check_branch
      %147 = sbr.rel (0) target = $region57
    $region56: #{_gnn_forward.1} parent=1 // pred_region
      %s149 = ssub.s32 16, 16
      %150 = vsyncadd [#allocation12], %s149
      %s152 = sshll.u32 [#allocation11], 4
      %s153 = int_to_ptr.vmem [resolvable:$true] %s152
      %155 = dma.hbm_to_vmem [thread:$0]  %s27, 16, %s153, [#allocation12]
    $region57: #{_gnn_forward.1} parent=1 // pred_fallthru
      _
    // Predicated region
    $region58: #{_gnn_forward.1} parent=1 // pred_check
      _
    $region59: #{_gnn_forward.1} parent=1 // pred_check_branch
      %157 = sbr.rel (0) target = $region61
    $region60: #{_gnn_forward.1} parent=1 // pred_region
      %s159 = ssub.s32 16, 16
      %160 = vsyncadd [#allocation12], %s159
      %s162 = sshll.u32 [#allocation13], 4
      %s163 = int_to_ptr.vmem [resolvable:$true] %s162
      %165 = dma.hbm_to_vmem [thread:$0]  %s29, 16, %s163, [#allocation12]
    $region61: #{_gnn_forward.1} parent=1 // pred_fallthru
      _
    // Predicated region
    $region62: #{_gnn_forward.1} parent=1 // pred_check
      _
    $region63: #{_gnn_forward.1} parent=1 // pred_check_branch
      %167 = sbr.rel (0) target = $region65
    $region64: #{_gnn_forward.1} parent=1 // pred_region
      %s169 = ssub.s32 64, 64
      %170 = vsyncadd [#allocation15], %s169
      %s172 = sshll.u32 [#allocation14], 4
      %s173 = int_to_ptr.vmem [resolvable:$true] %s172
      %175 = dma.hbm_to_vmem [thread:$0]  %s31, 64, %s173, [#allocation15]
    $region65: #{_gnn_forward.1} parent=1 // pred_fallthru
      _
    // Predicated region
    $region66: #{_gnn_forward.1} parent=1 // pred_check
      _
    $region67: #{_gnn_forward.1} parent=1 // pred_check_branch
      %177 = sbr.rel (0) target = $region69
    $region68: #{_gnn_forward.1} parent=1 // pred_region
      %s179 = ssub.s32 16, 16
      %180 = vsyncadd [#allocation15], %s179
      %s182 = sshll.u32 [#allocation16], 4
      %s183 = int_to_ptr.vmem [resolvable:$true] %s182
      %185 = dma.hbm_to_vmem [thread:$0]  %s33, 16, %s183, [#allocation15]
    $region69: #{_gnn_forward.1} parent=1 // pred_fallthru
      _
    // Predicated region
    $region70: #{_gnn_forward.1} parent=1 // pred_check
      _
    $region71: #{_gnn_forward.1} parent=1 // pred_check_branch
      %187 = sbr.rel (0) target = $region73
    $region72: #{_gnn_forward.1} parent=1 // pred_region
      _
    $region73: #{_gnn_forward.1} parent=1 // pred_fallthru
      _
    // Predicated region
    $region74: #{_gnn_forward.1} parent=1 // pred_check
      _
    $region75: #{_gnn_forward.1} parent=1 // pred_check_branch
      %189 = sbr.rel (0) target = $region77
    $region76: #{_gnn_forward.1} parent=1 // pred_region
      %s191 = ssub.s32 16, 16
      %192 = vsyncadd [#allocation18], %s191
      %s194 = sshll.u32 [#allocation17], 4
      %s195 = int_to_ptr.vmem [resolvable:$true] %s194
      %197 = dma.hbm_to_vmem [thread:$0]  %s37, 16, %s195, [#allocation18]
    $region77: #{_gnn_forward.1} parent=1 // pred_fallthru
      _
    // Predicated region
    $region78: #{_gnn_forward.1} parent=1 // pred_check
      _
    $region79: #{_gnn_forward.1} parent=1 // pred_check_branch
      %199 = sbr.rel (0) target = $region81
    $region80: #{_gnn_forward.1} parent=1 // pred_region
      _
    $region81: #{_gnn_forward.1} parent=1 // pred_fallthru
      _
    // Predicated region
    $region82: #{_gnn_forward.1} parent=1 // pred_check
      _
    $region83: #{_gnn_forward.1} parent=1 // pred_check_branch
      %201 = sbr.rel (0) target = $region85
    $region84: #{_gnn_forward.1} parent=1 // pred_region
      %s203 = ssub.s32 64, 64
      %204 = vsyncadd [#allocation18], %s203
      %s205 = sshll.u32 [#allocation19], 4
      %s206 = int_to_ptr.vmem [resolvable:$true] %s205
      %211 = dma.hbm_to_vmem [thread:$0]  %s41, 64, %s206, [#allocation18], 16, 16, 1
    $region85: #{_gnn_forward.1} parent=1 // pred_fallthru
      _
    // Predicated region
    $region86: #{_gnn_forward.1} parent=1 // pred_check
      _
    $region87: #{_gnn_forward.1} parent=1 // pred_check_branch
      %213 = sbr.rel (0) target = $region89
    $region88: #{_gnn_forward.1} parent=1 // pred_region
      _
    $region89: #{_gnn_forward.1} parent=1 // pred_fallthru
      _
    // Predicated region
    $region90: #{_gnn_forward.1} parent=1 // pred_check
      _
    $region91: #{_gnn_forward.1} parent=1 // pred_check_branch
      %215 = sbr.rel (0) target = $region93
    $region92: #{_gnn_forward.1} parent=1 // pred_region
      _
    $region93: #{_gnn_forward.1} parent=1 // pred_fallthru
      _
    // Predicated region
    $region94: #{_gnn_forward.1} parent=1 // pred_check
      _
    $region95: #{_gnn_forward.1} parent=1 // pred_check_branch
      %217 = sbr.rel (0) target = $region97
    $region96: #{_gnn_forward.1} parent=1 // pred_region
      _
    $region97: #{_gnn_forward.1} parent=1 // pred_fallthru
      _
    // Predicated region
    $region98: #{_gnn_forward.1} parent=1 // pred_check
      _
    $region99: #{_gnn_forward.1} parent=1 // pred_check_branch
      %219 = sbr.rel (0) target = $region101
    $region100: #{_gnn_forward.1} parent=1 // pred_region
      %s221 = ssub.s32 64, 64
      %222 = vsyncadd [#allocation21], %s221
      %s223 = sshll.u32 [#allocation20], 4
      %s224 = int_to_ptr.vmem [resolvable:$true] %s223
      %229 = dma.hbm_to_vmem [thread:$0]  %s49, 64, %s224, [#allocation21], 16, 16, 1
    $region101: #{_gnn_forward.1} parent=1 // pred_fallthru
      _
    // Predicated region
    $region102: #{_gnn_forward.1} parent=1 // pred_check
      _
    $region103: #{_gnn_forward.1} parent=1 // pred_check_branch
      %231 = sbr.rel (0) target = $region105
    $region104: #{_gnn_forward.1} parent=1 // pred_region
      %s233 = ssub.s32 1024, 1024
      %234 = vsyncadd [#allocation21], %s233
      %s235 = sshll.u32 [#allocation22], 4
      %s236 = int_to_ptr.vmem [resolvable:$true] %s235
      %241 = dma.hbm_to_vmem [thread:$0]  %s51, 1024, %s236, [#allocation21], 64, 64, 4
    $region105: #{_gnn_forward.1} parent=1 // pred_fallthru
      _
    // Predicated region
    $region106: #{_gnn_forward.1} parent=1 // pred_check
      _
    $region107: #{_gnn_forward.1} parent=1 // pred_check_branch
      %243 = sbr.rel (0) target = $region109
    $region108: #{_gnn_forward.1} parent=1 // pred_region
      %s245 = ssub.s32 1024, 1024
      %246 = vsyncadd [#allocation24], %s245
      %s247 = sshll.u32 [#allocation23], 4
      %s248 = int_to_ptr.vmem [resolvable:$true] %s247
      %253 = dma.hbm_to_vmem [thread:$0]  %s53, 1024, %s248, [#allocation24], 64, 64, 4
    $region109: #{_gnn_forward.1} parent=1 // pred_fallthru
      _
    // Predicated region
    $region110: #{_gnn_forward.1} parent=1 // pred_check
      _
    $region111: #{_gnn_forward.1} parent=1 // pred_check_branch
      %255 = sbr.rel (0) target = $region113
    $region112: #{_gnn_forward.1} parent=1 // pred_region
      %s257 = ssub.s32 64, 64
      %258 = vsyncadd [#allocation24], %s257
      %s259 = sshll.u32 [#allocation25], 4
      %s260 = int_to_ptr.vmem [resolvable:$true] %s259
      %265 = dma.hbm_to_vmem [thread:$0]  %s55, 64, %s260, [#allocation24], 16, 16, 1
    $region113: #{_gnn_forward.1} parent=1 // pred_fallthru
      _
    // Predicated region
    $region114: #{_gnn_forward.1} parent=1 // pred_check
      _
    $region115: #{_gnn_forward.1} parent=1 // pred_check_branch
      %267 = sbr.rel (0) target = $region117
    $region116: #{_gnn_forward.1} parent=1 // pred_region
      %s269 = ssub.s32 1024, 1024
      %270 = vsyncadd [#allocation27], %s269
      %s271 = sshll.u32 [#allocation26], 4
      %s272 = int_to_ptr.vmem [resolvable:$true] %s271
      %277 = dma.hbm_to_vmem [thread:$0]  %s57, 1024, %s272, [#allocation27], 64, 64, 4
    $region117: #{_gnn_forward.1} parent=1 // pred_fallthru
      _
    // Predicated region
    $region118: #{_gnn_forward.1} parent=1 // pred_check
      _
    $region119: #{_gnn_forward.1} parent=1 // pred_check_branch
      %279 = sbr.rel (0) target = $region121
    $region120: #{_gnn_forward.1} parent=1 // pred_region
      %s281 = ssub.s32 64, 64
      %282 = vsyncadd [#allocation27], %s281
      %s283 = sshll.u32 [#allocation28], 4
      %s284 = int_to_ptr.vmem [resolvable:$true] %s283
      %289 = dma.hbm_to_vmem [thread:$0]  %s59, 64, %s284, [#allocation27], 16, 16, 1
    $region121: #{_gnn_forward.1} parent=1 // pred_fallthru
      _
    // Predicated region
    $region122: #{_gnn_forward.1} parent=1 // pred_check
      _
    $region123: #{_gnn_forward.1} parent=1 // pred_check_branch
      %291 = sbr.rel (0) target = $region125
    $region124: #{_gnn_forward.1} parent=1 // pred_region
      %292 = dma.done [#allocation3], 16
    $region125: #{_gnn_forward.1} parent=1 // pred_fallthru
      _
    // Predicated region
    $region126: #{_gnn_forward.1} parent=1 // pred_check
      _
    $region127: #{_gnn_forward.1} parent=1 // pred_check_branch
      %294 = sbr.rel (0) target = $region129
    $region128: #{_gnn_forward.1} parent=1 // pred_region
      %295 = dma.done [#allocation6], 16
    $region129: #{_gnn_forward.1} parent=1 // pred_fallthru
      _
    // Predicated region
    $region130: #{_gnn_forward.1} parent=1 // pred_check
      _
    $region131: #{_gnn_forward.1} parent=1 // pred_check_branch
      %297 = sbr.rel (0) target = $region133
    $region132: #{_gnn_forward.1} parent=1 // pred_region
      %298 = dma.done [#allocation6], 32
    $region133: #{_gnn_forward.1} parent=1 // pred_fallthru
      _
    // Predicated region
    $region134: #{_gnn_forward.1} parent=1 // pred_check
      _
    $region135: #{_gnn_forward.1} parent=1 // pred_check_branch
      %300 = sbr.rel (0) target = $region137
    $region136: #{_gnn_forward.1} parent=1 // pred_region
      %301 = dma.done [#allocation9], 16
    $region137: #{_gnn_forward.1} parent=1 // pred_fallthru
      _
    // Predicated region
    $region138: #{_gnn_forward.1} parent=1 // pred_check
      _
    $region139: #{_gnn_forward.1} parent=1 // pred_check_branch
      %303 = sbr.rel (0) target = $region141
    $region140: #{_gnn_forward.1} parent=1 // pred_region
      %304 = dma.done [#allocation9], 16
    $region141: #{_gnn_forward.1} parent=1 // pred_fallthru
      _
    // Predicated region
    $region142: #{_gnn_forward.1} parent=1 // pred_check
      _
    $region143: #{_gnn_forward.1} parent=1 // pred_check_branch
      %306 = sbr.rel (0) target = $region145
    $region144: #{_gnn_forward.1} parent=1 // pred_region
      %307 = dma.done [#allocation12], 16
    $region145: #{_gnn_forward.1} parent=1 // pred_fallthru
      _
    // Predicated region
    $region146: #{_gnn_forward.1} parent=1 // pred_check
      _
    $region147: #{_gnn_forward.1} parent=1 // pred_check_branch
      %309 = sbr.rel (0) target = $region149
    $region148: #{_gnn_forward.1} parent=1 // pred_region
      %310 = dma.done [#allocation12], 16
    $region149: #{_gnn_forward.1} parent=1 // pred_fallthru
      _
    // Predicated region
    $region150: #{_gnn_forward.1} parent=1 // pred_check
      _
    $region151: #{_gnn_forward.1} parent=1 // pred_check_branch
      %312 = sbr.rel (0) target = $region153
    $region152: #{_gnn_forward.1} parent=1 // pred_region
      %313 = dma.done [#allocation15], 64
    $region153: #{_gnn_forward.1} parent=1 // pred_fallthru
      _
    // Predicated region
    $region154: #{_gnn_forward.1} parent=1 // pred_check
      _
    $region155: #{_gnn_forward.1} parent=1 // pred_check_branch
      %315 = sbr.rel (0) target = $region157
    $region156: #{_gnn_forward.1} parent=1 // pred_region
      %316 = dma.done [#allocation15], 16
    $region157: #{_gnn_forward.1} parent=1 // pred_fallthru
      _
    // Predicated region
    $region158: #{_gnn_forward.1} parent=1 // pred_check
      _
    $region159: #{_gnn_forward.1} parent=1 // pred_check_branch
      %318 = sbr.rel (0) target = $region161
    $region160: #{_gnn_forward.1} parent=1 // pred_region
      %319 = dma.done [#allocation18], 16
    $region161: #{_gnn_forward.1} parent=1 // pred_fallthru
      _
    // Predicated region
    $region162: #{_gnn_forward.1} parent=1 // pred_check
      _
    $region163: #{_gnn_forward.1} parent=1 // pred_check_branch
      %321 = sbr.rel (0) target = $region165
    $region164: #{_gnn_forward.1} parent=1 // pred_region
      %322 = dma.done [#allocation18], 64
    $region165: #{_gnn_forward.1} parent=1 // pred_fallthru
      _
    // Predicated region
    $region166: #{_gnn_forward.1} parent=1 // pred_check
      _
    $region167: #{_gnn_forward.1} parent=1 // pred_check_branch
      %324 = sbr.rel (0) target = $region169
    $region168: #{_gnn_forward.1} parent=1 // pred_region
      %325 = dma.done [#allocation21], 64
    $region169: #{_gnn_forward.1} parent=1 // pred_fallthru
      _
    // Predicated region
    $region170: #{_gnn_forward.1} parent=1 // pred_check
      _
    $region171: #{_gnn_forward.1} parent=1 // pred_check_branch
      %327 = sbr.rel (0) target = $region173
    $region172: #{_gnn_forward.1} parent=1 // pred_region
      %328 = dma.done [#allocation21], 1024
    $region173: #{_gnn_forward.1} parent=1 // pred_fallthru
      _
    // Predicated region
    $region174: #{_gnn_forward.1} parent=1 // pred_check
      _
    $region175: #{_gnn_forward.1} parent=1 // pred_check_branch
      %330 = sbr.rel (0) target = $region177
    $region176: #{_gnn_forward.1} parent=1 // pred_region
      %331 = dma.done [#allocation24], 1024
    $region177: #{_gnn_forward.1} parent=1 // pred_fallthru
      _
    // Predicated region
    $region178: #{_gnn_forward.1} parent=1 // pred_check
      _
    $region179: #{_gnn_forward.1} parent=1 // pred_check_branch
      %333 = sbr.rel (0) target = $region181
    $region180: #{_gnn_forward.1} parent=1 // pred_region
      %334 = dma.done [#allocation24], 64
    $region181: #{_gnn_forward.1} parent=1 // pred_fallthru
      _
    // Predicated region
    $region182: #{_gnn_forward.1} parent=1 // pred_check
      _
    $region183: #{_gnn_forward.1} parent=1 // pred_check_branch
      %336 = sbr.rel (0) target = $region185
    $region184: #{_gnn_forward.1} parent=1 // pred_region
      %337 = dma.done [#allocation27], 1024
    $region185: #{_gnn_forward.1} parent=1 // pred_fallthru
      _
    // Predicated region
    $region186: #{_gnn_forward.1} parent=1 // pred_check
      _
    $region187: #{_gnn_forward.1} parent=1 // pred_check_branch
      %339 = sbr.rel (0) target = $region189
    $region188: #{_gnn_forward.1} parent=1 // pred_region
      %340 = dma.done [#allocation27], 64
    $region189: #{_gnn_forward.1} parent=1 // pred_fallthru
      _
    %v342 = vld [vmem:[%s5] sm:$0xff]
    %v343 = vld [vmem:[%s5 + $0x8] sm:$0xff]
    %v344 = vld [vmem:[%s5 + $0x10] sm:$0xff]
    %v345 = vld [vmem:[%s5 + $0x18] sm:$0xff]
    %v346 = vld [vmem:[%s5 + $0x20] sm:$0xff]
    %v347 = vld [vmem:[%s5 + $0x28] sm:$0xff]
    %v348 = vld [vmem:[%s7] sm:$0xff]
    %v349 = vld [vmem:[%s7 + $0x8] sm:$0xff]
    %v350 = vld [vmem:[%s7 + $0x10] sm:$0xff]
    %v351 = vld [vmem:[%s7 + $0x18] sm:$0xff]
    %v352 = vld [vmem:[%s7 + $0x20] sm:$0xff]
    %v353 = vld [vmem:[%s7 + $0x28] sm:$0xff]
    %v354 = vld [vmem:[%s9] sm:$0xff]
    %v355 = vld [vmem:[%s9 + $0x8] sm:$0xff]
    %v356 = vld [vmem:[%s9 + $0x10] sm:$0xff]
    %v357 = vld [vmem:[%s9 + $0x18] sm:$0xff]
    %v358 = vld [vmem:[%s9 + $0x20] sm:$0xff]
    %v359 = vld [vmem:[%s9 + $0x28] sm:$0xff]
    %v360 = vld [vmem:[%s11] sm:$0x1]
    %v361 = vld [vmem:[%s13] sm:$0x1]
    %v362 = vlaneseq
    %v363 = vand.u32 %v362, 127
    %364 = vset.pattern.permute.xlu0 0
    %365 = vperm.xlu0 %364, %v348
    %v366 = vpop.permute.xlu0 %365
    %367 = vset.pattern.permute.xlu0 0
    %368 = vperm.xlu0 %367, %v349
    %v369 = vpop.permute.xlu0 %368
    %370 = vset.pattern.permute.xlu0 0
    %371 = vperm.xlu0 %370, %v350
    %v372 = vpop.permute.xlu0 %371
    %373 = vset.pattern.permute.xlu0 0
    %374 = vperm.xlu0 %373, %v351
    %v375 = vpop.permute.xlu0 %374
    %376 = vset.pattern.permute.xlu0 0
    %377 = vperm.xlu0 %376, %v352
    %v378 = vpop.permute.xlu0 %377
    %379 = vset.pattern.permute.xlu0 0
    %380 = vperm.xlu0 %379, %v353
    %v381 = vpop.permute.xlu0 %380
    %vm382 = vcmp.eq.s32.totalorder %v363, %v366
    %vm383 = vcmp.eq.s32.totalorder %v363, %v369
    %vm384 = vcmp.eq.s32.totalorder %v363, %v372
    %vm385 = vcmp.eq.s32.totalorder %v363, %v375
    %vm386 = vcmp.eq.s32.totalorder %v363, %v378
    %vm387 = vcmp.eq.s32.totalorder %v363, %v381
    %v388 = vsel %vm382, 1, 0
    %v389 = vsel %vm383, 1, 0
    %v390 = vsel %vm384, 1, 0
    %v391 = vsel %vm385, 1, 0
    %v392 = vsel %vm386, 1, 0
    %v393 = vsel %vm387, 1, 0
    %v394 = vcvt.s32.f32 %v388
    %v395 = vcvt.s32.f32 %v389
    %v396 = vcvt.s32.f32 %v390
    %v397 = vcvt.s32.f32 %v391
    %v398 = vcvt.s32.f32 %v392
    %v399 = vcvt.s32.f32 %v393
    %v400 = vpack.c.bf16 %v395, %v394
    %v401 = vpack.c.bf16 %v397, %v396
    %v402 = vpack.c.bf16 %v399, %v398
    %403 = vset.pattern.permute.xlu0 0
    %404 = vperm.xlu0 %403, %v354
    %v405 = vpop.permute.xlu0 %404
    %406 = vset.pattern.permute.xlu0 0
    %407 = vperm.xlu0 %406, %v355
    %v408 = vpop.permute.xlu0 %407
    %409 = vset.pattern.permute.xlu0 0
    %410 = vperm.xlu0 %409, %v356
    %v411 = vpop.permute.xlu0 %410
    %412 = vset.pattern.permute.xlu0 0
    %413 = vperm.xlu0 %412, %v357
    %v414 = vpop.permute.xlu0 %413
    %415 = vset.pattern.permute.xlu0 0
    %416 = vperm.xlu0 %415, %v358
    %v417 = vpop.permute.xlu0 %416
    %418 = vset.pattern.permute.xlu0 0
    %419 = vperm.xlu0 %418, %v359
    %v420 = vpop.permute.xlu0 %419
    %vm421 = vcmp.eq.s32.totalorder %v363, %v405
    %vm422 = vcmp.eq.s32.totalorder %v363, %v408
    %vm423 = vcmp.eq.s32.totalorder %v363, %v411
    %vm424 = vcmp.eq.s32.totalorder %v363, %v414
    %vm425 = vcmp.eq.s32.totalorder %v363, %v417
    %vm426 = vcmp.eq.s32.totalorder %v363, %v420
    %v427 = vsel %vm421, 1, 0
    %v428 = vsel %vm422, 1, 0
    %v429 = vsel %vm423, 1, 0
    %v430 = vsel %vm424, 1, 0
    %v431 = vsel %vm425, 1, 0
    %v432 = vsel %vm426, 1, 0
    %v433 = vcvt.s32.f32 %v427
    %v434 = vcvt.s32.f32 %v428
    %v435 = vcvt.s32.f32 %v429
    %v436 = vcvt.s32.f32 %v430
    %v437 = vcvt.s32.f32 %v431
    %v438 = vcvt.s32.f32 %v432
    %v439 = vpack.c.bf16 %v434, %v433
    %v440 = vpack.c.bf16 %v436, %v435
    %v441 = vpack.c.bf16 %v438, %v437
    %v442 = vlaneseq
    %v443 = vshrl.u32 %v442, 7
    %v444 = vadd.s32 %v443, 8
    %v445 = vlaneseq
    %v446 = vshrl.u32 %v445, 7
    %v447 = vsub.s32 0, %v446
    %v448 = vrot.slane %v360, %v447
    %vm449 = vcmp.eq.s32.totalorder %v443, %v448
    %vm450 = vcmp.eq.s32.totalorder %v444, %v448
    %v451 = vsel %vm449, 1, 0
    %v452 = vsel %vm450, 1, 0
    %v453 = vcvt.s32.f32 %v451
    %v454 = vcvt.s32.f32 %v452
    %v455 = vpack.c.bf16 %v454, %v453
    %v456 = vlaneseq
    %v457 = vshrl.u32 %v456, 7
    %v458 = vsub.s32 0, %v457
    %v459 = vrot.slane %v361, %v458
    %vm460 = vcmp.eq.s32.totalorder %v443, %v459
    %vm461 = vcmp.eq.s32.totalorder %v444, %v459
    %v462 = vsel %vm460, 1, 0
    %v463 = vsel %vm461, 1, 0
    %v464 = vcvt.s32.f32 %v462
    %v465 = vcvt.s32.f32 %v463
    %v466 = vpack.c.bf16 %v465, %v464
    %v467 = vld [vmem:[%s1] sm:$0xff]
    %v468 = vld [vmem:[%s1 + $0x8] sm:$0xff]
    %v469 = vld [vmem:[#allocation2] sm:$0x1]
    %v471 = vlaneseq
    %v472 = vshrl.u32 %v471, 7
    %v473 = vsub.s32 0, %v472
    %v474 = vrot.slane %v469, %v473
    %v476 = vadd.f32 %v467, %v474
    %v477 = vadd.f32 %v468, %v474
    %v478 = vld [vmem:[#allocation5] sm:$0x1]
    %v480 = vlaneseq
    %v481 = vshrl.u32 %v480, 7
    %v482 = vsub.s32 0, %v481
    %v483 = vrot.slane %v478, %v482
    %v485 = vmul.f32 %v476, %v483
    %v486 = vmul.f32 %v477, %v483
    %v487 = vld [vmem:[#allocation7] sm:$0x3]
    %v488 = vpack.c.bf16 %v486, %v485
    %v489 = vld [vmem:[#allocation8] sm:$0x1]
    %v491 = vlaneseq
    %v492 = vshrl.u32 %v491, 7
    %v493 = vsub.s32 0, %v492
    %v494 = vrot.slane %v489, %v493
    %vm496 = vcmask 31744
    %v498 = vsel %vm496, %v488, 0
    %vm500 = vcmask 1041408
    %v502 = vsel %vm500, %v487, 0
    %504 = vmatprep.subr.bf16.mxu0 0
    %505 = vmatpush1.bf16.msra.mxu0 0
    %506 = vmatprep.subr.bf16.mxu0 0
    %507 = vmatpush1.bf16.msra.mxu0 0
    %508 = vmatprep.subr.bf16.mxu0 0
    %509 = vmatpush1.bf16.msra.mxu0 0
    %510 = vmatprep.subr.bf16.mxu0 0
    %511 = vmatpush1.bf16.msra.mxu0 0
    %512 = vmatprep.subr.bf16.mxu0 0
    %513 = vmatpush1.bf16.msra.mxu0 0
    %514 = vmatprep.subr.bf16.mxu0 0
    %515 = vmatpush1.bf16.msra.mxu0 0
    %516 = vmatprep.subr.bf16.mxu0 0
    %517 = vmatpush1.bf16.msra.mxu0 0
    %518 = vmatprep.subr.bf16.mxu0 0
    %519 = vmatpush1.bf16.msra.mxu0 %v502
    %520 = vmatprep.subr.bf16.mxu0 0
    %521 = vmatpush2.bf16.msra.mxu0 0
    %522 = vmatprep.subr.bf16.mxu0 0
    %523 = vmatpush2.bf16.msra.mxu0 0
    %524 = vmatprep.subr.bf16.mxu0 0
    %525 = vmatpush2.bf16.msra.mxu0 0
    %526 = vmatprep.subr.bf16.mxu0 0
    %527 = vmatpush2.bf16.msra.mxu0 0
    %528 = vmatprep.subr.bf16.mxu0 0
    %529 = vmatpush2.bf16.msra.mxu0 0
    %530 = vmatprep.subr.bf16.mxu0 0
    %531 = vmatpush2.bf16.msra.mxu0 0
    %532 = vmatprep.subr.bf16.mxu0 0
    %533 = vmatpush2.bf16.msra.mxu0 0
    %534 = vmatprep.subr.bf16.mxu0 0
    %535 = vmatpush2.bf16.msra.mxu0 0
    %536 = vmatprep.mubr.bf16.mxu0 0
    %537 = vmatmul.mubr.bf16.gmra.mxu0 %v498
    %v538 = vpop.f32.mrf.mxu0
    %v539 = vadd.f32 %v494, %v538
    %v540 = vpop.f32.mrf.mxu0
    %v541 = vpop.f32.mrf.mxu0
    %v542 = vadd.f32 %v494, %v541
    %v543 = vpop.f32.mrf.mxu0
    %544 = vdwg.mxu0
    %v545 = vmax.f32 %v539, 0.0
    %v546 = vmax.f32 %v542, 0.0
    %v547 = vld [vmem:[%s23] sm:$0xf]
    %v548 = vld [vmem:[%s23 + $0x4] sm:$0xf]
    %v549 = vld [vmem:[%s23 + $0x8] sm:$0xf]
    %v550 = vld [vmem:[%s23 + $0xc] sm:$0xf]
    %v551 = vpack.c.bf16 %v546, %v545
    %v552 = vld [vmem:[#allocation10] sm:$0x1]
    %v554 = vlaneseq
    %v555 = vshrl.u32 %v554, 7
    %v556 = vsub.s32 0, %v555
    %v557 = vrot.slane %v552, %v556
    %v563 = vunpack.c.l.b16 %v547
    %v564 = vunpack.c.l.b16 %v548
    %v565 = vunpack.c.l.b16 %v549
    %v566 = vunpack.c.l.b16 %v550
    %v567 = vpack.c.b16 %v564, %v563
    %v568 = vpack.c.b16 %v566, %v565
    %vm571 = vcmask 261120
    %v573 = vsel %vm571, %v551, 0
    %575 = vmatprep.subr.bf16.mxu0 0
    %576 = vmatpush1.bf16.msra.mxu0 0
    %577 = vmatprep.subr.bf16.mxu0 0
    %578 = vmatpush1.bf16.msra.mxu0 0
    %579 = vmatprep.subr.bf16.mxu0 0
    %580 = vmatpush1.bf16.msra.mxu0 0
    %581 = vmatprep.subr.bf16.mxu0 0
    %582 = vmatpush1.bf16.msra.mxu0 0
    %583 = vmatprep.subr.bf16.mxu0 0
    %584 = vmatpush1.bf16.msra.mxu0 0
    %585 = vmatprep.subr.bf16.mxu0 0
    %586 = vmatpush1.bf16.msra.mxu0 0
    %587 = vmatprep.subr.bf16.mxu0 0
    %588 = vmatpush1.bf16.msra.mxu0 %v568
    %589 = vmatprep.subr.bf16.mxu0 0
    %590 = vmatpush1.bf16.msra.mxu0 %v567
    %591 = vmatprep.subr.bf16.mxu0 0
    %592 = vmatpush2.bf16.msra.mxu0 0
    %593 = vmatprep.subr.bf16.mxu0 0
    %594 = vmatpush2.bf16.msra.mxu0 0
    %595 = vmatprep.subr.bf16.mxu0 0
    %596 = vmatpush2.bf16.msra.mxu0 0
    %597 = vmatprep.subr.bf16.mxu0 0
    %598 = vmatpush2.bf16.msra.mxu0 0
    %599 = vmatprep.subr.bf16.mxu0 0
    %600 = vmatpush2.bf16.msra.mxu0 0
    %601 = vmatprep.subr.bf16.mxu0 0
    %602 = vmatpush2.bf16.msra.mxu0 0
    %603 = vmatprep.subr.bf16.mxu0 0
    %604 = vmatpush2.bf16.msra.mxu0 0
    %605 = vmatprep.subr.bf16.mxu0 0
    %606 = vmatpush2.bf16.msra.mxu0 0
    %607 = vmatprep.mubr.bf16.mxu0 0
    %608 = vmatmul.mubr.bf16.gmra.mxu0 %v573
    %v609 = vpop.f32.mrf.mxu0
    %v610 = vadd.f32 %v557, %v609
    %v611 = vpop.f32.mrf.mxu0
    %v612 = vpop.f32.mrf.mxu0
    %v613 = vadd.f32 %v557, %v612
    %v614 = vpop.f32.mrf.mxu0
    %615 = vdwg.mxu0
    %v616 = vmax.f32 %v610, 0.0
    %v617 = vmax.f32 %v613, 0.0
    %v618 = vld [vmem:[%s3] sm:$0xff]
    %v619 = vld [vmem:[%s3 + $0x8] sm:$0xff]
    %v620 = vld [vmem:[#allocation11] sm:$0x1]
    %v622 = vlaneseq
    %v623 = vshrl.u32 %v622, 7
    %v624 = vsub.s32 0, %v623
    %v625 = vrot.slane %v620, %v624
    %v627 = vadd.f32 %v618, %v625
    %v628 = vadd.f32 %v619, %v625
    %v629 = vld [vmem:[#allocation13] sm:$0x1]
    %v631 = vlaneseq
    %v632 = vshrl.u32 %v631, 7
    %v633 = vsub.s32 0, %v632
    %v634 = vrot.slane %v629, %v633
    %v636 = vmul.f32 %v627, %v634
    %v637 = vmul.f32 %v628, %v634
    %v638 = vld [vmem:[#allocation14] sm:$0x7]
    %v639 = vpack.c.bf16 %v637, %v636
    %v640 = vld [vmem:[#allocation16] sm:$0x1]
    %v642 = vlaneseq
    %v643 = vshrl.u32 %v642, 7
    %v644 = vsub.s32 0, %v643
    %v645 = vrot.slane %v640, %v644
    %vm647 = vcmask 48128
    %v649 = vsel %vm647, %v639, 0
    %vm651 = vcmask 1042432
    %v653 = vsel %vm651, %v638, 0
    %655 = vmatprep.subr.bf16.mxu0 0
    %656 = vmatpush1.bf16.msra.mxu0 0
    %657 = vmatprep.subr.bf16.mxu0 0
    %658 = vmatpush1.bf16.msra.mxu0 0
    %659 = vmatprep.subr.bf16.mxu0 0
    %660 = vmatpush1.bf16.msra.mxu0 0
    %661 = vmatprep.subr.bf16.mxu0 0
    %662 = vmatpush1.bf16.msra.mxu0 0
    %663 = vmatprep.subr.bf16.mxu0 0
    %664 = vmatpush1.bf16.msra.mxu0 0
    %665 = vmatprep.subr.bf16.mxu0 0
    %666 = vmatpush1.bf16.msra.mxu0 0
    %667 = vmatprep.subr.bf16.mxu0 0
    %668 = vmatpush1.bf16.msra.mxu0 0
    %669 = vmatprep.subr.bf16.mxu0 0
    %670 = vmatpush1.bf16.msra.mxu0 %v653
    %671 = vmatprep.subr.bf16.mxu0 0
    %672 = vmatpush2.bf16.msra.mxu0 0
    %673 = vmatprep.subr.bf16.mxu0 0
    %674 = vmatpush2.bf16.msra.mxu0 0
    %675 = vmatprep.subr.bf16.mxu0 0
    %676 = vmatpush2.bf16.msra.mxu0 0
    %677 = vmatprep.subr.bf16.mxu0 0
    %678 = vmatpush2.bf16.msra.mxu0 0
    %679 = vmatprep.subr.bf16.mxu0 0
    %680 = vmatpush2.bf16.msra.mxu0 0
    %681 = vmatprep.subr.bf16.mxu0 0
    %682 = vmatpush2.bf16.msra.mxu0 0
    %683 = vmatprep.subr.bf16.mxu0 0
    %684 = vmatpush2.bf16.msra.mxu0 0
    %685 = vmatprep.subr.bf16.mxu0 0
    %686 = vmatpush2.bf16.msra.mxu0 0
    %687 = vmatprep.mubr.bf16.mxu0 0
    %688 = vmatmul.mubr.bf16.gmra.mxu0 %v649
    %v689 = vpop.f32.mrf.mxu0
    %v690 = vadd.f32 %v645, %v689
    %v691 = vpop.f32.mrf.mxu0
    %v692 = vpop.f32.mrf.mxu0
    %v693 = vadd.f32 %v645, %v692
    %v694 = vpop.f32.mrf.mxu0
    %695 = vdwg.mxu0
    %v696 = vmax.f32 %v690, 0.0
    %v697 = vmax.f32 %v693, 0.0
    %v698 = vld [vmem:[%s35] sm:$0xf]
    %v699 = vld [vmem:[%s35 + $0x4] sm:$0xf]
    %v700 = vld [vmem:[%s35 + $0x8] sm:$0xf]
    %v701 = vld [vmem:[%s35 + $0xc] sm:$0xf]
    %v702 = vpack.c.bf16 %v697, %v696
    %v703 = vld [vmem:[#allocation17] sm:$0x1]
    %v705 = vlaneseq
    %v706 = vshrl.u32 %v705, 7
    %v707 = vsub.s32 0, %v706
    %v708 = vrot.slane %v703, %v707
    %v714 = vunpack.c.l.b16 %v698
    %v715 = vunpack.c.l.b16 %v699
    %v716 = vunpack.c.l.b16 %v700
    %v717 = vunpack.c.l.b16 %v701
    %v718 = vpack.c.b16 %v715, %v714
    %v719 = vpack.c.b16 %v717, %v716
    %v723 = vsel %vm571, %v702, 0
    %725 = vmatprep.subr.bf16.mxu0 0
    %726 = vmatpush1.bf16.msra.mxu0 0
    %727 = vmatprep.subr.bf16.mxu0 0
    %728 = vmatpush1.bf16.msra.mxu0 0
    %729 = vmatprep.subr.bf16.mxu0 0
    %730 = vmatpush1.bf16.msra.mxu0 0
    %731 = vmatprep.subr.bf16.mxu0 0
    %732 = vmatpush1.bf16.msra.mxu0 0
    %733 = vmatprep.subr.bf16.mxu0 0
    %734 = vmatpush1.bf16.msra.mxu0 0
    %735 = vmatprep.subr.bf16.mxu0 0
    %736 = vmatpush1.bf16.msra.mxu0 0
    %737 = vmatprep.subr.bf16.mxu0 0
    %738 = vmatpush1.bf16.msra.mxu0 %v719
    %739 = vmatprep.subr.bf16.mxu0 0
    %740 = vmatpush1.bf16.msra.mxu0 %v718
    %741 = vmatprep.subr.bf16.mxu0 0
    %742 = vmatpush2.bf16.msra.mxu0 0
    %743 = vmatprep.subr.bf16.mxu0 0
    %744 = vmatpush2.bf16.msra.mxu0 0
    %745 = vmatprep.subr.bf16.mxu0 0
    %746 = vmatpush2.bf16.msra.mxu0 0
    %747 = vmatprep.subr.bf16.mxu0 0
    %748 = vmatpush2.bf16.msra.mxu0 0
    %749 = vmatprep.subr.bf16.mxu0 0
    %750 = vmatpush2.bf16.msra.mxu0 0
    %751 = vmatprep.subr.bf16.mxu0 0
    %752 = vmatpush2.bf16.msra.mxu0 0
    %753 = vmatprep.subr.bf16.mxu0 0
    %754 = vmatpush2.bf16.msra.mxu0 0
    %755 = vmatprep.subr.bf16.mxu0 0
    %756 = vmatpush2.bf16.msra.mxu0 0
    %757 = vmatprep.mubr.bf16.mxu0 0
    %758 = vmatmul.mubr.bf16.gmra.mxu0 %v723
    %v759 = vpop.f32.mrf.mxu0
    %v760 = vadd.f32 %v708, %v759
    %v761 = vpop.f32.mrf.mxu0
    %v762 = vpop.f32.mrf.mxu0
    %v763 = vadd.f32 %v708, %v762
    %v764 = vpop.f32.mrf.mxu0
    %765 = vdwg.mxu0
    %v766 = vmax.f32 %v760, 0.0
    %v767 = vmax.f32 %v763, 0.0
    %v768 = vpack.c.bf16 %v767, %v766
    %v769 = vpack.c.bf16 %v617, %v616
    %v770 = vld [vmem:[%s39] sm:$0xf]
    %v771 = vld [vmem:[%s39 + $0x4] sm:$0xf]
    %v772 = vld [vmem:[%s39 + $0x8] sm:$0xf]
    %v773 = vld [vmem:[%s39 + $0xc] sm:$0xf]
    %v778 = vunpack.c.l.b16 %v770
    %v779 = vunpack.c.l.b16 %v771
    %v780 = vunpack.c.l.b16 %v772
    %v781 = vunpack.c.l.b16 %v773
    %v782 = vpack.c.b16 %v779, %v778
    %v783 = vpack.c.b16 %v781, %v780
    %v787 = vsel %vm571, %v769, 0
    %789 = vmatprep.subr.bf16.mxu0 0
    %790 = vmatpush1.bf16.msra.mxu0 0
    %791 = vmatprep.subr.bf16.mxu0 0
    %792 = vmatpush1.bf16.msra.mxu0 0
    %793 = vmatprep.subr.bf16.mxu0 0
    %794 = vmatpush1.bf16.msra.mxu0 0
    %795 = vmatprep.subr.bf16.mxu0 0
    %796 = vmatpush1.bf16.msra.mxu0 0
    %797 = vmatprep.subr.bf16.mxu0 0
    %798 = vmatpush1.bf16.msra.mxu0 0
    %799 = vmatprep.subr.bf16.mxu0 0
    %800 = vmatpush1.bf16.msra.mxu0 0
    %801 = vmatprep.subr.bf16.mxu0 0
    %802 = vmatpush1.bf16.msra.mxu0 %v783
    %803 = vmatprep.subr.bf16.mxu0 0
    %804 = vmatpush1.bf16.msra.mxu0 %v782
    %805 = vmatprep.subr.bf16.mxu0 0
    %806 = vmatpush2.bf16.msra.mxu0 0
    %807 = vmatprep.subr.bf16.mxu0 0
    %808 = vmatpush2.bf16.msra.mxu0 0
    %809 = vmatprep.subr.bf16.mxu0 0
    %810 = vmatpush2.bf16.msra.mxu0 0
    %811 = vmatprep.subr.bf16.mxu0 0
    %812 = vmatpush2.bf16.msra.mxu0 0
    %813 = vmatprep.subr.bf16.mxu0 0
    %814 = vmatpush2.bf16.msra.mxu0 0
    %815 = vmatprep.subr.bf16.mxu0 0
    %816 = vmatpush2.bf16.msra.mxu0 0
    %817 = vmatprep.subr.bf16.mxu0 0
    %818 = vmatpush2.bf16.msra.mxu0 0
    %819 = vmatprep.subr.bf16.mxu0 0
    %820 = vmatpush2.bf16.msra.mxu0 0
    %821 = vmatprep.mubr.bf16.mxu0 0
    %822 = vmatmul.mubr.bf16.gmra.mxu0 %v787
    %v823 = vpop.f32.mrf.mxu0
    %v824 = vadd.f32 0.0, %v823
    %v825 = vpop.f32.mrf.mxu0
    %v826 = vpop.f32.mrf.mxu0
    %v827 = vadd.f32 0.0, %v826
    %v828 = vpop.f32.mrf.mxu0
    %829 = vdwg.mxu0
    %v830 = vld [vmem:[%s45] sm:$0xf]
    %v831 = vld [vmem:[%s45 + $0x4] sm:$0xf]
    %v832 = vld [vmem:[%s45 + $0x8] sm:$0xf]
    %v833 = vld [vmem:[%s45 + $0xc] sm:$0xf]
    %v838 = vunpack.c.l.b16 %v830
    %v839 = vunpack.c.l.b16 %v831
    %v840 = vunpack.c.l.b16 %v832
    %v841 = vunpack.c.l.b16 %v833
    %v842 = vpack.c.b16 %v839, %v838
    %v843 = vpack.c.b16 %v841, %v840
    %v847 = vsel %vm571, %v768, 0
    %849 = vmatprep.subr.bf16.mxu0 0
    %850 = vmatpush1.bf16.msra.mxu0 0
    %851 = vmatprep.subr.bf16.mxu0 0
    %852 = vmatpush1.bf16.msra.mxu0 0
    %853 = vmatprep.subr.bf16.mxu0 0
    %854 = vmatpush1.bf16.msra.mxu0 0
    %855 = vmatprep.subr.bf16.mxu0 0
    %856 = vmatpush1.bf16.msra.mxu0 0
    %857 = vmatprep.subr.bf16.mxu0 0
    %858 = vmatpush1.bf16.msra.mxu0 0
    %859 = vmatprep.subr.bf16.mxu0 0
    %860 = vmatpush1.bf16.msra.mxu0 0
    %861 = vmatprep.subr.bf16.mxu0 0
    %862 = vmatpush1.bf16.msra.mxu0 %v843
    %863 = vmatprep.subr.bf16.mxu0 0
    %864 = vmatpush1.bf16.msra.mxu0 %v842
    %865 = vmatprep.subr.bf16.mxu0 0
    %866 = vmatpush2.bf16.msra.mxu0 0
    %867 = vmatprep.subr.bf16.mxu0 0
    %868 = vmatpush2.bf16.msra.mxu0 0
    %869 = vmatprep.subr.bf16.mxu0 0
    %870 = vmatpush2.bf16.msra.mxu0 0
    %871 = vmatprep.subr.bf16.mxu0 0
    %872 = vmatpush2.bf16.msra.mxu0 0
    %873 = vmatprep.subr.bf16.mxu0 0
    %874 = vmatpush2.bf16.msra.mxu0 0
    %875 = vmatprep.subr.bf16.mxu0 0
    %876 = vmatpush2.bf16.msra.mxu0 0
    %877 = vmatprep.subr.bf16.mxu0 0
    %878 = vmatpush2.bf16.msra.mxu0 0
    %879 = vmatprep.subr.bf16.mxu0 0
    %880 = vmatpush2.bf16.msra.mxu0 0
    %881 = vmatprep.mubr.bf16.mxu0 0
    %882 = vmatmul.mubr.bf16.gmra.mxu0 %v847
    %v883 = vpop.f32.mrf.mxu0
    %v884 = vadd.f32 0.0, %v883
    %v885 = vpop.f32.mrf.mxu0
    %v886 = vpop.f32.mrf.mxu0
    %v887 = vadd.f32 0.0, %v886
    %v888 = vpop.f32.mrf.mxu0
    %889 = vdwg.mxu0
    %v890 = vpack.c.bf16 %v827, %v824
    %v891 = vpack.c.bf16 %v887, %v884
    %vm892 = vcmask 130048
    %v894 = vsel %vm892, %v439, 0
    %v897 = vsel %vm892, %v440, 0
    %v900 = vsel %vm892, %v441, 0
    %902 = vmatprep.subr.bf16.mxu0 0
    %903 = vmatpush1.bf16.msra.mxu0 0
    %904 = vmatprep.subr.bf16.mxu0 0
    %905 = vmatpush1.bf16.msra.mxu0 0
    %906 = vmatprep.subr.bf16.mxu0 0
    %907 = vmatpush1.bf16.msra.mxu0 0
    %908 = vmatprep.subr.bf16.mxu0 0
    %909 = vmatpush1.bf16.msra.mxu0 0
    %910 = vmatprep.subr.bf16.mxu0 0
    %911 = vmatpush1.bf16.msra.mxu0 0
    %912 = vmatprep.subr.bf16.mxu0 0
    %913 = vmatpush1.bf16.msra.mxu0 0
    %914 = vmatprep.subr.bf16.mxu0 0
    %915 = vmatpush1.bf16.msra.mxu0 0
    %916 = vmatprep.subr.bf16.mxu0 0
    %917 = vmatpush1.bf16.msra.mxu0 %v891
    %918 = vmatprep.subr.bf16.mxu0 0
    %919 = vmatpush2.bf16.msra.mxu0 0
    %920 = vmatprep.subr.bf16.mxu0 0
    %921 = vmatpush2.bf16.msra.mxu0 0
    %922 = vmatprep.subr.bf16.mxu0 0
    %923 = vmatpush2.bf16.msra.mxu0 0
    %924 = vmatprep.subr.bf16.mxu0 0
    %925 = vmatpush2.bf16.msra.mxu0 0
    %926 = vmatprep.subr.bf16.mxu0 0
    %927 = vmatpush2.bf16.msra.mxu0 0
    %928 = vmatprep.subr.bf16.mxu0 0
    %929 = vmatpush2.bf16.msra.mxu0 0
    %930 = vmatprep.subr.bf16.mxu0 0
    %931 = vmatpush2.bf16.msra.mxu0 0
    %932 = vmatprep.subr.bf16.mxu0 0
    %933 = vmatpush2.bf16.msra.mxu0 0
    %934 = vmatprep.mubr.bf16.mxu0 0
    %935 = vmatmul.mubr.bf16.gmra.mxu0 %v894
    %v936 = vpop.f32.mrf.mxu0
    %v937 = vadd.f32 0.0, %v936
    %v938 = vpop.f32.mrf.mxu0
    %v939 = vpop.f32.mrf.mxu0
    %v940 = vadd.f32 0.0, %v939
    %v941 = vpop.f32.mrf.mxu0
    %942 = vmatprep.mubr.bf16.mxu0 0
    %943 = vmatmul.mubr.bf16.gmra.mxu0 %v897
    %v944 = vpop.f32.mrf.mxu0
    %v945 = vadd.f32 0.0, %v944
    %v946 = vpop.f32.mrf.mxu0
    %v947 = vpop.f32.mrf.mxu0
    %v948 = vadd.f32 0.0, %v947
    %v949 = vpop.f32.mrf.mxu0
    %950 = vmatprep.mubr.bf16.mxu0 0
    %951 = vmatmul.mubr.bf16.gmra.mxu0 %v900
    %v952 = vpop.f32.mrf.mxu0
    %v953 = vadd.f32 0.0, %v952
    %v954 = vpop.f32.mrf.mxu0
    %v955 = vpop.f32.mrf.mxu0
    %v956 = vadd.f32 0.0, %v955
    %v957 = vpop.f32.mrf.mxu0
    %958 = vdwg.mxu0
    %v960 = vsel %vm892, %v400, 0
    %v963 = vsel %vm892, %v401, 0
    %v966 = vsel %vm892, %v402, 0
    %968 = vmatprep.subr.bf16.mxu0 0
    %969 = vmatpush1.bf16.msra.mxu0 0
    %970 = vmatprep.subr.bf16.mxu0 0
    %971 = vmatpush1.bf16.msra.mxu0 0
    %972 = vmatprep.subr.bf16.mxu0 0
    %973 = vmatpush1.bf16.msra.mxu0 0
    %974 = vmatprep.subr.bf16.mxu0 0
    %975 = vmatpush1.bf16.msra.mxu0 0
    %976 = vmatprep.subr.bf16.mxu0 0
    %977 = vmatpush1.bf16.msra.mxu0 0
    %978 = vmatprep.subr.bf16.mxu0 0
    %979 = vmatpush1.bf16.msra.mxu0 0
    %980 = vmatprep.subr.bf16.mxu0 0
    %981 = vmatpush1.bf16.msra.mxu0 0
    %982 = vmatprep.subr.bf16.mxu0 0
    %983 = vmatpush1.bf16.msra.mxu0 %v890
    %984 = vmatprep.subr.bf16.mxu0 0
    %985 = vmatpush2.bf16.msra.mxu0 0
    %986 = vmatprep.subr.bf16.mxu0 0
    %987 = vmatpush2.bf16.msra.mxu0 0
    %988 = vmatprep.subr.bf16.mxu0 0
    %989 = vmatpush2.bf16.msra.mxu0 0
    %990 = vmatprep.subr.bf16.mxu0 0
    %991 = vmatpush2.bf16.msra.mxu0 0
    %992 = vmatprep.subr.bf16.mxu0 0
    %993 = vmatpush2.bf16.msra.mxu0 0
    %994 = vmatprep.subr.bf16.mxu0 0
    %995 = vmatpush2.bf16.msra.mxu0 0
    %996 = vmatprep.subr.bf16.mxu0 0
    %997 = vmatpush2.bf16.msra.mxu0 0
    %998 = vmatprep.subr.bf16.mxu0 0
    %999 = vmatpush2.bf16.msra.mxu0 0
    %1000 = vmatprep.mubr.bf16.mxu0 0
    %1001 = vmatmul.mubr.bf16.gmra.mxu0 %v960
    %v1002 = vpop.f32.mrf.mxu0
    %v1003 = vadd.f32 %v937, %v1002
    %v1004 = vpop.f32.mrf.mxu0
    %v1005 = vpop.f32.mrf.mxu0
    %v1006 = vadd.f32 %v940, %v1005
    %v1007 = vpop.f32.mrf.mxu0
    %1008 = vmatprep.mubr.bf16.mxu0 0
    %1009 = vmatmul.mubr.bf16.gmra.mxu0 %v963
    %v1010 = vpop.f32.mrf.mxu0
    %v1011 = vadd.f32 %v945, %v1010
    %v1012 = vpop.f32.mrf.mxu0
    %v1013 = vpop.f32.mrf.mxu0
    %v1014 = vadd.f32 %v948, %v1013
    %v1015 = vpop.f32.mrf.mxu0
    %1016 = vmatprep.mubr.bf16.mxu0 0
    %1017 = vmatmul.mubr.bf16.gmra.mxu0 %v966
    %v1018 = vpop.f32.mrf.mxu0
    %v1019 = vadd.f32 %v953, %v1018
    %v1020 = vpop.f32.mrf.mxu0
    %v1021 = vpop.f32.mrf.mxu0
    %v1022 = vadd.f32 %v956, %v1021
    %v1023 = vpop.f32.mrf.mxu0
    %1024 = vdwg.mxu0
    %v1025 = vld [vmem:[%s43] sm:$0x1]
    %v1026 = vunpack.c.l.bf16 %v1025
    %1028 = vset.pattern.permute.xlu0 0
    %1029 = vperm.xlu0 %1028, %v342
    %v1030 = vpop.permute.xlu0 %1029
    %1033 = vset.pattern.permute.xlu0 0
    %1034 = vperm.xlu0 %1033, %v343
    %v1035 = vpop.permute.xlu0 %1034
    %1038 = vset.pattern.permute.xlu0 0
    %1039 = vperm.xlu0 %1038, %v344
    %v1040 = vpop.permute.xlu0 %1039
    %1043 = vset.pattern.permute.xlu0 0
    %1044 = vperm.xlu0 %1043, %v345
    %v1045 = vpop.permute.xlu0 %1044
    %1048 = vset.pattern.permute.xlu0 0
    %1049 = vperm.xlu0 %1048, %v346
    %v1050 = vpop.permute.xlu0 %1049
    %1053 = vset.pattern.permute.xlu0 0
    %1054 = vperm.xlu0 %1053, %v347
    %v1055 = vpop.permute.xlu0 %1054
    %v1057 = vlaneseq
    %v1058 = vshrl.u32 %v1057, 7
    %v1059 = vsub.s32 0, %v1058
    %v1060 = vrot.slane %v1026, %v1059
    %v1061 = vmul.f32 %v1030, %v1060
    %v1062 = vmul.f32 %v1035, %v1060
    %v1063 = vmul.f32 %v1040, %v1060
    %v1064 = vmul.f32 %v1045, %v1060
    %v1065 = vmul.f32 %v1050, %v1060
    %v1066 = vmul.f32 %v1055, %v1060
    %v1067 = vadd.f32 %v1003, %v1061
    %v1068 = vadd.f32 %v1006, %v1062
    %v1069 = vadd.f32 %v1011, %v1063
    %v1070 = vadd.f32 %v1014, %v1064
    %v1071 = vadd.f32 %v1019, %v1065
    %v1072 = vadd.f32 %v1022, %v1066
    %v1073 = vld [vmem:[#allocation19] sm:$0x1]
    %v1075 = vlaneseq
    %v1076 = vshrl.u32 %v1075, 7
    %v1077 = vsub.s32 0, %v1076
    %v1078 = vrot.slane %v1073, %v1077
    %v1080 = vadd.f32 %v1067, %v1078
    %v1081 = vadd.f32 %v1068, %v1078
    %v1082 = vadd.f32 %v1069, %v1078
    %v1083 = vadd.f32 %v1070, %v1078
    %v1084 = vadd.f32 %v1071, %v1078
    %v1085 = vadd.f32 %v1072, %v1078
    %v1086 = vmax.f32 %v1080, 0.0
    %v1087 = vmax.f32 %v1081, 0.0
    %v1088 = vmax.f32 %v1082, 0.0
    %v1089 = vmax.f32 %v1083, 0.0
    %v1090 = vmax.f32 %v1084, 0.0
    %v1091 = vmax.f32 %v1085, 0.0
    %v1092 = vld [vmem:[%s47] sm:$0xf]
    %v1093 = vld [vmem:[%s47 + $0x4] sm:$0xf]
    %v1094 = vld [vmem:[%s47 + $0x8] sm:$0xf]
    %v1095 = vld [vmem:[%s47 + $0xc] sm:$0xf]
    %v1096 = vpack.c.bf16 %v1087, %v1086
    %v1097 = vpack.c.bf16 %v1089, %v1088
    %v1098 = vpack.c.bf16 %v1091, %v1090
    %v1099 = vld [vmem:[#allocation20] sm:$0x1]
    %v1101 = vlaneseq
    %v1102 = vshrl.u32 %v1101, 7
    %v1103 = vsub.s32 0, %v1102
    %v1104 = vrot.slane %v1099, %v1103
    %v1110 = vunpack.c.l.b16 %v1092
    %v1111 = vunpack.c.l.b16 %v1093
    %v1112 = vunpack.c.l.b16 %v1094
    %v1113 = vunpack.c.l.b16 %v1095
    %v1114 = vpack.c.b16 %v1111, %v1110
    %v1115 = vpack.c.b16 %v1113, %v1112
    %v1119 = vsel %vm571, %v1096, 0
    %v1122 = vsel %vm571, %v1097, 0
    %v1125 = vsel %vm571, %v1098, 0
    %1127 = vmatprep.subr.bf16.mxu0 0
    %1128 = vmatpush1.bf16.msra.mxu0 0
    %1129 = vmatprep.subr.bf16.mxu0 0
    %1130 = vmatpush1.bf16.msra.mxu0 0
    %1131 = vmatprep.subr.bf16.mxu0 0
    %1132 = vmatpush1.bf16.msra.mxu0 0
    %1133 = vmatprep.subr.bf16.mxu0 0
    %1134 = vmatpush1.bf16.msra.mxu0 0
    %1135 = vmatprep.subr.bf16.mxu0 0
    %1136 = vmatpush1.bf16.msra.mxu0 0
    %1137 = vmatprep.subr.bf16.mxu0 0
    %1138 = vmatpush1.bf16.msra.mxu0 0
    %1139 = vmatprep.subr.bf16.mxu0 0
    %1140 = vmatpush1.bf16.msra.mxu0 %v1115
    %1141 = vmatprep.subr.bf16.mxu0 0
    %1142 = vmatpush1.bf16.msra.mxu0 %v1114
    %1143 = vmatprep.subr.bf16.mxu0 0
    %1144 = vmatpush2.bf16.msra.mxu0 0
    %1145 = vmatprep.subr.bf16.mxu0 0
    %1146 = vmatpush2.bf16.msra.mxu0 0
    %1147 = vmatprep.subr.bf16.mxu0 0
    %1148 = vmatpush2.bf16.msra.mxu0 0
    %1149 = vmatprep.subr.bf16.mxu0 0
    %1150 = vmatpush2.bf16.msra.mxu0 0
    %1151 = vmatprep.subr.bf16.mxu0 0
    %1152 = vmatpush2.bf16.msra.mxu0 0
    %1153 = vmatprep.subr.bf16.mxu0 0
    %1154 = vmatpush2.bf16.msra.mxu0 0
    %1155 = vmatprep.subr.bf16.mxu0 0
    %1156 = vmatpush2.bf16.msra.mxu0 0
    %1157 = vmatprep.subr.bf16.mxu0 0
    %1158 = vmatpush2.bf16.msra.mxu0 0
    %1159 = vmatprep.mubr.bf16.mxu0 0
    %1160 = vmatmul.mubr.bf16.gmra.mxu0 %v1119
    %v1161 = vpop.f32.mrf.mxu0
    %v1162 = vadd.f32 %v1104, %v1161
    %v1163 = vpop.f32.mrf.mxu0
    %v1164 = vpop.f32.mrf.mxu0
    %v1165 = vadd.f32 %v1104, %v1164
    %v1166 = vpop.f32.mrf.mxu0
    %1167 = vmatprep.mubr.bf16.mxu0 0
    %1168 = vmatmul.mubr.bf16.gmra.mxu0 %v1122
    %v1169 = vpop.f32.mrf.mxu0
    %v1170 = vadd.f32 %v1104, %v1169
    %v1171 = vpop.f32.mrf.mxu0
    %v1172 = vpop.f32.mrf.mxu0
    %v1173 = vadd.f32 %v1104, %v1172
    %v1174 = vpop.f32.mrf.mxu0
    %1175 = vmatprep.mubr.bf16.mxu0 0
    %1176 = vmatmul.mubr.bf16.gmra.mxu0 %v1125
    %v1177 = vpop.f32.mrf.mxu0
    %v1178 = vadd.f32 %v1104, %v1177
    %v1179 = vpop.f32.mrf.mxu0
    %v1180 = vpop.f32.mrf.mxu0
    %v1181 = vadd.f32 %v1104, %v1180
    %v1182 = vpop.f32.mrf.mxu0
    %1183 = vdwg.mxu0
    %v1184 = vpack.c.bf16 %v1165, %v1162
    %v1185 = vpack.c.bf16 %v1173, %v1170
    %v1186 = vpack.c.bf16 %v1181, %v1178
    %vm1187 = vcmask 392192
    %v1189 = vsel %vm1187, %v455, 0
    %1191 = vmatprep.subr.bf16.mxu0 0
    %1192 = vmatpush1.bf16.msra.mxu0 0
    %1193 = vmatprep.subr.bf16.mxu0 0
    %1194 = vmatpush1.bf16.msra.mxu0 0
    %1195 = vmatprep.subr.bf16.mxu0 0
    %1196 = vmatpush1.bf16.msra.mxu0 0
    %1197 = vmatprep.subr.bf16.mxu0 0
    %1198 = vmatpush1.bf16.msra.mxu0 0
    %1199 = vmatprep.subr.bf16.mxu0 0
    %1200 = vmatpush1.bf16.msra.mxu0 0
    %1201 = vmatprep.subr.bf16.mxu0 0
    %1202 = vmatpush1.bf16.msra.mxu0 %v1186
    %1203 = vmatprep.subr.bf16.mxu0 0
    %1204 = vmatpush1.bf16.msra.mxu0 %v1185
    %1205 = vmatprep.subr.bf16.mxu0 0
    %1206 = vmatpush1.bf16.msra.mxu0 %v1184
    %1207 = vmatprep.subr.bf16.mxu0 0
    %1208 = vmatpush2.bf16.msra.mxu0 0
    %1209 = vmatprep.subr.bf16.mxu0 0
    %1210 = vmatpush2.bf16.msra.mxu0 0
    %1211 = vmatprep.subr.bf16.mxu0 0
    %1212 = vmatpush2.bf16.msra.mxu0 0
    %1213 = vmatprep.subr.bf16.mxu0 0
    %1214 = vmatpush2.bf16.msra.mxu0 0
    %1215 = vmatprep.subr.bf16.mxu0 0
    %1216 = vmatpush2.bf16.msra.mxu0 0
    %1217 = vmatprep.subr.bf16.mxu0 0
    %1218 = vmatpush2.bf16.msra.mxu0 0
    %1219 = vmatprep.subr.bf16.mxu0 0
    %1220 = vmatpush2.bf16.msra.mxu0 0
    %1221 = vmatprep.subr.bf16.mxu0 0
    %1222 = vmatpush2.bf16.msra.mxu0 0
    %1223 = vmatprep.mubr.bf16.mxu0 0
    %1224 = vmatmul.mubr.bf16.gmra.mxu0 %v1189
    %v1225 = vpop.f32.mrf.mxu0
    %v1226 = vadd.f32 0.0, %v1225
    %v1227 = vpop.f32.mrf.mxu0
    %v1228 = vpop.f32.mrf.mxu0
    %v1229 = vadd.f32 0.0, %v1228
    %v1230 = vpop.f32.mrf.mxu0
    %1231 = vdwg.mxu0
    %v1232 = vld [vmem:[#allocation22] sm:$0xf]
    %v1233 = vld [vmem:[#allocation22 + $0x4] sm:$0xf]
    %v1234 = vld [vmem:[#allocation22 + $0x8] sm:$0xf]
    %v1235 = vld [vmem:[#allocation22 + $0xc] sm:$0xf]
    %v1236 = vpack.c.bf16 %v1229, %v1226
    %v1237 = vld [vmem:[#allocation23] sm:$0xf]
    %v1238 = vld [vmem:[#allocation23 + $0x4] sm:$0xf]
    %v1239 = vld [vmem:[#allocation23 + $0x8] sm:$0xf]
    %v1240 = vld [vmem:[#allocation23 + $0xc] sm:$0xf]
    %v1245 = vunpack.c.l.b16 %v1237
    %v1246 = vunpack.c.l.b16 %v1238
    %v1247 = vunpack.c.l.b16 %v1239
    %v1248 = vunpack.c.l.b16 %v1240
    %v1249 = vpack.c.b16 %v1246, %v1245
    %v1250 = vpack.c.b16 %v1248, %v1247
    %1253 = vmatprep.subr.bf16.mxu0 0
    %1254 = vmatpush1.bf16.msra.mxu0 0
    %1255 = vmatprep.subr.bf16.mxu0 0
    %1256 = vmatpush1.bf16.msra.mxu0 0
    %1257 = vmatprep.subr.bf16.mxu0 0
    %1258 = vmatpush1.bf16.msra.mxu0 0
    %1259 = vmatprep.subr.bf16.mxu0 0
    %1260 = vmatpush1.bf16.msra.mxu0 0
    %1261 = vmatprep.subr.bf16.mxu0 0
    %1262 = vmatpush1.bf16.msra.mxu0 0
    %1263 = vmatprep.subr.bf16.mxu0 0
    %1264 = vmatpush1.bf16.msra.mxu0 0
    %1265 = vmatprep.subr.bf16.mxu0 0
    %1266 = vmatpush1.bf16.msra.mxu0 %v1250
    %1267 = vmatprep.subr.bf16.mxu0 0
    %1268 = vmatpush1.bf16.msra.mxu0 %v1249
    %1269 = vmatprep.subr.bf16.mxu0 0
    %1270 = vmatpush2.bf16.msra.mxu0 0
    %1271 = vmatprep.subr.bf16.mxu0 0
    %1272 = vmatpush2.bf16.msra.mxu0 0
    %1273 = vmatprep.subr.bf16.mxu0 0
    %1274 = vmatpush2.bf16.msra.mxu0 0
    %1275 = vmatprep.subr.bf16.mxu0 0
    %1276 = vmatpush2.bf16.msra.mxu0 0
    %1277 = vmatprep.subr.bf16.mxu0 0
    %1278 = vmatpush2.bf16.msra.mxu0 0
    %1279 = vmatprep.subr.bf16.mxu0 0
    %1280 = vmatpush2.bf16.msra.mxu0 0
    %1281 = vmatprep.subr.bf16.mxu0 0
    %1282 = vmatpush2.bf16.msra.mxu0 0
    %1283 = vmatprep.subr.bf16.mxu0 0
    %1284 = vmatpush2.bf16.msra.mxu0 0
    %1285 = vmatprep.mubr.bf16.mxu0 0
    %1286 = vmatmul.mubr.bf16.gmra.mxu0 %v787
    %v1287 = vpop.f32.mrf.mxu0
    %v1288 = vadd.f32 0.0, %v1287
    %v1289 = vpop.f32.mrf.mxu0
    %v1290 = vpop.f32.mrf.mxu0
    %v1291 = vadd.f32 0.0, %v1290
    %v1292 = vpop.f32.mrf.mxu0
    %1293 = vdwg.mxu0
    %v1298 = vunpack.c.l.b16 %v1232
    %v1299 = vunpack.c.l.b16 %v1233
    %v1300 = vunpack.c.l.b16 %v1234
    %v1301 = vunpack.c.l.b16 %v1235
    %v1302 = vpack.c.b16 %v1299, %v1298
    %v1303 = vpack.c.b16 %v1301, %v1300
    %v1307 = vsel %vm571, %v1236, 0
    %1309 = vmatprep.subr.bf16.mxu0 0
    %1310 = vmatpush1.bf16.msra.mxu0 0
    %1311 = vmatprep.subr.bf16.mxu0 0
    %1312 = vmatpush1.bf16.msra.mxu0 0
    %1313 = vmatprep.subr.bf16.mxu0 0
    %1314 = vmatpush1.bf16.msra.mxu0 0
    %1315 = vmatprep.subr.bf16.mxu0 0
    %1316 = vmatpush1.bf16.msra.mxu0 0
    %1317 = vmatprep.subr.bf16.mxu0 0
    %1318 = vmatpush1.bf16.msra.mxu0 0
    %1319 = vmatprep.subr.bf16.mxu0 0
    %1320 = vmatpush1.bf16.msra.mxu0 0
    %1321 = vmatprep.subr.bf16.mxu0 0
    %1322 = vmatpush1.bf16.msra.mxu0 %v1303
    %1323 = vmatprep.subr.bf16.mxu0 0
    %1324 = vmatpush1.bf16.msra.mxu0 %v1302
    %1325 = vmatprep.subr.bf16.mxu0 0
    %1326 = vmatpush2.bf16.msra.mxu0 0
    %1327 = vmatprep.subr.bf16.mxu0 0
    %1328 = vmatpush2.bf16.msra.mxu0 0
    %1329 = vmatprep.subr.bf16.mxu0 0
    %1330 = vmatpush2.bf16.msra.mxu0 0
    %1331 = vmatprep.subr.bf16.mxu0 0
    %1332 = vmatpush2.bf16.msra.mxu0 0
    %1333 = vmatprep.subr.bf16.mxu0 0
    %1334 = vmatpush2.bf16.msra.mxu0 0
    %1335 = vmatprep.subr.bf16.mxu0 0
    %1336 = vmatpush2.bf16.msra.mxu0 0
    %1337 = vmatprep.subr.bf16.mxu0 0
    %1338 = vmatpush2.bf16.msra.mxu0 0
    %1339 = vmatprep.subr.bf16.mxu0 0
    %1340 = vmatpush2.bf16.msra.mxu0 0
    %1341 = vmatprep.mubr.bf16.mxu0 0
    %1342 = vmatmul.mubr.bf16.gmra.mxu0 %v1307
    %v1343 = vpop.f32.mrf.mxu0
    %v1344 = vadd.f32 %v1288, %v1343
    %v1345 = vpop.f32.mrf.mxu0
    %v1346 = vpop.f32.mrf.mxu0
    %v1347 = vadd.f32 %v1291, %v1346
    %v1348 = vpop.f32.mrf.mxu0
    %1349 = vdwg.mxu0
    %v1350 = vld [vmem:[#allocation25] sm:$0x1]
    %v1352 = vlaneseq
    %v1353 = vshrl.u32 %v1352, 7
    %v1354 = vsub.s32 0, %v1353
    %v1355 = vrot.slane %v1350, %v1354
    %v1357 = vadd.f32 %v1344, %v1355
    %v1358 = vadd.f32 %v1347, %v1355
    %v1359 = vmax.f32 %v1357, 0.0
    %v1360 = vmax.f32 %v1358, 0.0
    %v1361 = vld [vmem:[#allocation26] sm:$0xf]
    %v1362 = vld [vmem:[#allocation26 + $0x4] sm:$0xf]
    %v1363 = vld [vmem:[#allocation26 + $0x8] sm:$0xf]
    %v1364 = vld [vmem:[#allocation26 + $0xc] sm:$0xf]
    %v1365 = vpack.c.bf16 %v1360, %v1359
    %v1366 = vld [vmem:[#allocation28] sm:$0x1]
    %v1368 = vlaneseq
    %v1369 = vshrl.u32 %v1368, 7
    %v1370 = vsub.s32 0, %v1369
    %v1371 = vrot.slane %v1366, %v1370
    %v1377 = vunpack.c.l.b16 %v1361
    %v1378 = vunpack.c.l.b16 %v1362
    %v1379 = vunpack.c.l.b16 %v1363
    %v1380 = vunpack.c.l.b16 %v1364
    %v1381 = vpack.c.b16 %v1378, %v1377
    %v1382 = vpack.c.b16 %v1380, %v1379
    %v1386 = vsel %vm571, %v1365, 0
    %1388 = vmatprep.subr.bf16.mxu0 0
    %1389 = vmatpush1.bf16.msra.mxu0 0
    %1390 = vmatprep.subr.bf16.mxu0 0
    %1391 = vmatpush1.bf16.msra.mxu0 0
    %1392 = vmatprep.subr.bf16.mxu0 0
    %1393 = vmatpush1.bf16.msra.mxu0 0
    %1394 = vmatprep.subr.bf16.mxu0 0
    %1395 = vmatpush1.bf16.msra.mxu0 0
    %1396 = vmatprep.subr.bf16.mxu0 0
    %1397 = vmatpush1.bf16.msra.mxu0 0
    %1398 = vmatprep.subr.bf16.mxu0 0
    %1399 = vmatpush1.bf16.msra.mxu0 0
    %1400 = vmatprep.subr.bf16.mxu0 0
    %1401 = vmatpush1.bf16.msra.mxu0 %v1382
    %1402 = vmatprep.subr.bf16.mxu0 0
    %1403 = vmatpush1.bf16.msra.mxu0 %v1381
    %1404 = vmatprep.subr.bf16.mxu0 0
    %1405 = vmatpush2.bf16.msra.mxu0 0
    %1406 = vmatprep.subr.bf16.mxu0 0
    %1407 = vmatpush2.bf16.msra.mxu0 0
    %1408 = vmatprep.subr.bf16.mxu0 0
    %1409 = vmatpush2.bf16.msra.mxu0 0
    %1410 = vmatprep.subr.bf16.mxu0 0
    %1411 = vmatpush2.bf16.msra.mxu0 0
    %1412 = vmatprep.subr.bf16.mxu0 0
    %1413 = vmatpush2.bf16.msra.mxu0 0
    %1414 = vmatprep.subr.bf16.mxu0 0
    %1415 = vmatpush2.bf16.msra.mxu0 0
    %1416 = vmatprep.subr.bf16.mxu0 0
    %1417 = vmatpush2.bf16.msra.mxu0 0
    %1418 = vmatprep.subr.bf16.mxu0 0
    %1419 = vmatpush2.bf16.msra.mxu0 0
    %1420 = vmatprep.mubr.bf16.mxu0 0
    %1421 = vmatmul.mubr.bf16.gmra.mxu0 %v1386
    %v1422 = vpop.f32.mrf.mxu0
    %v1423 = vadd.f32 %v1371, %v1422
    %v1424 = vpop.f32.mrf.mxu0
    %v1425 = vpop.f32.mrf.mxu0
    %v1426 = vadd.f32 %v1371, %v1425
    %v1427 = vpop.f32.mrf.mxu0
    %1428 = vdwg.mxu0
    %v1429 = vpack.c.bf16 %v1426, %v1423
    %s1430 = scalar_lea.vmem %s39, 16
    %v1431 = vld [vmem:[%s1430] sm:$0xf]
    %v1432 = vld [vmem:[%s1430 + $0x4] sm:$0xf]
    %v1433 = vld [vmem:[%s1430 + $0x8] sm:$0xf]
    %v1434 = vld [vmem:[%s1430 + $0xc] sm:$0xf]
    %v1439 = vunpack.c.l.b16 %v1431
    %v1440 = vunpack.c.l.b16 %v1432
    %v1441 = vunpack.c.l.b16 %v1433
    %v1442 = vunpack.c.l.b16 %v1434
    %v1443 = vpack.c.b16 %v1440, %v1439
    %v1444 = vpack.c.b16 %v1442, %v1441
    %v1448 = vsel %vm571, %v1429, 0
    %1450 = vmatprep.subr.bf16.mxu0 0
    %1451 = vmatpush1.bf16.msra.mxu0 0
    %1452 = vmatprep.subr.bf16.mxu0 0
    %1453 = vmatpush1.bf16.msra.mxu0 0
    %1454 = vmatprep.subr.bf16.mxu0 0
    %1455 = vmatpush1.bf16.msra.mxu0 0
    %1456 = vmatprep.subr.bf16.mxu0 0
    %1457 = vmatpush1.bf16.msra.mxu0 0
    %1458 = vmatprep.subr.bf16.mxu0 0
    %1459 = vmatpush1.bf16.msra.mxu0 0
    %1460 = vmatprep.subr.bf16.mxu0 0
    %1461 = vmatpush1.bf16.msra.mxu0 0
    %1462 = vmatprep.subr.bf16.mxu0 0
    %1463 = vmatpush1.bf16.msra.mxu0 %v1444
    %1464 = vmatprep.subr.bf16.mxu0 0
    %1465 = vmatpush1.bf16.msra.mxu0 %v1443
    %1466 = vmatprep.subr.bf16.mxu0 0
    %1467 = vmatpush2.bf16.msra.mxu0 0
    %1468 = vmatprep.subr.bf16.mxu0 0
    %1469 = vmatpush2.bf16.msra.mxu0 0
    %1470 = vmatprep.subr.bf16.mxu0 0
    %1471 = vmatpush2.bf16.msra.mxu0 0
    %1472 = vmatprep.subr.bf16.mxu0 0
    %1473 = vmatpush2.bf16.msra.mxu0 0
    %1474 = vmatprep.subr.bf16.mxu0 0
    %1475 = vmatpush2.bf16.msra.mxu0 0
    %1476 = vmatprep.subr.bf16.mxu0 0
    %1477 = vmatpush2.bf16.msra.mxu0 0
    %1478 = vmatprep.subr.bf16.mxu0 0
    %1479 = vmatpush2.bf16.msra.mxu0 0
    %1480 = vmatprep.subr.bf16.mxu0 0
    %1481 = vmatpush2.bf16.msra.mxu0 0
    %1482 = vmatprep.mubr.bf16.mxu0 0
    %1483 = vmatmul.mubr.bf16.gmra.mxu0 %v1448
    %v1484 = vpop.f32.mrf.mxu0
    %v1485 = vadd.f32 0.0, %v1484
    %v1486 = vpop.f32.mrf.mxu0
    %v1487 = vpop.f32.mrf.mxu0
    %v1488 = vadd.f32 0.0, %v1487
    %v1489 = vpop.f32.mrf.mxu0
    %1490 = vdwg.mxu0
    %s1491 = scalar_lea.vmem %s45, 16
    %v1492 = vld [vmem:[%s1491] sm:$0xf]
    %v1493 = vld [vmem:[%s1491 + $0x4] sm:$0xf]
    %v1494 = vld [vmem:[%s1491 + $0x8] sm:$0xf]
    %v1495 = vld [vmem:[%s1491 + $0xc] sm:$0xf]
    %v1500 = vunpack.c.l.b16 %v1492
    %v1501 = vunpack.c.l.b16 %v1493
    %v1502 = vunpack.c.l.b16 %v1494
    %v1503 = vunpack.c.l.b16 %v1495
    %v1504 = vpack.c.b16 %v1501, %v1500
    %v1505 = vpack.c.b16 %v1503, %v1502
    %1508 = vmatprep.subr.bf16.mxu0 0
    %1509 = vmatpush1.bf16.msra.mxu0 0
    %1510 = vmatprep.subr.bf16.mxu0 0
    %1511 = vmatpush1.bf16.msra.mxu0 0
    %1512 = vmatprep.subr.bf16.mxu0 0
    %1513 = vmatpush1.bf16.msra.mxu0 0
    %1514 = vmatprep.subr.bf16.mxu0 0
    %1515 = vmatpush1.bf16.msra.mxu0 0
    %1516 = vmatprep.subr.bf16.mxu0 0
    %1517 = vmatpush1.bf16.msra.mxu0 0
    %1518 = vmatprep.subr.bf16.mxu0 0
    %1519 = vmatpush1.bf16.msra.mxu0 0
    %1520 = vmatprep.subr.bf16.mxu0 0
    %1521 = vmatpush1.bf16.msra.mxu0 %v1505
    %1522 = vmatprep.subr.bf16.mxu0 0
    %1523 = vmatpush1.bf16.msra.mxu0 %v1504
    %1524 = vmatprep.subr.bf16.mxu0 0
    %1525 = vmatpush2.bf16.msra.mxu0 0
    %1526 = vmatprep.subr.bf16.mxu0 0
    %1527 = vmatpush2.bf16.msra.mxu0 0
    %1528 = vmatprep.subr.bf16.mxu0 0
    %1529 = vmatpush2.bf16.msra.mxu0 0
    %1530 = vmatprep.subr.bf16.mxu0 0
    %1531 = vmatpush2.bf16.msra.mxu0 0
    %1532 = vmatprep.subr.bf16.mxu0 0
    %1533 = vmatpush2.bf16.msra.mxu0 0
    %1534 = vmatprep.subr.bf16.mxu0 0
    %1535 = vmatpush2.bf16.msra.mxu0 0
    %1536 = vmatprep.subr.bf16.mxu0 0
    %1537 = vmatpush2.bf16.msra.mxu0 0
    %1538 = vmatprep.subr.bf16.mxu0 0
    %1539 = vmatpush2.bf16.msra.mxu0 0
    %1540 = vmatprep.mubr.bf16.mxu0 0
    %1541 = vmatmul.mubr.bf16.gmra.mxu0 %v787
    %v1542 = vpop.f32.mrf.mxu0
    %v1543 = vadd.f32 0.0, %v1542
    %v1544 = vpop.f32.mrf.mxu0
    %v1545 = vpop.f32.mrf.mxu0
    %v1546 = vadd.f32 0.0, %v1545
    %v1547 = vpop.f32.mrf.mxu0
    %1548 = vdwg.mxu0
    %v1549 = vpack.c.bf16 %v1488, %v1485
    %v1550 = vpack.c.bf16 %v1546, %v1543
    %1551 = vmatprep.subr.bf16.mxu0 0
    %1552 = vmatpush1.bf16.msra.mxu0 0
    %1553 = vmatprep.subr.bf16.mxu0 0
    %1554 = vmatpush1.bf16.msra.mxu0 0
    %1555 = vmatprep.subr.bf16.mxu0 0
    %1556 = vmatpush1.bf16.msra.mxu0 0
    %1557 = vmatprep.subr.bf16.mxu0 0
    %1558 = vmatpush1.bf16.msra.mxu0 0
    %1559 = vmatprep.subr.bf16.mxu0 0
    %1560 = vmatpush1.bf16.msra.mxu0 0
    %1561 = vmatprep.subr.bf16.mxu0 0
    %1562 = vmatpush1.bf16.msra.mxu0 0
    %1563 = vmatprep.subr.bf16.mxu0 0
    %1564 = vmatpush1.bf16.msra.mxu0 0
    %1565 = vmatprep.subr.bf16.mxu0 0
    %1566 = vmatpush1.bf16.msra.mxu0 %v1550
    %1567 = vmatprep.subr.bf16.mxu0 0
    %1568 = vmatpush2.bf16.msra.mxu0 0
    %1569 = vmatprep.subr.bf16.mxu0 0
    %1570 = vmatpush2.bf16.msra.mxu0 0
    %1571 = vmatprep.subr.bf16.mxu0 0
    %1572 = vmatpush2.bf16.msra.mxu0 0
    %1573 = vmatprep.subr.bf16.mxu0 0
    %1574 = vmatpush2.bf16.msra.mxu0 0
    %1575 = vmatprep.subr.bf16.mxu0 0
    %1576 = vmatpush2.bf16.msra.mxu0 0
    %1577 = vmatprep.subr.bf16.mxu0 0
    %1578 = vmatpush2.bf16.msra.mxu0 0
    %1579 = vmatprep.subr.bf16.mxu0 0
    %1580 = vmatpush2.bf16.msra.mxu0 0
    %1581 = vmatprep.subr.bf16.mxu0 0
    %1582 = vmatpush2.bf16.msra.mxu0 0
    %1583 = vmatprep.mubr.bf16.mxu0 0
    %1584 = vmatmul.mubr.bf16.gmra.mxu0 %v960
    %v1585 = vpop.f32.mrf.mxu0
    %v1586 = vadd.f32 0.0, %v1585
    %v1587 = vpop.f32.mrf.mxu0
    %v1588 = vpop.f32.mrf.mxu0
    %v1589 = vadd.f32 0.0, %v1588
    %v1590 = vpop.f32.mrf.mxu0
    %1591 = vmatprep.mubr.bf16.mxu0 0
    %1592 = vmatmul.mubr.bf16.gmra.mxu0 %v963
    %v1593 = vpop.f32.mrf.mxu0
    %v1594 = vadd.f32 0.0, %v1593
    %v1595 = vpop.f32.mrf.mxu0
    %v1596 = vpop.f32.mrf.mxu0
    %v1597 = vadd.f32 0.0, %v1596
    %v1598 = vpop.f32.mrf.mxu0
    %1599 = vmatprep.mubr.bf16.mxu0 0
    %1600 = vmatmul.mubr.bf16.gmra.mxu0 %v966
    %v1601 = vpop.f32.mrf.mxu0
    %v1602 = vadd.f32 0.0, %v1601
    %v1603 = vpop.f32.mrf.mxu0
    %v1604 = vpop.f32.mrf.mxu0
    %v1605 = vadd.f32 0.0, %v1604
    %v1606 = vpop.f32.mrf.mxu0
    %1607 = vdwg.mxu0
    %1608 = vmatprep.subr.bf16.mxu0 0
    %1609 = vmatpush1.bf16.msra.mxu0 0
    %1610 = vmatprep.subr.bf16.mxu0 0
    %1611 = vmatpush1.bf16.msra.mxu0 0
    %1612 = vmatprep.subr.bf16.mxu0 0
    %1613 = vmatpush1.bf16.msra.mxu0 0
    %1614 = vmatprep.subr.bf16.mxu0 0
    %1615 = vmatpush1.bf16.msra.mxu0 0
    %1616 = vmatprep.subr.bf16.mxu0 0
    %1617 = vmatpush1.bf16.msra.mxu0 0
    %1618 = vmatprep.subr.bf16.mxu0 0
    %1619 = vmatpush1.bf16.msra.mxu0 0
    %1620 = vmatprep.subr.bf16.mxu0 0
    %1621 = vmatpush1.bf16.msra.mxu0 0
    %1622 = vmatprep.subr.bf16.mxu0 0
    %1623 = vmatpush1.bf16.msra.mxu0 %v1549
    %1624 = vmatprep.subr.bf16.mxu0 0
    %1625 = vmatpush2.bf16.msra.mxu0 0
    %1626 = vmatprep.subr.bf16.mxu0 0
    %1627 = vmatpush2.bf16.msra.mxu0 0
    %1628 = vmatprep.subr.bf16.mxu0 0
    %1629 = vmatpush2.bf16.msra.mxu0 0
    %1630 = vmatprep.subr.bf16.mxu0 0
    %1631 = vmatpush2.bf16.msra.mxu0 0
    %1632 = vmatprep.subr.bf16.mxu0 0
    %1633 = vmatpush2.bf16.msra.mxu0 0
    %1634 = vmatprep.subr.bf16.mxu0 0
    %1635 = vmatpush2.bf16.msra.mxu0 0
    %1636 = vmatprep.subr.bf16.mxu0 0
    %1637 = vmatpush2.bf16.msra.mxu0 0
    %1638 = vmatprep.subr.bf16.mxu0 0
    %1639 = vmatpush2.bf16.msra.mxu0 0
    %1640 = vmatprep.mubr.bf16.mxu0 0
    %1641 = vmatmul.mubr.bf16.gmra.mxu0 %v894
    %v1642 = vpop.f32.mrf.mxu0
    %v1643 = vadd.f32 %v1586, %v1642
    %v1644 = vpop.f32.mrf.mxu0
    %v1645 = vpop.f32.mrf.mxu0
    %v1646 = vadd.f32 %v1589, %v1645
    %v1647 = vpop.f32.mrf.mxu0
    %1648 = vmatprep.mubr.bf16.mxu0 0
    %1649 = vmatmul.mubr.bf16.gmra.mxu0 %v897
    %v1650 = vpop.f32.mrf.mxu0
    %v1651 = vadd.f32 %v1594, %v1650
    %v1652 = vpop.f32.mrf.mxu0
    %v1653 = vpop.f32.mrf.mxu0
    %v1654 = vadd.f32 %v1597, %v1653
    %v1655 = vpop.f32.mrf.mxu0
    %1656 = vmatprep.mubr.bf16.mxu0 0
    %1657 = vmatmul.mubr.bf16.gmra.mxu0 %v900
    %v1658 = vpop.f32.mrf.mxu0
    %v1659 = vadd.f32 %v1602, %v1658
    %v1660 = vpop.f32.mrf.mxu0
    %v1661 = vpop.f32.mrf.mxu0
    %v1662 = vadd.f32 %v1605, %v1661
    %v1663 = vpop.f32.mrf.mxu0
    %1664 = vdwg.mxu0
    %s1665 = scalar_lea.vmem %s43, 1
    %v1666 = vld [vmem:[%s1665] sm:$0x1]
    %v1667 = vunpack.c.l.bf16 %v1666
    %v1668 = vlaneseq
    %v1669 = vshrl.u32 %v1668, 7
    %v1670 = vsub.s32 0, %v1669
    %v1671 = vrot.slane %v1667, %v1670
    %v1672 = vmul.f32 %v1030, %v1671
    %v1673 = vmul.f32 %v1035, %v1671
    %v1674 = vmul.f32 %v1040, %v1671
    %v1675 = vmul.f32 %v1045, %v1671
    %v1676 = vmul.f32 %v1050, %v1671
    %v1677 = vmul.f32 %v1055, %v1671
    %v1678 = vadd.f32 %v1643, %v1672
    %v1679 = vadd.f32 %v1646, %v1673
    %v1680 = vadd.f32 %v1651, %v1674
    %v1681 = vadd.f32 %v1654, %v1675
    %v1682 = vadd.f32 %v1659, %v1676
    %v1683 = vadd.f32 %v1662, %v1677
    %s1684 = scalar_lea.vmem [#allocation19], 1
    %v1685 = vld [vmem:[%s1684] sm:$0x1]
    %v1687 = vlaneseq
    %v1688 = vshrl.u32 %v1687, 7
    %v1689 = vsub.s32 0, %v1688
    %v1690 = vrot.slane %v1685, %v1689
    %v1692 = vadd.f32 %v1678, %v1690
    %v1693 = vadd.f32 %v1679, %v1690
    %v1694 = vadd.f32 %v1680, %v1690
    %v1695 = vadd.f32 %v1681, %v1690
    %v1696 = vadd.f32 %v1682, %v1690
    %v1697 = vadd.f32 %v1683, %v1690
    %v1698 = vmax.f32 %v1692, 0.0
    %v1699 = vmax.f32 %v1693, 0.0
    %v1700 = vmax.f32 %v1694, 0.0
    %v1701 = vmax.f32 %v1695, 0.0
    %v1702 = vmax.f32 %v1696, 0.0
    %v1703 = vmax.f32 %v1697, 0.0
    %s1704 = scalar_lea.vmem %s47, 16
    %v1705 = vld [vmem:[%s1704] sm:$0xf]
    %v1706 = vld [vmem:[%s1704 + $0x4] sm:$0xf]
    %v1707 = vld [vmem:[%s1704 + $0x8] sm:$0xf]
    %v1708 = vld [vmem:[%s1704 + $0xc] sm:$0xf]
    %v1709 = vpack.c.bf16 %v1699, %v1698
    %v1710 = vpack.c.bf16 %v1701, %v1700
    %v1711 = vpack.c.bf16 %v1703, %v1702
    %s1712 = scalar_lea.vmem [#allocation20], 1
    %v1713 = vld [vmem:[%s1712] sm:$0x1]
    %v1715 = vlaneseq
    %v1716 = vshrl.u32 %v1715, 7
    %v1717 = vsub.s32 0, %v1716
    %v1718 = vrot.slane %v1713, %v1717
    %v1724 = vunpack.c.l.b16 %v1705
    %v1725 = vunpack.c.l.b16 %v1706
    %v1726 = vunpack.c.l.b16 %v1707
    %v1727 = vunpack.c.l.b16 %v1708
    %v1728 = vpack.c.b16 %v1725, %v1724
    %v1729 = vpack.c.b16 %v1727, %v1726
    %v1733 = vsel %vm571, %v1709, 0
    %v1736 = vsel %vm571, %v1710, 0
    %v1739 = vsel %vm571, %v1711, 0
    %1741 = vmatprep.subr.bf16.mxu0 0
    %1742 = vmatpush1.bf16.msra.mxu0 0
    %1743 = vmatprep.subr.bf16.mxu0 0
    %1744 = vmatpush1.bf16.msra.mxu0 0
    %1745 = vmatprep.subr.bf16.mxu0 0
    %1746 = vmatpush1.bf16.msra.mxu0 0
    %1747 = vmatprep.subr.bf16.mxu0 0
    %1748 = vmatpush1.bf16.msra.mxu0 0
    %1749 = vmatprep.subr.bf16.mxu0 0
    %1750 = vmatpush1.bf16.msra.mxu0 0
    %1751 = vmatprep.subr.bf16.mxu0 0
    %1752 = vmatpush1.bf16.msra.mxu0 0
    %1753 = vmatprep.subr.bf16.mxu0 0
    %1754 = vmatpush1.bf16.msra.mxu0 %v1729
    %1755 = vmatprep.subr.bf16.mxu0 0
    %1756 = vmatpush1.bf16.msra.mxu0 %v1728
    %1757 = vmatprep.subr.bf16.mxu0 0
    %1758 = vmatpush2.bf16.msra.mxu0 0
    %1759 = vmatprep.subr.bf16.mxu0 0
    %1760 = vmatpush2.bf16.msra.mxu0 0
    %1761 = vmatprep.subr.bf16.mxu0 0
    %1762 = vmatpush2.bf16.msra.mxu0 0
    %1763 = vmatprep.subr.bf16.mxu0 0
    %1764 = vmatpush2.bf16.msra.mxu0 0
    %1765 = vmatprep.subr.bf16.mxu0 0
    %1766 = vmatpush2.bf16.msra.mxu0 0
    %1767 = vmatprep.subr.bf16.mxu0 0
    %1768 = vmatpush2.bf16.msra.mxu0 0
    %1769 = vmatprep.subr.bf16.mxu0 0
    %1770 = vmatpush2.bf16.msra.mxu0 0
    %1771 = vmatprep.subr.bf16.mxu0 0
    %1772 = vmatpush2.bf16.msra.mxu0 0
    %1773 = vmatprep.mubr.bf16.mxu0 0
    %1774 = vmatmul.mubr.bf16.gmra.mxu0 %v1733
    %v1775 = vpop.f32.mrf.mxu0
    %v1776 = vadd.f32 %v1718, %v1775
    %v1777 = vpop.f32.mrf.mxu0
    %v1778 = vpop.f32.mrf.mxu0
    %v1779 = vadd.f32 %v1718, %v1778
    %v1780 = vpop.f32.mrf.mxu0
    %1781 = vmatprep.mubr.bf16.mxu0 0
    %1782 = vmatmul.mubr.bf16.gmra.mxu0 %v1736
    %v1783 = vpop.f32.mrf.mxu0
    %v1784 = vadd.f32 %v1718, %v1783
    %v1785 = vpop.f32.mrf.mxu0
    %v1786 = vpop.f32.mrf.mxu0
    %v1787 = vadd.f32 %v1718, %v1786
    %v1788 = vpop.f32.mrf.mxu0
    %1789 = vmatprep.mubr.bf16.mxu0 0
    %1790 = vmatmul.mubr.bf16.gmra.mxu0 %v1739
    %v1791 = vpop.f32.mrf.mxu0
    %v1792 = vadd.f32 %v1718, %v1791
    %v1793 = vpop.f32.mrf.mxu0
    %v1794 = vpop.f32.mrf.mxu0
    %v1795 = vadd.f32 %v1718, %v1794
    %v1796 = vpop.f32.mrf.mxu0
    %1797 = vdwg.mxu0
    %v1798 = vpack.c.bf16 %v1779, %v1776
    %v1799 = vpack.c.bf16 %v1787, %v1784
    %v1800 = vpack.c.bf16 %v1795, %v1792
    %v1802 = vsel %vm1187, %v466, 0
    %1804 = vmatprep.subr.bf16.mxu0 0
    %1805 = vmatpush1.bf16.msra.mxu0 0
    %1806 = vmatprep.subr.bf16.mxu0 0
    %1807 = vmatpush1.bf16.msra.mxu0 0
    %1808 = vmatprep.subr.bf16.mxu0 0
    %1809 = vmatpush1.bf16.msra.mxu0 0
    %1810 = vmatprep.subr.bf16.mxu0 0
    %1811 = vmatpush1.bf16.msra.mxu0 0
    %1812 = vmatprep.subr.bf16.mxu0 0
    %1813 = vmatpush1.bf16.msra.mxu0 0
    %1814 = vmatprep.subr.bf16.mxu0 0
    %1815 = vmatpush1.bf16.msra.mxu0 %v1800
    %1816 = vmatprep.subr.bf16.mxu0 0
    %1817 = vmatpush1.bf16.msra.mxu0 %v1799
    %1818 = vmatprep.subr.bf16.mxu0 0
    %1819 = vmatpush1.bf16.msra.mxu0 %v1798
    %1820 = vmatprep.subr.bf16.mxu0 0
    %1821 = vmatpush2.bf16.msra.mxu0 0
    %1822 = vmatprep.subr.bf16.mxu0 0
    %1823 = vmatpush2.bf16.msra.mxu0 0
    %1824 = vmatprep.subr.bf16.mxu0 0
    %1825 = vmatpush2.bf16.msra.mxu0 0
    %1826 = vmatprep.subr.bf16.mxu0 0
    %1827 = vmatpush2.bf16.msra.mxu0 0
    %1828 = vmatprep.subr.bf16.mxu0 0
    %1829 = vmatpush2.bf16.msra.mxu0 0
    %1830 = vmatprep.subr.bf16.mxu0 0
    %1831 = vmatpush2.bf16.msra.mxu0 0
    %1832 = vmatprep.subr.bf16.mxu0 0
    %1833 = vmatpush2.bf16.msra.mxu0 0
    %1834 = vmatprep.subr.bf16.mxu0 0
    %1835 = vmatpush2.bf16.msra.mxu0 0
    %1836 = vmatprep.mubr.bf16.mxu0 0
    %1837 = vmatmul.mubr.bf16.gmra.mxu0 %v1802
    %v1838 = vpop.f32.mrf.mxu0
    %v1839 = vadd.f32 0.0, %v1838
    %v1840 = vpop.f32.mrf.mxu0
    %v1841 = vpop.f32.mrf.mxu0
    %v1842 = vadd.f32 0.0, %v1841
    %v1843 = vpop.f32.mrf.mxu0
    %1844 = vdwg.mxu0
    %s1845 = scalar_lea.vmem [#allocation22], 16
    %v1846 = vld [vmem:[%s1845] sm:$0xf]
    %v1847 = vld [vmem:[%s1845 + $0x4] sm:$0xf]
    %v1848 = vld [vmem:[%s1845 + $0x8] sm:$0xf]
    %v1849 = vld [vmem:[%s1845 + $0xc] sm:$0xf]
    %v1850 = vpack.c.bf16 %v1842, %v1839
    %s1851 = scalar_lea.vmem [#allocation23], 16
    %v1852 = vld [vmem:[%s1851] sm:$0xf]
    %v1853 = vld [vmem:[%s1851 + $0x4] sm:$0xf]
    %v1854 = vld [vmem:[%s1851 + $0x8] sm:$0xf]
    %v1855 = vld [vmem:[%s1851 + $0xc] sm:$0xf]
    %v1860 = vunpack.c.l.b16 %v1852
    %v1861 = vunpack.c.l.b16 %v1853
    %v1862 = vunpack.c.l.b16 %v1854
    %v1863 = vunpack.c.l.b16 %v1855
    %v1864 = vpack.c.b16 %v1861, %v1860
    %v1865 = vpack.c.b16 %v1863, %v1862
    %1868 = vmatprep.subr.bf16.mxu0 0
    %1869 = vmatpush1.bf16.msra.mxu0 0
    %1870 = vmatprep.subr.bf16.mxu0 0
    %1871 = vmatpush1.bf16.msra.mxu0 0
    %1872 = vmatprep.subr.bf16.mxu0 0
    %1873 = vmatpush1.bf16.msra.mxu0 0
    %1874 = vmatprep.subr.bf16.mxu0 0
    %1875 = vmatpush1.bf16.msra.mxu0 0
    %1876 = vmatprep.subr.bf16.mxu0 0
    %1877 = vmatpush1.bf16.msra.mxu0 0
    %1878 = vmatprep.subr.bf16.mxu0 0
    %1879 = vmatpush1.bf16.msra.mxu0 0
    %1880 = vmatprep.subr.bf16.mxu0 0
    %1881 = vmatpush1.bf16.msra.mxu0 %v1865
    %1882 = vmatprep.subr.bf16.mxu0 0
    %1883 = vmatpush1.bf16.msra.mxu0 %v1864
    %1884 = vmatprep.subr.bf16.mxu0 0
    %1885 = vmatpush2.bf16.msra.mxu0 0
    %1886 = vmatprep.subr.bf16.mxu0 0
    %1887 = vmatpush2.bf16.msra.mxu0 0
    %1888 = vmatprep.subr.bf16.mxu0 0
    %1889 = vmatpush2.bf16.msra.mxu0 0
    %1890 = vmatprep.subr.bf16.mxu0 0
    %1891 = vmatpush2.bf16.msra.mxu0 0
    %1892 = vmatprep.subr.bf16.mxu0 0
    %1893 = vmatpush2.bf16.msra.mxu0 0
    %1894 = vmatprep.subr.bf16.mxu0 0
    %1895 = vmatpush2.bf16.msra.mxu0 0
    %1896 = vmatprep.subr.bf16.mxu0 0
    %1897 = vmatpush2.bf16.msra.mxu0 0
    %1898 = vmatprep.subr.bf16.mxu0 0
    %1899 = vmatpush2.bf16.msra.mxu0 0
    %1900 = vmatprep.mubr.bf16.mxu0 0
    %1901 = vmatmul.mubr.bf16.gmra.mxu0 %v1448
    %v1902 = vpop.f32.mrf.mxu0
    %v1903 = vadd.f32 0.0, %v1902
    %v1904 = vpop.f32.mrf.mxu0
    %v1905 = vpop.f32.mrf.mxu0
    %v1906 = vadd.f32 0.0, %v1905
    %v1907 = vpop.f32.mrf.mxu0
    %1908 = vdwg.mxu0
    %v1913 = vunpack.c.l.b16 %v1846
    %v1914 = vunpack.c.l.b16 %v1847
    %v1915 = vunpack.c.l.b16 %v1848
    %v1916 = vunpack.c.l.b16 %v1849
    %v1917 = vpack.c.b16 %v1914, %v1913
    %v1918 = vpack.c.b16 %v1916, %v1915
    %v1922 = vsel %vm571, %v1850, 0
    %1924 = vmatprep.subr.bf16.mxu0 0
    %1925 = vmatpush1.bf16.msra.mxu0 0
    %1926 = vmatprep.subr.bf16.mxu0 0
    %1927 = vmatpush1.bf16.msra.mxu0 0
    %1928 = vmatprep.subr.bf16.mxu0 0
    %1929 = vmatpush1.bf16.msra.mxu0 0
    %1930 = vmatprep.subr.bf16.mxu0 0
    %1931 = vmatpush1.bf16.msra.mxu0 0
    %1932 = vmatprep.subr.bf16.mxu0 0
    %1933 = vmatpush1.bf16.msra.mxu0 0
    %1934 = vmatprep.subr.bf16.mxu0 0
    %1935 = vmatpush1.bf16.msra.mxu0 0
    %1936 = vmatprep.subr.bf16.mxu0 0
    %1937 = vmatpush1.bf16.msra.mxu0 %v1918
    %1938 = vmatprep.subr.bf16.mxu0 0
    %1939 = vmatpush1.bf16.msra.mxu0 %v1917
    %1940 = vmatprep.subr.bf16.mxu0 0
    %1941 = vmatpush2.bf16.msra.mxu0 0
    %1942 = vmatprep.subr.bf16.mxu0 0
    %1943 = vmatpush2.bf16.msra.mxu0 0
    %1944 = vmatprep.subr.bf16.mxu0 0
    %1945 = vmatpush2.bf16.msra.mxu0 0
    %1946 = vmatprep.subr.bf16.mxu0 0
    %1947 = vmatpush2.bf16.msra.mxu0 0
    %1948 = vmatprep.subr.bf16.mxu0 0
    %1949 = vmatpush2.bf16.msra.mxu0 0
    %1950 = vmatprep.subr.bf16.mxu0 0
    %1951 = vmatpush2.bf16.msra.mxu0 0
    %1952 = vmatprep.subr.bf16.mxu0 0
    %1953 = vmatpush2.bf16.msra.mxu0 0
    %1954 = vmatprep.subr.bf16.mxu0 0
    %1955 = vmatpush2.bf16.msra.mxu0 0
    %1956 = vmatprep.mubr.bf16.mxu0 0
    %1957 = vmatmul.mubr.bf16.gmra.mxu0 %v1922
    %v1958 = vpop.f32.mrf.mxu0
    %v1959 = vadd.f32 %v1903, %v1958
    %v1960 = vpop.f32.mrf.mxu0
    %v1961 = vpop.f32.mrf.mxu0
    %v1962 = vadd.f32 %v1906, %v1961
    %v1963 = vpop.f32.mrf.mxu0
    %1964 = vdwg.mxu0
    %s1965 = scalar_lea.vmem [#allocation25], 1
    %v1966 = vld [vmem:[%s1965] sm:$0x1]
    %v1968 = vlaneseq
    %v1969 = vshrl.u32 %v1968, 7
    %v1970 = vsub.s32 0, %v1969
    %v1971 = vrot.slane %v1966, %v1970
    %v1973 = vadd.f32 %v1959, %v1971
    %v1974 = vadd.f32 %v1962, %v1971
    %v1975 = vmax.f32 %v1973, 0.0
    %v1976 = vmax.f32 %v1974, 0.0
    %s1977 = scalar_lea.vmem [#allocation26], 16
    %v1978 = vld [vmem:[%s1977] sm:$0xf]
    %v1979 = vld [vmem:[%s1977 + $0x4] sm:$0xf]
    %v1980 = vld [vmem:[%s1977 + $0x8] sm:$0xf]
    %v1981 = vld [vmem:[%s1977 + $0xc] sm:$0xf]
    %v1982 = vpack.c.bf16 %v1976, %v1975
    %s1983 = scalar_lea.vmem [#allocation28], 1
    %v1984 = vld [vmem:[%s1983] sm:$0x1]
    %v1986 = vlaneseq
    %v1987 = vshrl.u32 %v1986, 7
    %v1988 = vsub.s32 0, %v1987
    %v1989 = vrot.slane %v1984, %v1988
    %v1995 = vunpack.c.l.b16 %v1978
    %v1996 = vunpack.c.l.b16 %v1979
    %v1997 = vunpack.c.l.b16 %v1980
    %v1998 = vunpack.c.l.b16 %v1981
    %v1999 = vpack.c.b16 %v1996, %v1995
    %v2000 = vpack.c.b16 %v1998, %v1997
    %v2004 = vsel %vm571, %v1982, 0
    %2006 = vmatprep.subr.bf16.mxu0 0
    %2007 = vmatpush1.bf16.msra.mxu0 0
    %2008 = vmatprep.subr.bf16.mxu0 0
    %2009 = vmatpush1.bf16.msra.mxu0 0
    %2010 = vmatprep.subr.bf16.mxu0 0
    %2011 = vmatpush1.bf16.msra.mxu0 0
    %2012 = vmatprep.subr.bf16.mxu0 0
    %2013 = vmatpush1.bf16.msra.mxu0 0
    %2014 = vmatprep.subr.bf16.mxu0 0
    %2015 = vmatpush1.bf16.msra.mxu0 0
    %2016 = vmatprep.subr.bf16.mxu0 0
    %2017 = vmatpush1.bf16.msra.mxu0 0
    %2018 = vmatprep.subr.bf16.mxu0 0
    %2019 = vmatpush1.bf16.msra.mxu0 %v2000
    %2020 = vmatprep.subr.bf16.mxu0 0
    %2021 = vmatpush1.bf16.msra.mxu0 %v1999
    %2022 = vmatprep.subr.bf16.mxu0 0
    %2023 = vmatpush2.bf16.msra.mxu0 0
    %2024 = vmatprep.subr.bf16.mxu0 0
    %2025 = vmatpush2.bf16.msra.mxu0 0
    %2026 = vmatprep.subr.bf16.mxu0 0
    %2027 = vmatpush2.bf16.msra.mxu0 0
    %2028 = vmatprep.subr.bf16.mxu0 0
    %2029 = vmatpush2.bf16.msra.mxu0 0
    %2030 = vmatprep.subr.bf16.mxu0 0
    %2031 = vmatpush2.bf16.msra.mxu0 0
    %2032 = vmatprep.subr.bf16.mxu0 0
    %2033 = vmatpush2.bf16.msra.mxu0 0
    %2034 = vmatprep.subr.bf16.mxu0 0
    %2035 = vmatpush2.bf16.msra.mxu0 0
    %2036 = vmatprep.subr.bf16.mxu0 0
    %2037 = vmatpush2.bf16.msra.mxu0 0
    %2038 = vmatprep.mubr.bf16.mxu0 0
    %2039 = vmatmul.mubr.bf16.gmra.mxu0 %v2004
    %v2040 = vpop.f32.mrf.mxu0
    %v2041 = vadd.f32 %v1989, %v2040
    %v2042 = vpop.f32.mrf.mxu0
    %v2043 = vpop.f32.mrf.mxu0
    %v2044 = vadd.f32 %v1989, %v2043
    %v2045 = vpop.f32.mrf.mxu0
    %2046 = vdwg.mxu0
    %v2047 = vpack.c.bf16 %v2044, %v2041
    %s2048 = scalar_lea.vmem %s39, 32
    %v2049 = vld [vmem:[%s2048] sm:$0xf]
    %v2050 = vld [vmem:[%s2048 + $0x4] sm:$0xf]
    %v2051 = vld [vmem:[%s2048 + $0x8] sm:$0xf]
    %v2052 = vld [vmem:[%s2048 + $0xc] sm:$0xf]
    %v2057 = vunpack.c.l.b16 %v2049
    %v2058 = vunpack.c.l.b16 %v2050
    %v2059 = vunpack.c.l.b16 %v2051
    %v2060 = vunpack.c.l.b16 %v2052
    %v2061 = vpack.c.b16 %v2058, %v2057
    %v2062 = vpack.c.b16 %v2060, %v2059
    %v2066 = vsel %vm571, %v2047, 0
    %2068 = vmatprep.subr.bf16.mxu0 0
    %2069 = vmatpush1.bf16.msra.mxu0 0
    %2070 = vmatprep.subr.bf16.mxu0 0
    %2071 = vmatpush1.bf16.msra.mxu0 0
    %2072 = vmatprep.subr.bf16.mxu0 0
    %2073 = vmatpush1.bf16.msra.mxu0 0
    %2074 = vmatprep.subr.bf16.mxu0 0
    %2075 = vmatpush1.bf16.msra.mxu0 0
    %2076 = vmatprep.subr.bf16.mxu0 0
    %2077 = vmatpush1.bf16.msra.mxu0 0
    %2078 = vmatprep.subr.bf16.mxu0 0
    %2079 = vmatpush1.bf16.msra.mxu0 0
    %2080 = vmatprep.subr.bf16.mxu0 0
    %2081 = vmatpush1.bf16.msra.mxu0 %v2062
    %2082 = vmatprep.subr.bf16.mxu0 0
    %2083 = vmatpush1.bf16.msra.mxu0 %v2061
    %2084 = vmatprep.subr.bf16.mxu0 0
    %2085 = vmatpush2.bf16.msra.mxu0 0
    %2086 = vmatprep.subr.bf16.mxu0 0
    %2087 = vmatpush2.bf16.msra.mxu0 0
    %2088 = vmatprep.subr.bf16.mxu0 0
    %2089 = vmatpush2.bf16.msra.mxu0 0
    %2090 = vmatprep.subr.bf16.mxu0 0
    %2091 = vmatpush2.bf16.msra.mxu0 0
    %2092 = vmatprep.subr.bf16.mxu0 0
    %2093 = vmatpush2.bf16.msra.mxu0 0
    %2094 = vmatprep.subr.bf16.mxu0 0
    %2095 = vmatpush2.bf16.msra.mxu0 0
    %2096 = vmatprep.subr.bf16.mxu0 0
    %2097 = vmatpush2.bf16.msra.mxu0 0
    %2098 = vmatprep.subr.bf16.mxu0 0
    %2099 = vmatpush2.bf16.msra.mxu0 0
    %2100 = vmatprep.mubr.bf16.mxu0 0
    %2101 = vmatmul.mubr.bf16.gmra.mxu0 %v2066
    %v2102 = vpop.f32.mrf.mxu0
    %v2103 = vadd.f32 0.0, %v2102
    %v2104 = vpop.f32.mrf.mxu0
    %v2105 = vpop.f32.mrf.mxu0
    %v2106 = vadd.f32 0.0, %v2105
    %v2107 = vpop.f32.mrf.mxu0
    %2108 = vdwg.mxu0
    %s2109 = scalar_lea.vmem %s45, 32
    %v2110 = vld [vmem:[%s2109] sm:$0xf]
    %v2111 = vld [vmem:[%s2109 + $0x4] sm:$0xf]
    %v2112 = vld [vmem:[%s2109 + $0x8] sm:$0xf]
    %v2113 = vld [vmem:[%s2109 + $0xc] sm:$0xf]
    %v2118 = vunpack.c.l.b16 %v2110
    %v2119 = vunpack.c.l.b16 %v2111
    %v2120 = vunpack.c.l.b16 %v2112
    %v2121 = vunpack.c.l.b16 %v2113
    %v2122 = vpack.c.b16 %v2119, %v2118
    %v2123 = vpack.c.b16 %v2121, %v2120
    %2126 = vmatprep.subr.bf16.mxu0 0
    %2127 = vmatpush1.bf16.msra.mxu0 0
    %2128 = vmatprep.subr.bf16.mxu0 0
    %2129 = vmatpush1.bf16.msra.mxu0 0
    %2130 = vmatprep.subr.bf16.mxu0 0
    %2131 = vmatpush1.bf16.msra.mxu0 0
    %2132 = vmatprep.subr.bf16.mxu0 0
    %2133 = vmatpush1.bf16.msra.mxu0 0
    %2134 = vmatprep.subr.bf16.mxu0 0
    %2135 = vmatpush1.bf16.msra.mxu0 0
    %2136 = vmatprep.subr.bf16.mxu0 0
    %2137 = vmatpush1.bf16.msra.mxu0 0
    %2138 = vmatprep.subr.bf16.mxu0 0
    %2139 = vmatpush1.bf16.msra.mxu0 %v2123
    %2140 = vmatprep.subr.bf16.mxu0 0
    %2141 = vmatpush1.bf16.msra.mxu0 %v2122
    %2142 = vmatprep.subr.bf16.mxu0 0
    %2143 = vmatpush2.bf16.msra.mxu0 0
    %2144 = vmatprep.subr.bf16.mxu0 0
    %2145 = vmatpush2.bf16.msra.mxu0 0
    %2146 = vmatprep.subr.bf16.mxu0 0
    %2147 = vmatpush2.bf16.msra.mxu0 0
    %2148 = vmatprep.subr.bf16.mxu0 0
    %2149 = vmatpush2.bf16.msra.mxu0 0
    %2150 = vmatprep.subr.bf16.mxu0 0
    %2151 = vmatpush2.bf16.msra.mxu0 0
    %2152 = vmatprep.subr.bf16.mxu0 0
    %2153 = vmatpush2.bf16.msra.mxu0 0
    %2154 = vmatprep.subr.bf16.mxu0 0
    %2155 = vmatpush2.bf16.msra.mxu0 0
    %2156 = vmatprep.subr.bf16.mxu0 0
    %2157 = vmatpush2.bf16.msra.mxu0 0
    %2158 = vmatprep.mubr.bf16.mxu0 0
    %2159 = vmatmul.mubr.bf16.gmra.mxu0 %v1448
    %v2160 = vpop.f32.mrf.mxu0
    %v2161 = vadd.f32 0.0, %v2160
    %v2162 = vpop.f32.mrf.mxu0
    %v2163 = vpop.f32.mrf.mxu0
    %v2164 = vadd.f32 0.0, %v2163
    %v2165 = vpop.f32.mrf.mxu0
    %2166 = vdwg.mxu0
    %v2167 = vpack.c.bf16 %v2106, %v2103
    %v2168 = vpack.c.bf16 %v2164, %v2161
    %2169 = vmatprep.subr.bf16.mxu0 0
    %2170 = vmatpush1.bf16.msra.mxu0 0
    %2171 = vmatprep.subr.bf16.mxu0 0
    %2172 = vmatpush1.bf16.msra.mxu0 0
    %2173 = vmatprep.subr.bf16.mxu0 0
    %2174 = vmatpush1.bf16.msra.mxu0 0
    %2175 = vmatprep.subr.bf16.mxu0 0
    %2176 = vmatpush1.bf16.msra.mxu0 0
    %2177 = vmatprep.subr.bf16.mxu0 0
    %2178 = vmatpush1.bf16.msra.mxu0 0
    %2179 = vmatprep.subr.bf16.mxu0 0
    %2180 = vmatpush1.bf16.msra.mxu0 0
    %2181 = vmatprep.subr.bf16.mxu0 0
    %2182 = vmatpush1.bf16.msra.mxu0 0
    %2183 = vmatprep.subr.bf16.mxu0 0
    %2184 = vmatpush1.bf16.msra.mxu0 %v2168
    %2185 = vmatprep.subr.bf16.mxu0 0
    %2186 = vmatpush2.bf16.msra.mxu0 0
    %2187 = vmatprep.subr.bf16.mxu0 0
    %2188 = vmatpush2.bf16.msra.mxu0 0
    %2189 = vmatprep.subr.bf16.mxu0 0
    %2190 = vmatpush2.bf16.msra.mxu0 0
    %2191 = vmatprep.subr.bf16.mxu0 0
    %2192 = vmatpush2.bf16.msra.mxu0 0
    %2193 = vmatprep.subr.bf16.mxu0 0
    %2194 = vmatpush2.bf16.msra.mxu0 0
    %2195 = vmatprep.subr.bf16.mxu0 0
    %2196 = vmatpush2.bf16.msra.mxu0 0
    %2197 = vmatprep.subr.bf16.mxu0 0
    %2198 = vmatpush2.bf16.msra.mxu0 0
    %2199 = vmatprep.subr.bf16.mxu0 0
    %2200 = vmatpush2.bf16.msra.mxu0 0
    %2201 = vmatprep.mubr.bf16.mxu0 0
    %2202 = vmatmul.mubr.bf16.gmra.mxu0 %v894
    %v2203 = vpop.f32.mrf.mxu0
    %v2204 = vadd.f32 0.0, %v2203
    %v2205 = vpop.f32.mrf.mxu0
    %v2206 = vpop.f32.mrf.mxu0
    %v2207 = vadd.f32 0.0, %v2206
    %v2208 = vpop.f32.mrf.mxu0
    %2209 = vmatprep.mubr.bf16.mxu0 0
    %2210 = vmatmul.mubr.bf16.gmra.mxu0 %v897
    %v2211 = vpop.f32.mrf.mxu0
    %v2212 = vadd.f32 0.0, %v2211
    %v2213 = vpop.f32.mrf.mxu0
    %v2214 = vpop.f32.mrf.mxu0
    %v2215 = vadd.f32 0.0, %v2214
    %v2216 = vpop.f32.mrf.mxu0
    %2217 = vmatprep.mubr.bf16.mxu0 0
    %2218 = vmatmul.mubr.bf16.gmra.mxu0 %v900
    %v2219 = vpop.f32.mrf.mxu0
    %v2220 = vadd.f32 0.0, %v2219
    %v2221 = vpop.f32.mrf.mxu0
    %v2222 = vpop.f32.mrf.mxu0
    %v2223 = vadd.f32 0.0, %v2222
    %v2224 = vpop.f32.mrf.mxu0
    %2225 = vdwg.mxu0
    %2226 = vmatprep.subr.bf16.mxu0 0
    %2227 = vmatpush1.bf16.msra.mxu0 0
    %2228 = vmatprep.subr.bf16.mxu0 0
    %2229 = vmatpush1.bf16.msra.mxu0 0
    %2230 = vmatprep.subr.bf16.mxu0 0
    %2231 = vmatpush1.bf16.msra.mxu0 0
    %2232 = vmatprep.subr.bf16.mxu0 0
    %2233 = vmatpush1.bf16.msra.mxu0 0
    %2234 = vmatprep.subr.bf16.mxu0 0
    %2235 = vmatpush1.bf16.msra.mxu0 0
    %2236 = vmatprep.subr.bf16.mxu0 0
    %2237 = vmatpush1.bf16.msra.mxu0 0
    %2238 = vmatprep.subr.bf16.mxu0 0
    %2239 = vmatpush1.bf16.msra.mxu0 0
    %2240 = vmatprep.subr.bf16.mxu0 0
    %2241 = vmatpush1.bf16.msra.mxu0 %v2167
    %2242 = vmatprep.subr.bf16.mxu0 0
    %2243 = vmatpush2.bf16.msra.mxu0 0
    %2244 = vmatprep.subr.bf16.mxu0 0
    %2245 = vmatpush2.bf16.msra.mxu0 0
    %2246 = vmatprep.subr.bf16.mxu0 0
    %2247 = vmatpush2.bf16.msra.mxu0 0
    %2248 = vmatprep.subr.bf16.mxu0 0
    %2249 = vmatpush2.bf16.msra.mxu0 0
    %2250 = vmatprep.subr.bf16.mxu0 0
    %2251 = vmatpush2.bf16.msra.mxu0 0
    %2252 = vmatprep.subr.bf16.mxu0 0
    %2253 = vmatpush2.bf16.msra.mxu0 0
    %2254 = vmatprep.subr.bf16.mxu0 0
    %2255 = vmatpush2.bf16.msra.mxu0 0
    %2256 = vmatprep.subr.bf16.mxu0 0
    %2257 = vmatpush2.bf16.msra.mxu0 0
    %2258 = vmatprep.mubr.bf16.mxu0 0
    %2259 = vmatmul.mubr.bf16.gmra.mxu0 %v960
    %v2260 = vpop.f32.mrf.mxu0
    %v2261 = vadd.f32 %v2204, %v2260
    %v2262 = vpop.f32.mrf.mxu0
    %v2263 = vpop.f32.mrf.mxu0
    %v2264 = vadd.f32 %v2207, %v2263
    %v2265 = vpop.f32.mrf.mxu0
    %2266 = vmatprep.mubr.bf16.mxu0 0
    %2267 = vmatmul.mubr.bf16.gmra.mxu0 %v963
    %v2268 = vpop.f32.mrf.mxu0
    %v2269 = vadd.f32 %v2212, %v2268
    %v2270 = vpop.f32.mrf.mxu0
    %v2271 = vpop.f32.mrf.mxu0
    %v2272 = vadd.f32 %v2215, %v2271
    %v2273 = vpop.f32.mrf.mxu0
    %2274 = vmatprep.mubr.bf16.mxu0 0
    %2275 = vmatmul.mubr.bf16.gmra.mxu0 %v966
    %v2276 = vpop.f32.mrf.mxu0
    %v2277 = vadd.f32 %v2220, %v2276
    %v2278 = vpop.f32.mrf.mxu0
    %v2279 = vpop.f32.mrf.mxu0
    %v2280 = vadd.f32 %v2223, %v2279
    %v2281 = vpop.f32.mrf.mxu0
    %2282 = vdwg.mxu0
    %s2283 = scalar_lea.vmem %s43, 2
    %v2284 = vld [vmem:[%s2283] sm:$0x1]
    %v2285 = vunpack.c.l.bf16 %v2284
    %v2286 = vlaneseq
    %v2287 = vshrl.u32 %v2286, 7
    %v2288 = vsub.s32 0, %v2287
    %v2289 = vrot.slane %v2285, %v2288
    %v2290 = vmul.f32 %v1030, %v2289
    %v2291 = vmul.f32 %v1035, %v2289
    %v2292 = vmul.f32 %v1040, %v2289
    %v2293 = vmul.f32 %v1045, %v2289
    %v2294 = vmul.f32 %v1050, %v2289
    %v2295 = vmul.f32 %v1055, %v2289
    %v2296 = vadd.f32 %v2261, %v2290
    %v2297 = vadd.f32 %v2264, %v2291
    %v2298 = vadd.f32 %v2269, %v2292
    %v2299 = vadd.f32 %v2272, %v2293
    %v2300 = vadd.f32 %v2277, %v2294
    %v2301 = vadd.f32 %v2280, %v2295
    %s2302 = scalar_lea.vmem [#allocation19], 2
    %v2303 = vld [vmem:[%s2302] sm:$0x1]
    %v2305 = vlaneseq
    %v2306 = vshrl.u32 %v2305, 7
    %v2307 = vsub.s32 0, %v2306
    %v2308 = vrot.slane %v2303, %v2307
    %v2310 = vadd.f32 %v2296, %v2308
    %v2311 = vadd.f32 %v2297, %v2308
    %v2312 = vadd.f32 %v2298, %v2308
    %v2313 = vadd.f32 %v2299, %v2308
    %v2314 = vadd.f32 %v2300, %v2308
    %v2315 = vadd.f32 %v2301, %v2308
    %v2316 = vmax.f32 %v2310, 0.0
    %v2317 = vmax.f32 %v2311, 0.0
    %v2318 = vmax.f32 %v2312, 0.0
    %v2319 = vmax.f32 %v2313, 0.0
    %v2320 = vmax.f32 %v2314, 0.0
    %v2321 = vmax.f32 %v2315, 0.0
    %s2322 = scalar_lea.vmem %s47, 32
    %v2323 = vld [vmem:[%s2322] sm:$0xf]
    %v2324 = vld [vmem:[%s2322 + $0x4] sm:$0xf]
    %v2325 = vld [vmem:[%s2322 + $0x8] sm:$0xf]
    %v2326 = vld [vmem:[%s2322 + $0xc] sm:$0xf]
    %v2327 = vpack.c.bf16 %v2317, %v2316
    %v2328 = vpack.c.bf16 %v2319, %v2318
    %v2329 = vpack.c.bf16 %v2321, %v2320
    %s2330 = scalar_lea.vmem [#allocation20], 2
    %v2331 = vld [vmem:[%s2330] sm:$0x1]
    %v2333 = vlaneseq
    %v2334 = vshrl.u32 %v2333, 7
    %v2335 = vsub.s32 0, %v2334
    %v2336 = vrot.slane %v2331, %v2335
    %v2342 = vunpack.c.l.b16 %v2323
    %v2343 = vunpack.c.l.b16 %v2324
    %v2344 = vunpack.c.l.b16 %v2325
    %v2345 = vunpack.c.l.b16 %v2326
    %v2346 = vpack.c.b16 %v2343, %v2342
    %v2347 = vpack.c.b16 %v2345, %v2344
    %v2351 = vsel %vm571, %v2327, 0
    %v2354 = vsel %vm571, %v2328, 0
    %v2357 = vsel %vm571, %v2329, 0
    %2359 = vmatprep.subr.bf16.mxu0 0
    %2360 = vmatpush1.bf16.msra.mxu0 0
    %2361 = vmatprep.subr.bf16.mxu0 0
    %2362 = vmatpush1.bf16.msra.mxu0 0
    %2363 = vmatprep.subr.bf16.mxu0 0
    %2364 = vmatpush1.bf16.msra.mxu0 0
    %2365 = vmatprep.subr.bf16.mxu0 0
    %2366 = vmatpush1.bf16.msra.mxu0 0
    %2367 = vmatprep.subr.bf16.mxu0 0
    %2368 = vmatpush1.bf16.msra.mxu0 0
    %2369 = vmatprep.subr.bf16.mxu0 0
    %2370 = vmatpush1.bf16.msra.mxu0 0
    %2371 = vmatprep.subr.bf16.mxu0 0
    %2372 = vmatpush1.bf16.msra.mxu0 %v2347
    %2373 = vmatprep.subr.bf16.mxu0 0
    %2374 = vmatpush1.bf16.msra.mxu0 %v2346
    %2375 = vmatprep.subr.bf16.mxu0 0
    %2376 = vmatpush2.bf16.msra.mxu0 0
    %2377 = vmatprep.subr.bf16.mxu0 0
    %2378 = vmatpush2.bf16.msra.mxu0 0
    %2379 = vmatprep.subr.bf16.mxu0 0
    %2380 = vmatpush2.bf16.msra.mxu0 0
    %2381 = vmatprep.subr.bf16.mxu0 0
    %2382 = vmatpush2.bf16.msra.mxu0 0
    %2383 = vmatprep.subr.bf16.mxu0 0
    %2384 = vmatpush2.bf16.msra.mxu0 0
    %2385 = vmatprep.subr.bf16.mxu0 0
    %2386 = vmatpush2.bf16.msra.mxu0 0
    %2387 = vmatprep.subr.bf16.mxu0 0
    %2388 = vmatpush2.bf16.msra.mxu0 0
    %2389 = vmatprep.subr.bf16.mxu0 0
    %2390 = vmatpush2.bf16.msra.mxu0 0
    %2391 = vmatprep.mubr.bf16.mxu0 0
    %2392 = vmatmul.mubr.bf16.gmra.mxu0 %v2351
    %v2393 = vpop.f32.mrf.mxu0
    %v2394 = vadd.f32 %v2336, %v2393
    %v2395 = vpop.f32.mrf.mxu0
    %v2396 = vpop.f32.mrf.mxu0
    %v2397 = vadd.f32 %v2336, %v2396
    %v2398 = vpop.f32.mrf.mxu0
    %2399 = vmatprep.mubr.bf16.mxu0 0
    %2400 = vmatmul.mubr.bf16.gmra.mxu0 %v2354
    %v2401 = vpop.f32.mrf.mxu0
    %v2402 = vadd.f32 %v2336, %v2401
    %v2403 = vpop.f32.mrf.mxu0
    %v2404 = vpop.f32.mrf.mxu0
    %v2405 = vadd.f32 %v2336, %v2404
    %v2406 = vpop.f32.mrf.mxu0
    %2407 = vmatprep.mubr.bf16.mxu0 0
    %2408 = vmatmul.mubr.bf16.gmra.mxu0 %v2357
    %v2409 = vpop.f32.mrf.mxu0
    %v2410 = vadd.f32 %v2336, %v2409
    %v2411 = vpop.f32.mrf.mxu0
    %v2412 = vpop.f32.mrf.mxu0
    %v2413 = vadd.f32 %v2336, %v2412
    %v2414 = vpop.f32.mrf.mxu0
    %2415 = vdwg.mxu0
    %v2416 = vpack.c.bf16 %v2397, %v2394
    %v2417 = vpack.c.bf16 %v2405, %v2402
    %v2418 = vpack.c.bf16 %v2413, %v2410
    %2419 = vmatprep.subr.bf16.mxu0 0
    %2420 = vmatpush1.bf16.msra.mxu0 0
    %2421 = vmatprep.subr.bf16.mxu0 0
    %2422 = vmatpush1.bf16.msra.mxu0 0
    %2423 = vmatprep.subr.bf16.mxu0 0
    %2424 = vmatpush1.bf16.msra.mxu0 0
    %2425 = vmatprep.subr.bf16.mxu0 0
    %2426 = vmatpush1.bf16.msra.mxu0 0
    %2427 = vmatprep.subr.bf16.mxu0 0
    %2428 = vmatpush1.bf16.msra.mxu0 0
    %2429 = vmatprep.subr.bf16.mxu0 0
    %2430 = vmatpush1.bf16.msra.mxu0 %v2418
    %2431 = vmatprep.subr.bf16.mxu0 0
    %2432 = vmatpush1.bf16.msra.mxu0 %v2417
    %2433 = vmatprep.subr.bf16.mxu0 0
    %2434 = vmatpush1.bf16.msra.mxu0 %v2416
    %2435 = vmatprep.subr.bf16.mxu0 0
    %2436 = vmatpush2.bf16.msra.mxu0 0
    %2437 = vmatprep.subr.bf16.mxu0 0
    %2438 = vmatpush2.bf16.msra.mxu0 0
    %2439 = vmatprep.subr.bf16.mxu0 0
    %2440 = vmatpush2.bf16.msra.mxu0 0
    %2441 = vmatprep.subr.bf16.mxu0 0
    %2442 = vmatpush2.bf16.msra.mxu0 0
    %2443 = vmatprep.subr.bf16.mxu0 0
    %2444 = vmatpush2.bf16.msra.mxu0 0
    %2445 = vmatprep.subr.bf16.mxu0 0
    %2446 = vmatpush2.bf16.msra.mxu0 0
    %2447 = vmatprep.subr.bf16.mxu0 0
    %2448 = vmatpush2.bf16.msra.mxu0 0
    %2449 = vmatprep.subr.bf16.mxu0 0
    %2450 = vmatpush2.bf16.msra.mxu0 0
    %2451 = vmatprep.mubr.bf16.mxu0 0
    %2452 = vmatmul.mubr.bf16.gmra.mxu0 %v1189
    %v2453 = vpop.f32.mrf.mxu0
    %v2454 = vadd.f32 0.0, %v2453
    %v2455 = vpop.f32.mrf.mxu0
    %v2456 = vpop.f32.mrf.mxu0
    %v2457 = vadd.f32 0.0, %v2456
    %v2458 = vpop.f32.mrf.mxu0
    %2459 = vdwg.mxu0
    %s2460 = scalar_lea.vmem [#allocation22], 32
    %v2461 = vld [vmem:[%s2460] sm:$0xf]
    %v2462 = vld [vmem:[%s2460 + $0x4] sm:$0xf]
    %v2463 = vld [vmem:[%s2460 + $0x8] sm:$0xf]
    %v2464 = vld [vmem:[%s2460 + $0xc] sm:$0xf]
    %v2465 = vpack.c.bf16 %v2457, %v2454
    %s2466 = scalar_lea.vmem [#allocation23], 32
    %v2467 = vld [vmem:[%s2466] sm:$0xf]
    %v2468 = vld [vmem:[%s2466 + $0x4] sm:$0xf]
    %v2469 = vld [vmem:[%s2466 + $0x8] sm:$0xf]
    %v2470 = vld [vmem:[%s2466 + $0xc] sm:$0xf]
    %v2475 = vunpack.c.l.b16 %v2467
    %v2476 = vunpack.c.l.b16 %v2468
    %v2477 = vunpack.c.l.b16 %v2469
    %v2478 = vunpack.c.l.b16 %v2470
    %v2479 = vpack.c.b16 %v2476, %v2475
    %v2480 = vpack.c.b16 %v2478, %v2477
    %2483 = vmatprep.subr.bf16.mxu0 0
    %2484 = vmatpush1.bf16.msra.mxu0 0
    %2485 = vmatprep.subr.bf16.mxu0 0
    %2486 = vmatpush1.bf16.msra.mxu0 0
    %2487 = vmatprep.subr.bf16.mxu0 0
    %2488 = vmatpush1.bf16.msra.mxu0 0
    %2489 = vmatprep.subr.bf16.mxu0 0
    %2490 = vmatpush1.bf16.msra.mxu0 0
    %2491 = vmatprep.subr.bf16.mxu0 0
    %2492 = vmatpush1.bf16.msra.mxu0 0
    %2493 = vmatprep.subr.bf16.mxu0 0
    %2494 = vmatpush1.bf16.msra.mxu0 0
    %2495 = vmatprep.subr.bf16.mxu0 0
    %2496 = vmatpush1.bf16.msra.mxu0 %v2480
    %2497 = vmatprep.subr.bf16.mxu0 0
    %2498 = vmatpush1.bf16.msra.mxu0 %v2479
    %2499 = vmatprep.subr.bf16.mxu0 0
    %2500 = vmatpush2.bf16.msra.mxu0 0
    %2501 = vmatprep.subr.bf16.mxu0 0
    %2502 = vmatpush2.bf16.msra.mxu0 0
    %2503 = vmatprep.subr.bf16.mxu0 0
    %2504 = vmatpush2.bf16.msra.mxu0 0
    %2505 = vmatprep.subr.bf16.mxu0 0
    %2506 = vmatpush2.bf16.msra.mxu0 0
    %2507 = vmatprep.subr.bf16.mxu0 0
    %2508 = vmatpush2.bf16.msra.mxu0 0
    %2509 = vmatprep.subr.bf16.mxu0 0
    %2510 = vmatpush2.bf16.msra.mxu0 0
    %2511 = vmatprep.subr.bf16.mxu0 0
    %2512 = vmatpush2.bf16.msra.mxu0 0
    %2513 = vmatprep.subr.bf16.mxu0 0
    %2514 = vmatpush2.bf16.msra.mxu0 0
    %2515 = vmatprep.mubr.bf16.mxu0 0
    %2516 = vmatmul.mubr.bf16.gmra.mxu0 %v2066
    %v2517 = vpop.f32.mrf.mxu0
    %v2518 = vadd.f32 0.0, %v2517
    %v2519 = vpop.f32.mrf.mxu0
    %v2520 = vpop.f32.mrf.mxu0
    %v2521 = vadd.f32 0.0, %v2520
    %v2522 = vpop.f32.mrf.mxu0
    %2523 = vdwg.mxu0
    %v2528 = vunpack.c.l.b16 %v2461
    %v2529 = vunpack.c.l.b16 %v2462
    %v2530 = vunpack.c.l.b16 %v2463
    %v2531 = vunpack.c.l.b16 %v2464
    %v2532 = vpack.c.b16 %v2529, %v2528
    %v2533 = vpack.c.b16 %v2531, %v2530
    %v2537 = vsel %vm571, %v2465, 0
    %2539 = vmatprep.subr.bf16.mxu0 0
    %2540 = vmatpush1.bf16.msra.mxu0 0
    %2541 = vmatprep.subr.bf16.mxu0 0
    %2542 = vmatpush1.bf16.msra.mxu0 0
    %2543 = vmatprep.subr.bf16.mxu0 0
    %2544 = vmatpush1.bf16.msra.mxu0 0
    %2545 = vmatprep.subr.bf16.mxu0 0
    %2546 = vmatpush1.bf16.msra.mxu0 0
    %2547 = vmatprep.subr.bf16.mxu0 0
    %2548 = vmatpush1.bf16.msra.mxu0 0
    %2549 = vmatprep.subr.bf16.mxu0 0
    %2550 = vmatpush1.bf16.msra.mxu0 0
    %2551 = vmatprep.subr.bf16.mxu0 0
    %2552 = vmatpush1.bf16.msra.mxu0 %v2533
    %2553 = vmatprep.subr.bf16.mxu0 0
    %2554 = vmatpush1.bf16.msra.mxu0 %v2532
    %2555 = vmatprep.subr.bf16.mxu0 0
    %2556 = vmatpush2.bf16.msra.mxu0 0
    %2557 = vmatprep.subr.bf16.mxu0 0
    %2558 = vmatpush2.bf16.msra.mxu0 0
    %2559 = vmatprep.subr.bf16.mxu0 0
    %2560 = vmatpush2.bf16.msra.mxu0 0
    %2561 = vmatprep.subr.bf16.mxu0 0
    %2562 = vmatpush2.bf16.msra.mxu0 0
    %2563 = vmatprep.subr.bf16.mxu0 0
    %2564 = vmatpush2.bf16.msra.mxu0 0
    %2565 = vmatprep.subr.bf16.mxu0 0
    %2566 = vmatpush2.bf16.msra.mxu0 0
    %2567 = vmatprep.subr.bf16.mxu0 0
    %2568 = vmatpush2.bf16.msra.mxu0 0
    %2569 = vmatprep.subr.bf16.mxu0 0
    %2570 = vmatpush2.bf16.msra.mxu0 0
    %2571 = vmatprep.mubr.bf16.mxu0 0
    %2572 = vmatmul.mubr.bf16.gmra.mxu0 %v2537
    %v2573 = vpop.f32.mrf.mxu0
    %v2574 = vadd.f32 %v2518, %v2573
    %v2575 = vpop.f32.mrf.mxu0
    %v2576 = vpop.f32.mrf.mxu0
    %v2577 = vadd.f32 %v2521, %v2576
    %v2578 = vpop.f32.mrf.mxu0
    %2579 = vdwg.mxu0
    %s2580 = scalar_lea.vmem [#allocation25], 2
    %v2581 = vld [vmem:[%s2580] sm:$0x1]
    %v2583 = vlaneseq
    %v2584 = vshrl.u32 %v2583, 7
    %v2585 = vsub.s32 0, %v2584
    %v2586 = vrot.slane %v2581, %v2585
    %v2588 = vadd.f32 %v2574, %v2586
    %v2589 = vadd.f32 %v2577, %v2586
    %v2590 = vmax.f32 %v2588, 0.0
    %v2591 = vmax.f32 %v2589, 0.0
    %s2592 = scalar_lea.vmem [#allocation26], 32
    %v2593 = vld [vmem:[%s2592] sm:$0xf]
    %v2594 = vld [vmem:[%s2592 + $0x4] sm:$0xf]
    %v2595 = vld [vmem:[%s2592 + $0x8] sm:$0xf]
    %v2596 = vld [vmem:[%s2592 + $0xc] sm:$0xf]
    %v2597 = vpack.c.bf16 %v2591, %v2590
    %s2598 = scalar_lea.vmem [#allocation28], 2
    %v2599 = vld [vmem:[%s2598] sm:$0x1]
    %v2601 = vlaneseq
    %v2602 = vshrl.u32 %v2601, 7
    %v2603 = vsub.s32 0, %v2602
    %v2604 = vrot.slane %v2599, %v2603
    %v2610 = vunpack.c.l.b16 %v2593
    %v2611 = vunpack.c.l.b16 %v2594
    %v2612 = vunpack.c.l.b16 %v2595
    %v2613 = vunpack.c.l.b16 %v2596
    %v2614 = vpack.c.b16 %v2611, %v2610
    %v2615 = vpack.c.b16 %v2613, %v2612
    %v2619 = vsel %vm571, %v2597, 0
    %2621 = vmatprep.subr.bf16.mxu0 0
    %2622 = vmatpush1.bf16.msra.mxu0 0
    %2623 = vmatprep.subr.bf16.mxu0 0
    %2624 = vmatpush1.bf16.msra.mxu0 0
    %2625 = vmatprep.subr.bf16.mxu0 0
    %2626 = vmatpush1.bf16.msra.mxu0 0
    %2627 = vmatprep.subr.bf16.mxu0 0
    %2628 = vmatpush1.bf16.msra.mxu0 0
    %2629 = vmatprep.subr.bf16.mxu0 0
    %2630 = vmatpush1.bf16.msra.mxu0 0
    %2631 = vmatprep.subr.bf16.mxu0 0
    %2632 = vmatpush1.bf16.msra.mxu0 0
    %2633 = vmatprep.subr.bf16.mxu0 0
    %2634 = vmatpush1.bf16.msra.mxu0 %v2615
    %2635 = vmatprep.subr.bf16.mxu0 0
    %2636 = vmatpush1.bf16.msra.mxu0 %v2614
    %2637 = vmatprep.subr.bf16.mxu0 0
    %2638 = vmatpush2.bf16.msra.mxu0 0
    %2639 = vmatprep.subr.bf16.mxu0 0
    %2640 = vmatpush2.bf16.msra.mxu0 0
    %2641 = vmatprep.subr.bf16.mxu0 0
    %2642 = vmatpush2.bf16.msra.mxu0 0
    %2643 = vmatprep.subr.bf16.mxu0 0
    %2644 = vmatpush2.bf16.msra.mxu0 0
    %2645 = vmatprep.subr.bf16.mxu0 0
    %2646 = vmatpush2.bf16.msra.mxu0 0
    %2647 = vmatprep.subr.bf16.mxu0 0
    %2648 = vmatpush2.bf16.msra.mxu0 0
    %2649 = vmatprep.subr.bf16.mxu0 0
    %2650 = vmatpush2.bf16.msra.mxu0 0
    %2651 = vmatprep.subr.bf16.mxu0 0
    %2652 = vmatpush2.bf16.msra.mxu0 0
    %2653 = vmatprep.mubr.bf16.mxu0 0
    %2654 = vmatmul.mubr.bf16.gmra.mxu0 %v2619
    %v2655 = vpop.f32.mrf.mxu0
    %v2656 = vadd.f32 %v2604, %v2655
    %v2657 = vpop.f32.mrf.mxu0
    %v2658 = vpop.f32.mrf.mxu0
    %v2659 = vadd.f32 %v2604, %v2658
    %v2660 = vpop.f32.mrf.mxu0
    %2661 = vdwg.mxu0
    %v2662 = vpack.c.bf16 %v2659, %v2656
    %s2663 = scalar_lea.vmem %s39, 48
    %v2664 = vld [vmem:[%s2663] sm:$0xf]
    %v2665 = vld [vmem:[%s2663 + $0x4] sm:$0xf]
    %v2666 = vld [vmem:[%s2663 + $0x8] sm:$0xf]
    %v2667 = vld [vmem:[%s2663 + $0xc] sm:$0xf]
    %v2672 = vunpack.c.l.b16 %v2664
    %v2673 = vunpack.c.l.b16 %v2665
    %v2674 = vunpack.c.l.b16 %v2666
    %v2675 = vunpack.c.l.b16 %v2667
    %v2676 = vpack.c.b16 %v2673, %v2672
    %v2677 = vpack.c.b16 %v2675, %v2674
    %v2681 = vsel %vm571, %v2662, 0
    %2683 = vmatprep.subr.bf16.mxu0 0
    %2684 = vmatpush1.bf16.msra.mxu0 0
    %2685 = vmatprep.subr.bf16.mxu0 0
    %2686 = vmatpush1.bf16.msra.mxu0 0
    %2687 = vmatprep.subr.bf16.mxu0 0
    %2688 = vmatpush1.bf16.msra.mxu0 0
    %2689 = vmatprep.subr.bf16.mxu0 0
    %2690 = vmatpush1.bf16.msra.mxu0 0
    %2691 = vmatprep.subr.bf16.mxu0 0
    %2692 = vmatpush1.bf16.msra.mxu0 0
    %2693 = vmatprep.subr.bf16.mxu0 0
    %2694 = vmatpush1.bf16.msra.mxu0 0
    %2695 = vmatprep.subr.bf16.mxu0 0
    %2696 = vmatpush1.bf16.msra.mxu0 %v2677
    %2697 = vmatprep.subr.bf16.mxu0 0
    %2698 = vmatpush1.bf16.msra.mxu0 %v2676
    %2699 = vmatprep.subr.bf16.mxu0 0
    %2700 = vmatpush2.bf16.msra.mxu0 0
    %2701 = vmatprep.subr.bf16.mxu0 0
    %2702 = vmatpush2.bf16.msra.mxu0 0
    %2703 = vmatprep.subr.bf16.mxu0 0
    %2704 = vmatpush2.bf16.msra.mxu0 0
    %2705 = vmatprep.subr.bf16.mxu0 0
    %2706 = vmatpush2.bf16.msra.mxu0 0
    %2707 = vmatprep.subr.bf16.mxu0 0
    %2708 = vmatpush2.bf16.msra.mxu0 0
    %2709 = vmatprep.subr.bf16.mxu0 0
    %2710 = vmatpush2.bf16.msra.mxu0 0
    %2711 = vmatprep.subr.bf16.mxu0 0
    %2712 = vmatpush2.bf16.msra.mxu0 0
    %2713 = vmatprep.subr.bf16.mxu0 0
    %2714 = vmatpush2.bf16.msra.mxu0 0
    %2715 = vmatprep.mubr.bf16.mxu0 0
    %2716 = vmatmul.mubr.bf16.gmra.mxu0 %v2681
    %v2717 = vpop.f32.mrf.mxu0
    %v2718 = vadd.f32 0.0, %v2717
    %v2719 = vpop.f32.mrf.mxu0
    %v2720 = vpop.f32.mrf.mxu0
    %v2721 = vadd.f32 0.0, %v2720
    %v2722 = vpop.f32.mrf.mxu0
    %2723 = vdwg.mxu0
    %s2724 = scalar_lea.vmem %s45, 48
    %v2725 = vld [vmem:[%s2724] sm:$0xf]
    %v2726 = vld [vmem:[%s2724 + $0x4] sm:$0xf]
    %v2727 = vld [vmem:[%s2724 + $0x8] sm:$0xf]
    %v2728 = vld [vmem:[%s2724 + $0xc] sm:$0xf]
    %v2733 = vunpack.c.l.b16 %v2725
    %v2734 = vunpack.c.l.b16 %v2726
    %v2735 = vunpack.c.l.b16 %v2727
    %v2736 = vunpack.c.l.b16 %v2728
    %v2737 = vpack.c.b16 %v2734, %v2733
    %v2738 = vpack.c.b16 %v2736, %v2735
    %2741 = vmatprep.subr.bf16.mxu0 0
    %2742 = vmatpush1.bf16.msra.mxu0 0
    %2743 = vmatprep.subr.bf16.mxu0 0
    %2744 = vmatpush1.bf16.msra.mxu0 0
    %2745 = vmatprep.subr.bf16.mxu0 0
    %2746 = vmatpush1.bf16.msra.mxu0 0
    %2747 = vmatprep.subr.bf16.mxu0 0
    %2748 = vmatpush1.bf16.msra.mxu0 0
    %2749 = vmatprep.subr.bf16.mxu0 0
    %2750 = vmatpush1.bf16.msra.mxu0 0
    %2751 = vmatprep.subr.bf16.mxu0 0
    %2752 = vmatpush1.bf16.msra.mxu0 0
    %2753 = vmatprep.subr.bf16.mxu0 0
    %2754 = vmatpush1.bf16.msra.mxu0 %v2738
    %2755 = vmatprep.subr.bf16.mxu0 0
    %2756 = vmatpush1.bf16.msra.mxu0 %v2737
    %2757 = vmatprep.subr.bf16.mxu0 0
    %2758 = vmatpush2.bf16.msra.mxu0 0
    %2759 = vmatprep.subr.bf16.mxu0 0
    %2760 = vmatpush2.bf16.msra.mxu0 0
    %2761 = vmatprep.subr.bf16.mxu0 0
    %2762 = vmatpush2.bf16.msra.mxu0 0
    %2763 = vmatprep.subr.bf16.mxu0 0
    %2764 = vmatpush2.bf16.msra.mxu0 0
    %2765 = vmatprep.subr.bf16.mxu0 0
    %2766 = vmatpush2.bf16.msra.mxu0 0
    %2767 = vmatprep.subr.bf16.mxu0 0
    %2768 = vmatpush2.bf16.msra.mxu0 0
    %2769 = vmatprep.subr.bf16.mxu0 0
    %2770 = vmatpush2.bf16.msra.mxu0 0
    %2771 = vmatprep.subr.bf16.mxu0 0
    %2772 = vmatpush2.bf16.msra.mxu0 0
    %2773 = vmatprep.mubr.bf16.mxu0 0
    %2774 = vmatmul.mubr.bf16.gmra.mxu0 %v2066
    %v2775 = vpop.f32.mrf.mxu0
    %v2776 = vadd.f32 0.0, %v2775
    %v2777 = vpop.f32.mrf.mxu0
    %v2778 = vpop.f32.mrf.mxu0
    %v2779 = vadd.f32 0.0, %v2778
    %v2780 = vpop.f32.mrf.mxu0
    %2781 = vdwg.mxu0
    %v2782 = vpack.c.bf16 %v2721, %v2718
    %v2783 = vpack.c.bf16 %v2779, %v2776
    %2784 = vmatprep.subr.bf16.mxu0 0
    %2785 = vmatpush1.bf16.msra.mxu0 0
    %2786 = vmatprep.subr.bf16.mxu0 0
    %2787 = vmatpush1.bf16.msra.mxu0 0
    %2788 = vmatprep.subr.bf16.mxu0 0
    %2789 = vmatpush1.bf16.msra.mxu0 0
    %2790 = vmatprep.subr.bf16.mxu0 0
    %2791 = vmatpush1.bf16.msra.mxu0 0
    %2792 = vmatprep.subr.bf16.mxu0 0
    %2793 = vmatpush1.bf16.msra.mxu0 0
    %2794 = vmatprep.subr.bf16.mxu0 0
    %2795 = vmatpush1.bf16.msra.mxu0 0
    %2796 = vmatprep.subr.bf16.mxu0 0
    %2797 = vmatpush1.bf16.msra.mxu0 0
    %2798 = vmatprep.subr.bf16.mxu0 0
    %2799 = vmatpush1.bf16.msra.mxu0 %v2783
    %2800 = vmatprep.subr.bf16.mxu0 0
    %2801 = vmatpush2.bf16.msra.mxu0 0
    %2802 = vmatprep.subr.bf16.mxu0 0
    %2803 = vmatpush2.bf16.msra.mxu0 0
    %2804 = vmatprep.subr.bf16.mxu0 0
    %2805 = vmatpush2.bf16.msra.mxu0 0
    %2806 = vmatprep.subr.bf16.mxu0 0
    %2807 = vmatpush2.bf16.msra.mxu0 0
    %2808 = vmatprep.subr.bf16.mxu0 0
    %2809 = vmatpush2.bf16.msra.mxu0 0
    %2810 = vmatprep.subr.bf16.mxu0 0
    %2811 = vmatpush2.bf16.msra.mxu0 0
    %2812 = vmatprep.subr.bf16.mxu0 0
    %2813 = vmatpush2.bf16.msra.mxu0 0
    %2814 = vmatprep.subr.bf16.mxu0 0
    %2815 = vmatpush2.bf16.msra.mxu0 0
    %2816 = vmatprep.mubr.bf16.mxu0 0
    %2817 = vmatmul.mubr.bf16.gmra.mxu0 %v960
    %v2818 = vpop.f32.mrf.mxu0
    %v2819 = vadd.f32 0.0, %v2818
    %v2820 = vpop.f32.mrf.mxu0
    %v2821 = vpop.f32.mrf.mxu0
    %v2822 = vadd.f32 0.0, %v2821
    %v2823 = vpop.f32.mrf.mxu0
    %2824 = vmatprep.mubr.bf16.mxu0 0
    %2825 = vmatmul.mubr.bf16.gmra.mxu0 %v963
    %v2826 = vpop.f32.mrf.mxu0
    %v2827 = vadd.f32 0.0, %v2826
    %v2828 = vpop.f32.mrf.mxu0
    %v2829 = vpop.f32.mrf.mxu0
    %v2830 = vadd.f32 0.0, %v2829
    %v2831 = vpop.f32.mrf.mxu0
    %2832 = vmatprep.mubr.bf16.mxu0 0
    %2833 = vmatmul.mubr.bf16.gmra.mxu0 %v966
    %v2834 = vpop.f32.mrf.mxu0
    %v2835 = vadd.f32 0.0, %v2834
    %v2836 = vpop.f32.mrf.mxu0
    %v2837 = vpop.f32.mrf.mxu0
    %v2838 = vadd.f32 0.0, %v2837
    %v2839 = vpop.f32.mrf.mxu0
    %2840 = vdwg.mxu0
    %2841 = vmatprep.subr.bf16.mxu0 0
    %2842 = vmatpush1.bf16.msra.mxu0 0
    %2843 = vmatprep.subr.bf16.mxu0 0
    %2844 = vmatpush1.bf16.msra.mxu0 0
    %2845 = vmatprep.subr.bf16.mxu0 0
    %2846 = vmatpush1.bf16.msra.mxu0 0
    %2847 = vmatprep.subr.bf16.mxu0 0
    %2848 = vmatpush1.bf16.msra.mxu0 0
    %2849 = vmatprep.subr.bf16.mxu0 0
    %2850 = vmatpush1.bf16.msra.mxu0 0
    %2851 = vmatprep.subr.bf16.mxu0 0
    %2852 = vmatpush1.bf16.msra.mxu0 0
    %2853 = vmatprep.subr.bf16.mxu0 0
    %2854 = vmatpush1.bf16.msra.mxu0 0
    %2855 = vmatprep.subr.bf16.mxu0 0
    %2856 = vmatpush1.bf16.msra.mxu0 %v2782
    %2857 = vmatprep.subr.bf16.mxu0 0
    %2858 = vmatpush2.bf16.msra.mxu0 0
    %2859 = vmatprep.subr.bf16.mxu0 0
    %2860 = vmatpush2.bf16.msra.mxu0 0
    %2861 = vmatprep.subr.bf16.mxu0 0
    %2862 = vmatpush2.bf16.msra.mxu0 0
    %2863 = vmatprep.subr.bf16.mxu0 0
    %2864 = vmatpush2.bf16.msra.mxu0 0
    %2865 = vmatprep.subr.bf16.mxu0 0
    %2866 = vmatpush2.bf16.msra.mxu0 0
    %2867 = vmatprep.subr.bf16.mxu0 0
    %2868 = vmatpush2.bf16.msra.mxu0 0
    %2869 = vmatprep.subr.bf16.mxu0 0
    %2870 = vmatpush2.bf16.msra.mxu0 0
    %2871 = vmatprep.subr.bf16.mxu0 0
    %2872 = vmatpush2.bf16.msra.mxu0 0
    %2873 = vmatprep.mubr.bf16.mxu0 0
    %2874 = vmatmul.mubr.bf16.gmra.mxu0 %v894
    %v2875 = vpop.f32.mrf.mxu0
    %v2876 = vadd.f32 %v2819, %v2875
    %v2877 = vpop.f32.mrf.mxu0
    %v2878 = vpop.f32.mrf.mxu0
    %v2879 = vadd.f32 %v2822, %v2878
    %v2880 = vpop.f32.mrf.mxu0
    %2881 = vmatprep.mubr.bf16.mxu0 0
    %2882 = vmatmul.mubr.bf16.gmra.mxu0 %v897
    %v2883 = vpop.f32.mrf.mxu0
    %v2884 = vadd.f32 %v2827, %v2883
    %v2885 = vpop.f32.mrf.mxu0
    %v2886 = vpop.f32.mrf.mxu0
    %v2887 = vadd.f32 %v2830, %v2886
    %v2888 = vpop.f32.mrf.mxu0
    %2889 = vmatprep.mubr.bf16.mxu0 0
    %2890 = vmatmul.mubr.bf16.gmra.mxu0 %v900
    %v2891 = vpop.f32.mrf.mxu0
    %v2892 = vadd.f32 %v2835, %v2891
    %v2893 = vpop.f32.mrf.mxu0
    %v2894 = vpop.f32.mrf.mxu0
    %v2895 = vadd.f32 %v2838, %v2894
    %v2896 = vpop.f32.mrf.mxu0
    %2897 = vdwg.mxu0
    %s2898 = scalar_lea.vmem %s43, 3
    %v2899 = vld [vmem:[%s2898] sm:$0x1]
    %v2900 = vunpack.c.l.bf16 %v2899
    %v2901 = vlaneseq
    %v2902 = vshrl.u32 %v2901, 7
    %v2903 = vsub.s32 0, %v2902
    %v2904 = vrot.slane %v2900, %v2903
    %v2905 = vmul.f32 %v1030, %v2904
    %v2906 = vmul.f32 %v1035, %v2904
    %v2907 = vmul.f32 %v1040, %v2904
    %v2908 = vmul.f32 %v1045, %v2904
    %v2909 = vmul.f32 %v1050, %v2904
    %v2910 = vmul.f32 %v1055, %v2904
    %v2911 = vadd.f32 %v2876, %v2905
    %v2912 = vadd.f32 %v2879, %v2906
    %v2913 = vadd.f32 %v2884, %v2907
    %v2914 = vadd.f32 %v2887, %v2908
    %v2915 = vadd.f32 %v2892, %v2909
    %v2916 = vadd.f32 %v2895, %v2910
    %s2917 = scalar_lea.vmem [#allocation19], 3
    %v2918 = vld [vmem:[%s2917] sm:$0x1]
    %v2920 = vlaneseq
    %v2921 = vshrl.u32 %v2920, 7
    %v2922 = vsub.s32 0, %v2921
    %v2923 = vrot.slane %v2918, %v2922
    %v2925 = vadd.f32 %v2911, %v2923
    %v2926 = vadd.f32 %v2912, %v2923
    %v2927 = vadd.f32 %v2913, %v2923
    %v2928 = vadd.f32 %v2914, %v2923
    %v2929 = vadd.f32 %v2915, %v2923
    %v2930 = vadd.f32 %v2916, %v2923
    %v2931 = vmax.f32 %v2925, 0.0
    %v2932 = vmax.f32 %v2926, 0.0
    %v2933 = vmax.f32 %v2927, 0.0
    %v2934 = vmax.f32 %v2928, 0.0
    %v2935 = vmax.f32 %v2929, 0.0
    %v2936 = vmax.f32 %v2930, 0.0
    %s2937 = scalar_lea.vmem %s47, 48
    %v2938 = vld [vmem:[%s2937] sm:$0xf]
    %v2939 = vld [vmem:[%s2937 + $0x4] sm:$0xf]
    %v2940 = vld [vmem:[%s2937 + $0x8] sm:$0xf]
    %v2941 = vld [vmem:[%s2937 + $0xc] sm:$0xf]
    %v2942 = vpack.c.bf16 %v2932, %v2931
    %v2943 = vpack.c.bf16 %v2934, %v2933
    %v2944 = vpack.c.bf16 %v2936, %v2935
    %s2945 = scalar_lea.vmem [#allocation20], 3
    %v2946 = vld [vmem:[%s2945] sm:$0x1]
    %v2948 = vlaneseq
    %v2949 = vshrl.u32 %v2948, 7
    %v2950 = vsub.s32 0, %v2949
    %v2951 = vrot.slane %v2946, %v2950
    %v2957 = vunpack.c.l.b16 %v2938
    %v2958 = vunpack.c.l.b16 %v2939
    %v2959 = vunpack.c.l.b16 %v2940
    %v2960 = vunpack.c.l.b16 %v2941
    %v2961 = vpack.c.b16 %v2958, %v2957
    %v2962 = vpack.c.b16 %v2960, %v2959
    %v2966 = vsel %vm571, %v2942, 0
    %v2969 = vsel %vm571, %v2943, 0
    %v2972 = vsel %vm571, %v2944, 0
    %2974 = vmatprep.subr.bf16.mxu0 0
    %2975 = vmatpush1.bf16.msra.mxu0 0
    %2976 = vmatprep.subr.bf16.mxu0 0
    %2977 = vmatpush1.bf16.msra.mxu0 0
    %2978 = vmatprep.subr.bf16.mxu0 0
    %2979 = vmatpush1.bf16.msra.mxu0 0
    %2980 = vmatprep.subr.bf16.mxu0 0
    %2981 = vmatpush1.bf16.msra.mxu0 0
    %2982 = vmatprep.subr.bf16.mxu0 0
    %2983 = vmatpush1.bf16.msra.mxu0 0
    %2984 = vmatprep.subr.bf16.mxu0 0
    %2985 = vmatpush1.bf16.msra.mxu0 0
    %2986 = vmatprep.subr.bf16.mxu0 0
    %2987 = vmatpush1.bf16.msra.mxu0 %v2962
    %2988 = vmatprep.subr.bf16.mxu0 0
    %2989 = vmatpush1.bf16.msra.mxu0 %v2961
    %2990 = vmatprep.subr.bf16.mxu0 0
    %2991 = vmatpush2.bf16.msra.mxu0 0
    %2992 = vmatprep.subr.bf16.mxu0 0
    %2993 = vmatpush2.bf16.msra.mxu0 0
    %2994 = vmatprep.subr.bf16.mxu0 0
    %2995 = vmatpush2.bf16.msra.mxu0 0
    %2996 = vmatprep.subr.bf16.mxu0 0
    %2997 = vmatpush2.bf16.msra.mxu0 0
    %2998 = vmatprep.subr.bf16.mxu0 0
    %2999 = vmatpush2.bf16.msra.mxu0 0
    %3000 = vmatprep.subr.bf16.mxu0 0
    %3001 = vmatpush2.bf16.msra.mxu0 0
    %3002 = vmatprep.subr.bf16.mxu0 0
    %3003 = vmatpush2.bf16.msra.mxu0 0
    %3004 = vmatprep.subr.bf16.mxu0 0
    %3005 = vmatpush2.bf16.msra.mxu0 0
    %3006 = vmatprep.mubr.bf16.mxu0 0
    %3007 = vmatmul.mubr.bf16.gmra.mxu0 %v2966
    %v3008 = vpop.f32.mrf.mxu0
    %v3009 = vadd.f32 %v2951, %v3008
    %v3010 = vpop.f32.mrf.mxu0
    %v3011 = vpop.f32.mrf.mxu0
    %v3012 = vadd.f32 %v2951, %v3011
    %v3013 = vpop.f32.mrf.mxu0
    %3014 = vmatprep.mubr.bf16.mxu0 0
    %3015 = vmatmul.mubr.bf16.gmra.mxu0 %v2969
    %v3016 = vpop.f32.mrf.mxu0
    %v3017 = vadd.f32 %v2951, %v3016
    %v3018 = vpop.f32.mrf.mxu0
    %v3019 = vpop.f32.mrf.mxu0
    %v3020 = vadd.f32 %v2951, %v3019
    %v3021 = vpop.f32.mrf.mxu0
    %3022 = vmatprep.mubr.bf16.mxu0 0
    %3023 = vmatmul.mubr.bf16.gmra.mxu0 %v2972
    %v3024 = vpop.f32.mrf.mxu0
    %v3025 = vadd.f32 %v2951, %v3024
    %v3026 = vpop.f32.mrf.mxu0
    %v3027 = vpop.f32.mrf.mxu0
    %v3028 = vadd.f32 %v2951, %v3027
    %v3029 = vpop.f32.mrf.mxu0
    %3030 = vdwg.mxu0
    %v3031 = vpack.c.bf16 %v3012, %v3009
    %v3032 = vpack.c.bf16 %v3020, %v3017
    %v3033 = vpack.c.bf16 %v3028, %v3025
    %3034 = vmatprep.subr.bf16.mxu0 0
    %3035 = vmatpush1.bf16.msra.mxu0 0
    %3036 = vmatprep.subr.bf16.mxu0 0
    %3037 = vmatpush1.bf16.msra.mxu0 0
    %3038 = vmatprep.subr.bf16.mxu0 0
    %3039 = vmatpush1.bf16.msra.mxu0 0
    %3040 = vmatprep.subr.bf16.mxu0 0
    %3041 = vmatpush1.bf16.msra.mxu0 0
    %3042 = vmatprep.subr.bf16.mxu0 0
    %3043 = vmatpush1.bf16.msra.mxu0 0
    %3044 = vmatprep.subr.bf16.mxu0 0
    %3045 = vmatpush1.bf16.msra.mxu0 %v3033
    %3046 = vmatprep.subr.bf16.mxu0 0
    %3047 = vmatpush1.bf16.msra.mxu0 %v3032
    %3048 = vmatprep.subr.bf16.mxu0 0
    %3049 = vmatpush1.bf16.msra.mxu0 %v3031
    %3050 = vmatprep.subr.bf16.mxu0 0
    %3051 = vmatpush2.bf16.msra.mxu0 0
    %3052 = vmatprep.subr.bf16.mxu0 0
    %3053 = vmatpush2.bf16.msra.mxu0 0
    %3054 = vmatprep.subr.bf16.mxu0 0
    %3055 = vmatpush2.bf16.msra.mxu0 0
    %3056 = vmatprep.subr.bf16.mxu0 0
    %3057 = vmatpush2.bf16.msra.mxu0 0
    %3058 = vmatprep.subr.bf16.mxu0 0
    %3059 = vmatpush2.bf16.msra.mxu0 0
    %3060 = vmatprep.subr.bf16.mxu0 0
    %3061 = vmatpush2.bf16.msra.mxu0 0
    %3062 = vmatprep.subr.bf16.mxu0 0
    %3063 = vmatpush2.bf16.msra.mxu0 0
    %3064 = vmatprep.subr.bf16.mxu0 0
    %3065 = vmatpush2.bf16.msra.mxu0 0
    %3066 = vmatprep.mubr.bf16.mxu0 0
    %3067 = vmatmul.mubr.bf16.gmra.mxu0 %v1802
    %v3068 = vpop.f32.mrf.mxu0
    %v3069 = vadd.f32 0.0, %v3068
    %v3070 = vpop.f32.mrf.mxu0
    %v3071 = vpop.f32.mrf.mxu0
    %v3072 = vadd.f32 0.0, %v3071
    %v3073 = vpop.f32.mrf.mxu0
    %3074 = vdwg.mxu0
    %s3075 = scalar_lea.vmem [#allocation22], 48
    %v3076 = vld [vmem:[%s3075] sm:$0xf]
    %v3077 = vld [vmem:[%s3075 + $0x4] sm:$0xf]
    %v3078 = vld [vmem:[%s3075 + $0x8] sm:$0xf]
    %v3079 = vld [vmem:[%s3075 + $0xc] sm:$0xf]
    %v3080 = vpack.c.bf16 %v3072, %v3069
    %s3081 = scalar_lea.vmem [#allocation23], 48
    %v3082 = vld [vmem:[%s3081] sm:$0xf]
    %v3083 = vld [vmem:[%s3081 + $0x4] sm:$0xf]
    %v3084 = vld [vmem:[%s3081 + $0x8] sm:$0xf]
    %v3085 = vld [vmem:[%s3081 + $0xc] sm:$0xf]
    %v3090 = vunpack.c.l.b16 %v3082
    %v3091 = vunpack.c.l.b16 %v3083
    %v3092 = vunpack.c.l.b16 %v3084
    %v3093 = vunpack.c.l.b16 %v3085
    %v3094 = vpack.c.b16 %v3091, %v3090
    %v3095 = vpack.c.b16 %v3093, %v3092
    %3098 = vmatprep.subr.bf16.mxu0 0
    %3099 = vmatpush1.bf16.msra.mxu0 0
    %3100 = vmatprep.subr.bf16.mxu0 0
    %3101 = vmatpush1.bf16.msra.mxu0 0
    %3102 = vmatprep.subr.bf16.mxu0 0
    %3103 = vmatpush1.bf16.msra.mxu0 0
    %3104 = vmatprep.subr.bf16.mxu0 0
    %3105 = vmatpush1.bf16.msra.mxu0 0
    %3106 = vmatprep.subr.bf16.mxu0 0
    %3107 = vmatpush1.bf16.msra.mxu0 0
    %3108 = vmatprep.subr.bf16.mxu0 0
    %3109 = vmatpush1.bf16.msra.mxu0 0
    %3110 = vmatprep.subr.bf16.mxu0 0
    %3111 = vmatpush1.bf16.msra.mxu0 %v3095
    %3112 = vmatprep.subr.bf16.mxu0 0
    %3113 = vmatpush1.bf16.msra.mxu0 %v3094
    %3114 = vmatprep.subr.bf16.mxu0 0
    %3115 = vmatpush2.bf16.msra.mxu0 0
    %3116 = vmatprep.subr.bf16.mxu0 0
    %3117 = vmatpush2.bf16.msra.mxu0 0
    %3118 = vmatprep.subr.bf16.mxu0 0
    %3119 = vmatpush2.bf16.msra.mxu0 0
    %3120 = vmatprep.subr.bf16.mxu0 0
    %3121 = vmatpush2.bf16.msra.mxu0 0
    %3122 = vmatprep.subr.bf16.mxu0 0
    %3123 = vmatpush2.bf16.msra.mxu0 0
    %3124 = vmatprep.subr.bf16.mxu0 0
    %3125 = vmatpush2.bf16.msra.mxu0 0
    %3126 = vmatprep.subr.bf16.mxu0 0
    %3127 = vmatpush2.bf16.msra.mxu0 0
    %3128 = vmatprep.subr.bf16.mxu0 0
    %3129 = vmatpush2.bf16.msra.mxu0 0
    %3130 = vmatprep.mubr.bf16.mxu0 0
    %3131 = vmatmul.mubr.bf16.gmra.mxu0 %v2681
    %v3132 = vpop.f32.mrf.mxu0
    %v3133 = vadd.f32 0.0, %v3132
    %v3134 = vpop.f32.mrf.mxu0
    %v3135 = vpop.f32.mrf.mxu0
    %v3136 = vadd.f32 0.0, %v3135
    %v3137 = vpop.f32.mrf.mxu0
    %3138 = vdwg.mxu0
    %v3143 = vunpack.c.l.b16 %v3076
    %v3144 = vunpack.c.l.b16 %v3077
    %v3145 = vunpack.c.l.b16 %v3078
    %v3146 = vunpack.c.l.b16 %v3079
    %v3147 = vpack.c.b16 %v3144, %v3143
    %v3148 = vpack.c.b16 %v3146, %v3145
    %v3152 = vsel %vm571, %v3080, 0
    %3154 = vmatprep.subr.bf16.mxu0 0
    %3155 = vmatpush1.bf16.msra.mxu0 0
    %3156 = vmatprep.subr.bf16.mxu0 0
    %3157 = vmatpush1.bf16.msra.mxu0 0
    %3158 = vmatprep.subr.bf16.mxu0 0
    %3159 = vmatpush1.bf16.msra.mxu0 0
    %3160 = vmatprep.subr.bf16.mxu0 0
    %3161 = vmatpush1.bf16.msra.mxu0 0
    %3162 = vmatprep.subr.bf16.mxu0 0
    %3163 = vmatpush1.bf16.msra.mxu0 0
    %3164 = vmatprep.subr.bf16.mxu0 0
    %3165 = vmatpush1.bf16.msra.mxu0 0
    %3166 = vmatprep.subr.bf16.mxu0 0
    %3167 = vmatpush1.bf16.msra.mxu0 %v3148
    %3168 = vmatprep.subr.bf16.mxu0 0
    %3169 = vmatpush1.bf16.msra.mxu0 %v3147
    %3170 = vmatprep.subr.bf16.mxu0 0
    %3171 = vmatpush2.bf16.msra.mxu0 0
    %3172 = vmatprep.subr.bf16.mxu0 0
    %3173 = vmatpush2.bf16.msra.mxu0 0
    %3174 = vmatprep.subr.bf16.mxu0 0
    %3175 = vmatpush2.bf16.msra.mxu0 0
    %3176 = vmatprep.subr.bf16.mxu0 0
    %3177 = vmatpush2.bf16.msra.mxu0 0
    %3178 = vmatprep.subr.bf16.mxu0 0
    %3179 = vmatpush2.bf16.msra.mxu0 0
    %3180 = vmatprep.subr.bf16.mxu0 0
    %3181 = vmatpush2.bf16.msra.mxu0 0
    %3182 = vmatprep.subr.bf16.mxu0 0
    %3183 = vmatpush2.bf16.msra.mxu0 0
    %3184 = vmatprep.subr.bf16.mxu0 0
    %3185 = vmatpush2.bf16.msra.mxu0 0
    %3186 = vmatprep.mubr.bf16.mxu0 0
    %3187 = vmatmul.mubr.bf16.gmra.mxu0 %v3152
    %v3188 = vpop.f32.mrf.mxu0
    %v3189 = vadd.f32 %v3133, %v3188
    %v3190 = vpop.f32.mrf.mxu0
    %v3191 = vpop.f32.mrf.mxu0
    %v3192 = vadd.f32 %v3136, %v3191
    %v3193 = vpop.f32.mrf.mxu0
    %3194 = vdwg.mxu0
    %s3195 = scalar_lea.vmem [#allocation25], 3
    %v3196 = vld [vmem:[%s3195] sm:$0x1]
    %v3198 = vlaneseq
    %v3199 = vshrl.u32 %v3198, 7
    %v3200 = vsub.s32 0, %v3199
    %v3201 = vrot.slane %v3196, %v3200
    %v3203 = vadd.f32 %v3189, %v3201
    %v3204 = vadd.f32 %v3192, %v3201
    %v3205 = vmax.f32 %v3203, 0.0
    %v3206 = vmax.f32 %v3204, 0.0
    %s3207 = scalar_lea.vmem [#allocation26], 48
    %v3208 = vld [vmem:[%s3207] sm:$0xf]
    %v3209 = vld [vmem:[%s3207 + $0x4] sm:$0xf]
    %v3210 = vld [vmem:[%s3207 + $0x8] sm:$0xf]
    %v3211 = vld [vmem:[%s3207 + $0xc] sm:$0xf]
    %v3212 = vpack.c.bf16 %v3206, %v3205
    %s3213 = scalar_lea.vmem [#allocation28], 3
    %v3214 = vld [vmem:[%s3213] sm:$0x1]
    %v3216 = vlaneseq
    %v3217 = vshrl.u32 %v3216, 7
    %v3218 = vsub.s32 0, %v3217
    %v3219 = vrot.slane %v3214, %v3218
    %v3225 = vunpack.c.l.b16 %v3208
    %v3226 = vunpack.c.l.b16 %v3209
    %v3227 = vunpack.c.l.b16 %v3210
    %v3228 = vunpack.c.l.b16 %v3211
    %v3229 = vpack.c.b16 %v3226, %v3225
    %v3230 = vpack.c.b16 %v3228, %v3227
    %v3234 = vsel %vm571, %v3212, 0
    %3236 = vmatprep.subr.bf16.mxu0 0
    %3237 = vmatpush1.bf16.msra.mxu0 0
    %3238 = vmatprep.subr.bf16.mxu0 0
    %3239 = vmatpush1.bf16.msra.mxu0 0
    %3240 = vmatprep.subr.bf16.mxu0 0
    %3241 = vmatpush1.bf16.msra.mxu0 0
    %3242 = vmatprep.subr.bf16.mxu0 0
    %3243 = vmatpush1.bf16.msra.mxu0 0
    %3244 = vmatprep.subr.bf16.mxu0 0
    %3245 = vmatpush1.bf16.msra.mxu0 0
    %3246 = vmatprep.subr.bf16.mxu0 0
    %3247 = vmatpush1.bf16.msra.mxu0 0
    %3248 = vmatprep.subr.bf16.mxu0 0
    %3249 = vmatpush1.bf16.msra.mxu0 %v3230
    %3250 = vmatprep.subr.bf16.mxu0 0
    %3251 = vmatpush1.bf16.msra.mxu0 %v3229
    %3252 = vmatprep.subr.bf16.mxu0 0
    %3253 = vmatpush2.bf16.msra.mxu0 0
    %3254 = vmatprep.subr.bf16.mxu0 0
    %3255 = vmatpush2.bf16.msra.mxu0 0
    %3256 = vmatprep.subr.bf16.mxu0 0
    %3257 = vmatpush2.bf16.msra.mxu0 0
    %3258 = vmatprep.subr.bf16.mxu0 0
    %3259 = vmatpush2.bf16.msra.mxu0 0
    %3260 = vmatprep.subr.bf16.mxu0 0
    %3261 = vmatpush2.bf16.msra.mxu0 0
    %3262 = vmatprep.subr.bf16.mxu0 0
    %3263 = vmatpush2.bf16.msra.mxu0 0
    %3264 = vmatprep.subr.bf16.mxu0 0
    %3265 = vmatpush2.bf16.msra.mxu0 0
    %3266 = vmatprep.subr.bf16.mxu0 0
    %3267 = vmatpush2.bf16.msra.mxu0 0
    %3268 = vmatprep.mubr.bf16.mxu0 0
    %3269 = vmatmul.mubr.bf16.gmra.mxu0 %v3234
    %v3270 = vpop.f32.mrf.mxu0
    %v3271 = vadd.f32 %v3219, %v3270
    %v3272 = vpop.f32.mrf.mxu0
    %v3273 = vpop.f32.mrf.mxu0
    %v3274 = vadd.f32 %v3219, %v3273
    %v3275 = vpop.f32.mrf.mxu0
    %3276 = vdwg.mxu0
    %3277 = vst.msk [vmem:[#allocation29] sm:$0xff] %vm571, %v3271
    %3278 = vst.msk [vmem:[#allocation29 + $0x8] sm:$0xff] %vm571, %v3274
    %3279 = vst.msk [vmem:[#allocation30] sm:$0xff] %vm571, %v2656
    %3280 = vst.msk [vmem:[#allocation30 + $0x8] sm:$0xff] %vm571, %v2659
    // Predicated region
    $region190: #{_gnn_forward.1} parent=1 // pred_check
      _
    $region191: #{_gnn_forward.1} parent=1 // pred_check_branch
      %3282 = sbr.rel (0) target = $region193
    $region192: #{_gnn_forward.1} parent=1 // pred_region
      %s3284 = ssub.s32 256, 256
      %3285 = vsyncadd [#allocation4], %s3284
      %s3286 = sshll.u32 [#allocation29], 4
      %s3287 = int_to_ptr.vmem [resolvable:$true] %s3286
      %3292 = dma.vmem_to_hbm [thread:$0]  %s3287, 256, %s61, [#allocation4], 128, 128, 8
    $region193: #{_gnn_forward.1} parent=1 // pred_fallthru
      _
    // Predicated region
    $region194: #{_gnn_forward.1} parent=1 // pred_check
      _
    $region195: #{_gnn_forward.1} parent=1 // pred_check_branch
      %3294 = sbr.rel (0) target = $region197
    $region196: #{_gnn_forward.1} parent=1 // pred_region
      %s3296 = ssub.s32 256, 256
      %3297 = vsyncadd [#allocation31], %s3296
      %s3298 = sshll.u32 [#allocation30], 4
      %s3299 = int_to_ptr.vmem [resolvable:$true] %s3298
      %3304 = dma.vmem_to_hbm [thread:$0]  %s3299, 256, %s63, [#allocation31], 128, 128, 8
    $region197: #{_gnn_forward.1} parent=1 // pred_fallthru
      _
    // Predicated region
    $region198: #{_gnn_forward.1} parent=1 // pred_check
      _
    $region199: #{_gnn_forward.1} parent=1 // pred_check_branch
      %3306 = sbr.rel (0) target = $region201
    $region200: #{_gnn_forward.1} parent=1 // pred_region
      %3307 = dma.done [#allocation4], 256
    $region201: #{_gnn_forward.1} parent=1 // pred_fallthru
      _
    // Predicated region
    $region202: #{_gnn_forward.1} parent=1 // pred_check
      _
    $region203: #{_gnn_forward.1} parent=1 // pred_check_branch
      %3309 = sbr.rel (0) target = $region205
    $region204: #{_gnn_forward.1} parent=1 // pred_region
      %3310 = dma.done [#allocation31], 256
    $region205: #{_gnn_forward.1} parent=1 // pred_fallthru
      _
    %3311 = vsyncpa [#allocation3], 1
    %3312 = vsyncpa [#allocation6], 1
    %3313 = vsyncpa [#allocation9], 1
    %3314 = vsyncpa [#allocation12], 1
    %3315 = vsyncpa [#allocation15], 1
    %3316 = vsyncpa [#allocation18], 1
    %3317 = vsyncpa [#allocation21], 1
    %3318 = vsyncpa [#allocation24], 1
    %3319 = vsyncpa [#allocation27], 1
    %3320 = vsyncpa [#allocation4], 1
    %3321 = vsyncpa [#allocation31], 1

</llo_original>
